<compile_context>
chip_gen: v7x
topology: tpu7x:2x2x1
jax: 0.10.0
libtpu: 0.0.40
codegen_flags: <defaults>
</compile_context>

<pallas_src>
import numpy as np
import jax
import jax.numpy as jnp
from jax.experimental import pallas as pl
from jax.experimental.pallas import tpu as pltpu

# ---- problem geometry -------------------------------------------------------
C, D, H, W = 1, 4, 8, 8        # small volume consistent with [B, 1, D, H, W] conv input
N_VOX = C * D * H * W          # flattened voxels per volume (= 256)
FEAT = 128                     # resnet feature dim
DM = 64                        # cross-attn d_model
NODE = 256                     # GAT node feature dim (concat(t_m, t_s))
GOUT = 64                      # GAT output per node
NUM_CLASS = 10
X_LANES = 2 * N_VOX + 128      # [vol0 | vol1 | padded clinical text] = 640

# ---- bias-slab lane offsets (all 128-aligned) ----
OFF_BF0 = 0        # [128]  feature proj 0 bias
OFF_BF1 = 128      # [128]  feature proj 1 bias
OFF_BC0 = 256      # [256]  cross slab bias for t0 path: [0 | bs_t]
OFF_BC1 = 512      # [256]  cross slab bias for t1 path: [0 | bs_n]
OFF_BD1 = 768      # [128]  DeepSurv layer-1 bias
OFF_BD2 = 896      # [256]  DeepSurv layer-2 bias
OFF_BG = 1152      # [64]   GAT bias (padded to 128)
OFF_BFC1 = 1280    # [1024] fc1 bias
OFF_BFC2 = 2304    # [256]  fc2 bias
OFF_BFC3 = 2560    # [128]  fc3 bias (10 real + -1e30 padding lanes)
BIAS_LANES = 2688

# ---- output-slab lane offsets ----
O_TUM = 0
O_TM = 128
O_NUM = 256
O_NM = 384
O_GAT = 512        # 192 real lanes (3 x 64), padded to 256
O_PROB = 768       # 10 real lanes, padded to 128
OUT_LANES = 896


def _selu(x):
    scale = 1.0507009873554805
    alpha = 1.6732632423543772
    return scale * jnp.where(x > 0, x, alpha * (jnp.exp(x) - 1.0))


def _leaky_relu(x, slope=0.2):
    return jnp.where(x > 0, x, slope * x)


def build_model_kernel(x_ref, wA_ref, wB_ref, wd1_ref, wfc1_ref, wfc2_ref,
                       bias_ref, out_ref):
    f32 = jnp.float32
    bf16 = jnp.bfloat16
    bt = x_ref.shape[0]                                 # batch-tile rows (static)

    def bias(off, width):
        return bias_ref[:, off:off + width]

    x_all = x_ref[...]                                  # [bt, 640] f32
    x1 = x_all[:, 0:N_VOX].astype(bf16)                 # [bt, 256]
    x2 = x_all[:, N_VOX:2 * N_VOX].astype(bf16)         # [bt, 256]
    text_pad = x_all[:, 2 * N_VOX:X_LANES].astype(bf16)  # [bt, 128]

    # ---- feature extraction (stand-in for 3D ResNet-50) -> [bt, 128] ----
    t0 = jnp.dot(x1, wA_ref[0], preferred_element_type=f32) + bias(OFF_BF0, FEAT)
    t1 = jnp.dot(x2, wA_ref[1], preferred_element_type=f32) + bias(OFF_BF1, FEAT)

    # ---- cross attention (weights folded offline): one matmul per source ----
    #   slab0 = t0 @ [wv_t@wo_n | ws_t] + [0 | bs_t]  = [n_m | t_s]
    #   slab1 = t1 @ [wv_n@wo_t | ws_n] + [0 | bs_n]  = [t_m | n_s]
    slab0 = jnp.dot(t0.astype(bf16), wB_ref[0],
                    preferred_element_type=f32) + bias(OFF_BC0, 2 * FEAT)
    slab1 = jnp.dot(t1.astype(bf16), wB_ref[1],
                    preferred_element_type=f32) + bias(OFF_BC1, 2 * FEAT)
    n_m, t_s = slab0[:, :FEAT], slab0[:, FEAT:]
    t_m, n_s = slab1[:, :FEAT], slab1[:, FEAT:]

    # concat_type == 'train' branch
    t_emb = jnp.concatenate([t_m, t_s], axis=-1)        # [bt, 256]
    n_emb = jnp.concatenate([n_m, n_s], axis=-1)        # [bt, 256]

    # ---- DeepSurv clinical MLP: [bt, 6(pad 128)] -> [bt, 256] ----
    hcl = _selu(jnp.dot(text_pad, wd1_ref[...],
                        preferred_element_type=f32) + bias(OFF_BD1, FEAT))
    text_embed = (jnp.dot(hcl.astype(bf16), wB_ref[2],
                          preferred_element_type=f32) + bias(OFF_BD2, NODE))

    # ---- per-sample 3-node fully connected GAT (self-loops included) ----
    # All three node features stacked -> one MXU push; wA[2] carries the folded
    # a_src / a_dst columns so scores are lane slices of the same result.
    x_nodes = jnp.concatenate([t_emb, n_emb, text_embed], axis=0).astype(bf16)  # [3bt, 256]
    hm = jnp.dot(x_nodes, wA_ref[2], preferred_element_type=f32)                # [3bt, 128]
    h_all = hm[:, 0:GOUT]                 # [3bt, 64]  W x
    s_all = hm[:, GOUT:GOUT + 1]          # [3bt, 1]   a_src . (W x)
    d_all = hm[:, GOUT + 1:GOUT + 2]      # [3bt, 1]   a_dst . (W x)

    ht, hn, hx = h_all[0:bt], h_all[bt:2 * bt], h_all[2 * bt:3 * bt]
    s_t, s_n, s_x = s_all[0:bt], s_all[bt:2 * bt], s_all[2 * bt:3 * bt]
    d_t, d_n, d_x = d_all[0:bt], d_all[bt:2 * bt], d_all[2 * bt:3 * bt]
    bg = bias(OFF_BG, GOUT)

    def gat_node(d_i):
        e_t = _leaky_relu(d_i + s_t)
        e_n = _leaky_relu(d_i + s_n)
        e_x = _leaky_relu(d_i + s_x)
        m = jnp.maximum(jnp.maximum(e_t, e_n), e_x)
        w_t = jnp.exp(e_t - m)
        w_n = jnp.exp(e_n - m)
        w_x = jnp.exp(e_x - m)
        inv = pl.reciprocal(w_t + w_n + w_x, approx=True)
        return (w_t * ht + w_n * hn + w_x * hx) * inv + bg

    out_t = gat_node(d_t)                 # [bt, 64]
    out_n = gat_node(d_n)
    out_x = gat_node(d_x)

    # ---- FC head (dropout = identity at inference) + softmax ----
    # fc1 as three K=64 matmuls (wfc1 stored [3, 64, 1024]) -> no lane concat
    # of the 64-wide GAT outputs and no zero-padded weight rows.
    h1 = _selu(jnp.dot(out_t.astype(bf16), wfc1_ref[0], preferred_element_type=f32)
               + jnp.dot(out_n.astype(bf16), wfc1_ref[1], preferred_element_type=f32)
               + jnp.dot(out_x.astype(bf16), wfc1_ref[2], preferred_element_type=f32)
               + bias(OFF_BFC1, 1024))
    h2 = _selu(jnp.dot(h1.astype(bf16), wfc2_ref[...],
                       preferred_element_type=f32) + bias(OFF_BFC2, 256))
    # wA[3] is wfc3 padded to 128 cols (pad cols zero); pad bias lanes are
    # -1e30 so they vanish under softmax -> full 128-lane softmax, no masking.
    logits_pad = jnp.dot(h2.astype(bf16), wA_ref[3],
                         preferred_element_type=f32) + bias(OFF_BFC3, 128)
    zmax = jnp.max(logits_pad, axis=-1, keepdims=True)
    ez = jnp.exp(logits_pad - zmax)
    probs_pad = ez / jnp.sum(ez, axis=-1, keepdims=True)   # exact normalization

    # ---- lane-dense output slab writes ----
    out_ref[:, O_TUM:O_TUM + FEAT] = t0
    out_ref[:, O_TM:O_TM + FEAT] = t_m
    out_ref[:, O_NUM:O_NUM + FEAT] = t1
    out_ref[:, O_NM:O_NM + FEAT] = n_m
    out_ref[:, O_GAT:O_GAT + GOUT] = out_t
    out_ref[:, O_GAT + GOUT:O_GAT + 2 * GOUT] = out_n
    out_ref[:, O_GAT + 2 * GOUT:O_GAT + 3 * GOUT] = out_x
    out_ref[:, O_GAT + 3 * GOUT:O_GAT + 4 * GOUT] = jnp.zeros((bt, GOUT), f32)
    out_ref[:, O_PROB:O_PROB + 128] = probs_pad


def init_params(key):
    def lin(k, fan_in, fan_out):
        kw, kb = jax.random.split(k)
        w = jax.random.normal(kw, (fan_in, fan_out), jnp.float32) / np.sqrt(fan_in)
        b = jax.random.normal(kb, (1, fan_out), jnp.float32) * 0.01
        return w, b

    ks = jax.random.split(key, 16)
    p = {}
    p["wf0"], p["bf0"] = lin(ks[0], N_VOX, FEAT)
    p["wf1"], p["bf1"] = lin(ks[1], N_VOX, FEAT)
    p["wv_n"], _ = lin(ks[2], FEAT, DM)
    p["wo_t"], _ = lin(ks[3], DM, FEAT)
    p["wv_t"], _ = lin(ks[4], FEAT, DM)
    p["wo_n"], _ = lin(ks[5], DM, FEAT)
    p["ws_t"], p["bs_t"] = lin(ks[6], FEAT, FEAT)
    p["ws_n"], p["bs_n"] = lin(ks[7], FEAT, FEAT)
    p["wd1"], p["bd1"] = lin(ks[8], 6, FEAT)
    p["wd2"], p["bd2"] = lin(ks[9], FEAT, NODE)
    p["wg"], p["bg"] = lin(ks[10], NODE, GOUT)
    p["a_src"] = jax.random.normal(ks[11], (1, GOUT), jnp.float32) / np.sqrt(GOUT)
    p["a_dst"] = jax.random.normal(ks[12], (1, GOUT), jnp.float32) / np.sqrt(GOUT)
    p["wfc1"], p["bfc1"] = lin(ks[13], 3 * GOUT, 1024)
    p["wfc2"], p["bfc2"] = lin(ks[14], 1024, 256)
    p["wfc3"], p["bfc3"] = lin(ks[15], 256, NUM_CLASS)
    return p


def pack_params(p):
    """One-time weight folding + packing into lane-dense slabs (no dead rows)."""
    f32 = jnp.float32
    bf16 = jnp.bfloat16

    # Stack A: [4, 256, 128] bf16 -> wf0, wf1, folded GAT weight, padded wfc3
    wa_gat = jnp.concatenate(
        [p["wg"], p["wg"] @ p["a_src"].T, p["wg"] @ p["a_dst"].T,
         jnp.zeros((NODE, 128 - GOUT - 2), f32)], axis=1)                 # [256, 128]
    wfc3_pad = jnp.concatenate(
        [p["wfc3"], jnp.zeros((256, 128 - NUM_CLASS), f32)], axis=1)      # [256, 128]
    stackA = jnp.stack([p["wf0"], p["wf1"], wa_gat, wfc3_pad]).astype(bf16)

    # Stack B: [3, 128, 256] bf16 -> folded cross weights, wd2
    w_cross_t0 = jnp.concatenate([p["wv_t"] @ p["wo_n"], p["ws_t"]], axis=1)
    w_cross_t1 = jnp.concatenate([p["wv_n"] @ p["wo_t"], p["ws_n"]], axis=1)
    stackB = jnp.stack([w_cross_t0, w_cross_t1, p["wd2"]]).astype(bf16)

    # DeepSurv layer-1 weight on its own: [128, 128] (text is zero-padded to 128)
    wd1 = jnp.zeros((FEAT, FEAT), f32).at[:6, :].set(p["wd1"]).astype(bf16)

    # fc1 weight as three 64-row blocks (one per GAT node) -> no zero rows.
    wfc1 = p["wfc1"].reshape(3, GOUT, 1024).astype(bf16)
    wfc2 = p["wfc2"].astype(bf16)

    # Bias slab: [1, 2688] f32, every segment 128-lane aligned.
    z128 = jnp.zeros((1, 128), f32)
    bc0 = jnp.concatenate([z128, p["bs_t"]], axis=1)
    bc1 = jnp.concatenate([z128, p["bs_n"]], axis=1)
    bg_pad = jnp.concatenate([p["bg"], jnp.zeros((1, 128 - GOUT), f32)], axis=1)
    bfc3_pad = jnp.concatenate(
        [p["bfc3"], jnp.full((1, 128 - NUM_CLASS), -1e30, f32)], axis=1)
    bias_slab = jnp.concatenate(
        [p["bf0"], p["bf1"], bc0, bc1, p["bd1"], p["bd2"],
         bg_pad, p["bfc1"], p["bfc2"], bfc3_pad], axis=1)
    assert bias_slab.shape == (1, BIAS_LANES)
    return stackA, stackB, wd1, wfc1, wfc2, bias_slab


def _round_up(n, m):
    return ((n + m - 1) // m) * m


@jax.jit
def build_model_forward(input1, input2, text, packed):
    stackA, stackB, wd1, wfc1, wfc2, bias_slab = packed
    batch = input1.shape[0]

    # input1/input2: [B, C, D, H, W] (NCDHW) -> flatten to [B, C*D*H*W]
    x1 = input1.reshape(batch, -1).astype(jnp.float32)
    x2 = input2.reshape(batch, -1).astype(jnp.float32)
    text_pad = jnp.pad(text.astype(jnp.float32), ((0, 0), (0, 128 - text.shape[1])))
    x_all = jnp.concatenate([x1, x2, text_pad], axis=-1)      # [B, 640]

    # Pad rows to a sublane-friendly multiple of 16 (bf16 LHS packing) and pick
    # a batch tile; weights use constant index_maps so they are DMA'd once and
    # stay VMEM-resident across the whole grid.
    pad_b = _round_up(max(batch, 1), 16)
    b_tile = min(128, pad_b)
    pad_b = _round_up(pad_b, b_tile)
    if pad_b != batch:
        x_all = jnp.pad(x_all, ((0, pad_b - batch), (0, 0)))
    n_tiles = pad_b // b_tile

    weight_bytes = 2 * (stackA.size + stackB.size + wd1.size + wfc1.size
                        + wfc2.size) + 4 * bias_slab.size
    io_bytes = 4 * pad_b * (X_LANES + OUT_LANES)
    cost = pl.CostEstimate(flops=pad_b * 1_540_096,
                           transcendentals=pad_b * 1600,
                           bytes_accessed=weight_bytes + io_bytes)

    grid_spec = pltpu.PrefetchScalarGridSpec(
        num_scalar_prefetch=0,
        grid=(n_tiles,),
        in_specs=[
            pl.BlockSpec((b_tile, X_LANES), lambda i: (i, 0)),      # x: tiled
            pl.BlockSpec(stackA.shape, lambda i: (0, 0, 0)),        # weights: resident
            pl.BlockSpec(stackB.shape, lambda i: (0, 0, 0)),
            pl.BlockSpec(wd1.shape, lambda i: (0, 0)),
            pl.BlockSpec(wfc1.shape, lambda i: (0, 0, 0)),
            pl.BlockSpec(wfc2.shape, lambda i: (0, 0)),
            pl.BlockSpec(bias_slab.shape, lambda i: (0, 0)),
        ],
        out_specs=pl.BlockSpec((b_tile, OUT_LANES), lambda i: (i, 0)),
    )

    out = pl.pallas_call(
        build_model_kernel,
        out_shape=jax.ShapeDtypeStruct((pad_b, OUT_LANES), jnp.float32),
        grid_spec=grid_spec,
        compiler_params=pltpu.CompilerParams(
            dimension_semantics=("parallel",)),        # shard tiles across v7x's 2 TCs
        cost_estimate=cost,
    )(x_all, stackA, stackB, wd1, wfc1, wfc2, bias_slab)

    out = out[:batch]
    t_um = out[:, O_TUM:O_TUM + FEAT]
    t_m = out[:, O_TM:O_TM + FEAT]
    n_um = out[:, O_NUM:O_NUM + FEAT]
    n_m = out[:, O_NM:O_NM + FEAT]
    after_gat = out[:, O_GAT:O_GAT + 3 * GOUT]
    probs = out[:, O_PROB:O_PROB + NUM_CLASS]
    return t_um, t_m, n_um, n_m, after_gat, probs


if __name__ == "__main__":
    key = jax.random.PRNGKey(0)
    k_p, k_x1, k_x2, k_t = jax.random.split(key, 4)

    params = init_params(k_p)
    packed = pack_params(params)

    batch = 2
    input1 = jax.random.normal(k_x1, (batch, C, D, H, W), jnp.float32)
    input2 = jax.random.normal(k_x2, (batch, C, D, H, W), jnp.float32)
    text = jax.random.normal(k_t, (batch, 6), jnp.float32)

    outs = build_model_forward(input1, input2, text, packed)
    outs = jax.block_until_ready(outs)

    t_um, t_m, n_um, n_m, after_gat, probs = outs
    assert t_um.shape == (batch, FEAT) and t_m.shape == (batch, FEAT)
    assert n_um.shape == (batch, FEAT) and n_m.shape == (batch, FEAT)
    assert after_gat.shape == (batch, 3 * GOUT)
    assert probs.shape == (batch, NUM_CLASS)
    assert np.all(np.isfinite(np.asarray(probs)))
    assert np.allclose(np.asarray(probs).sum(axis=-1), 1.0, atol=1e-4)
    print("KERNEL_OK")
</pallas_src>

<mosaic_0001>
module attributes {stable_mosaic.version = 11 : i64} {
  func.func @build_model_kernel(%arg0: i32, %arg1: memref<16x640xf32, #tpu.memory_space<vmem>>, %arg2: memref<4x256x128xbf16, #tpu.memory_space<vmem>>, %arg3: memref<3x128x256xbf16, #tpu.memory_space<vmem>>, %arg4: memref<128x128xbf16, #tpu.memory_space<vmem>>, %arg5: memref<3x64x1024xbf16, #tpu.memory_space<vmem>>, %arg6: memref<1024x256xbf16, #tpu.memory_space<vmem>>, %arg7: memref<1x2688xf32, #tpu.memory_space<vmem>>, %arg8: memref<16x896xf32, #tpu.memory_space<vmem>>) attributes {dimension_semantics = [#tpu.dimension_semantics<parallel>], iteration_bounds = array<i64: 1>, scalar_prefetch = 0 : i64, scratch_operands = 0 : i64, tpu.core_type = #tpu.core_type<tc>, window_params = [{transform_indices = @transform_0, window_bounds = array<i64: 16, 640>}, {pipeline_mode = #tpu.pipeline_mode<synchronous>, transform_indices = @transform_1, window_bounds = array<i64: 4, 256, 128>}, {pipeline_mode = #tpu.pipeline_mode<synchronous>, transform_indices = @transform_2, window_bounds = array<i64: 3, 128, 256>}, {pipeline_mode = #tpu.pipeline_mode<synchronous>, transform_indices = @transform_3, window_bounds = array<i64: 128, 128>}, {pipeline_mode = #tpu.pipeline_mode<synchronous>, transform_indices = @transform_4, window_bounds = array<i64: 3, 64, 1024>}, {pipeline_mode = #tpu.pipeline_mode<synchronous>, transform_indices = @transform_5, window_bounds = array<i64: 1024, 256>}, {pipeline_mode = #tpu.pipeline_mode<synchronous>, transform_indices = @transform_6, window_bounds = array<i64: 1, 2688>}, {transform_indices = @transform_7, window_bounds = array<i64: 16, 896>}]} {
    %c0 = arith.constant 0 : index
    %c0_0 = arith.constant 0 : index
    %0 = vector.load %arg1[%c0, %c0_0] : memref<16x640xf32, #tpu.memory_space<vmem>>, vector<16x640xf32>
    %1 = vector.extract_strided_slice %0 {offsets = [0, 0], sizes = [16, 256], strides = [1, 1]} : vector<16x640xf32> to vector<16x256xf32>
    %2 = arith.truncf %1 : vector<16x256xf32> to vector<16x256xbf16>
    %3 = vector.extract_strided_slice %0 {offsets = [0, 256], sizes = [16, 256], strides = [1, 1]} : vector<16x640xf32> to vector<16x256xf32>
    %4 = arith.truncf %3 : vector<16x256xf32> to vector<16x256xbf16>
    %5 = vector.extract_strided_slice %0 {offsets = [0, 512], sizes = [16, 128], strides = [1, 1]} : vector<16x640xf32> to vector<16x128xf32>
    %6 = arith.truncf %5 : vector<16x128xf32> to vector<16x128xbf16>
    %c0_1 = arith.constant 0 : index
    %c0_2 = arith.constant 0 : index
    %c0_3 = arith.constant 0 : index
    %7 = vector.load %arg2[%c0_1, %c0_2, %c0_3] : memref<4x256x128xbf16, #tpu.memory_space<vmem>>, vector<1x256x128xbf16>
    %8 = vector.shape_cast %7 : vector<1x256x128xbf16> to vector<256x128xbf16>
    %cst = arith.constant dense<0.000000e+00> : vector<16x128xf32>
    %9 = tpu.matmul %2, %8, %cst {dimension_numbers = #tpu.dot_dimension_numbers<[1], [0], [0], [1], [0, 0, 1, 1], [], []>} : vector<16x256xbf16>, vector<256x128xbf16>, vector<16x128xf32> -> vector<16x128xf32>
    %c0_4 = arith.constant 0 : index
    %c0_5 = arith.constant 0 : index
    %10 = vector.load %arg7[%c0_4, %c0_5] : memref<1x2688xf32, #tpu.memory_space<vmem>>, vector<1x128xf32>
    %11 = vector.broadcast %10 : vector<1x128xf32> to vector<16x128xf32>
    %12 = arith.addf %9, %11 : vector<16x128xf32>
    %c1 = arith.constant 1 : index
    %c0_6 = arith.constant 0 : index
    %c0_7 = arith.constant 0 : index
    %13 = vector.load %arg2[%c1, %c0_6, %c0_7] : memref<4x256x128xbf16, #tpu.memory_space<vmem>>, vector<1x256x128xbf16>
    %14 = vector.shape_cast %13 : vector<1x256x128xbf16> to vector<256x128xbf16>
    %cst_8 = arith.constant dense<0.000000e+00> : vector<16x128xf32>
    %15 = tpu.matmul %4, %14, %cst_8 {dimension_numbers = #tpu.dot_dimension_numbers<[1], [0], [0], [1], [0, 0, 1, 1], [], []>} : vector<16x256xbf16>, vector<256x128xbf16>, vector<16x128xf32> -> vector<16x128xf32>
    %c0_9 = arith.constant 0 : index
    %c128 = arith.constant 128 : index
    %16 = vector.load %arg7[%c0_9, %c128] : memref<1x2688xf32, #tpu.memory_space<vmem>>, vector<1x128xf32>
    %17 = vector.broadcast %16 : vector<1x128xf32> to vector<16x128xf32>
    %18 = arith.addf %15, %17 : vector<16x128xf32>
    %19 = arith.truncf %12 : vector<16x128xf32> to vector<16x128xbf16>
    %c0_10 = arith.constant 0 : index
    %c0_11 = arith.constant 0 : index
    %c0_12 = arith.constant 0 : index
    %20 = vector.load %arg3[%c0_10, %c0_11, %c0_12] : memref<3x128x256xbf16, #tpu.memory_space<vmem>>, vector<1x128x256xbf16>
    %21 = vector.shape_cast %20 : vector<1x128x256xbf16> to vector<128x256xbf16>
    %cst_13 = arith.constant dense<0.000000e+00> : vector<16x256xf32>
    %22 = tpu.matmul %19, %21, %cst_13 {dimension_numbers = #tpu.dot_dimension_numbers<[1], [0], [0], [1], [0, 0, 1, 1], [], []>} : vector<16x128xbf16>, vector<128x256xbf16>, vector<16x256xf32> -> vector<16x256xf32>
    %c0_14 = arith.constant 0 : index
    %c256 = arith.constant 256 : index
    %23 = vector.load %arg7[%c0_14, %c256] : memref<1x2688xf32, #tpu.memory_space<vmem>>, vector<1x256xf32>
    %24 = vector.broadcast %23 : vector<1x256xf32> to vector<16x256xf32>
    %25 = arith.addf %22, %24 : vector<16x256xf32>
    %26 = arith.truncf %18 : vector<16x128xf32> to vector<16x128xbf16>
    %c1_15 = arith.constant 1 : index
    %c0_16 = arith.constant 0 : index
    %c0_17 = arith.constant 0 : index
    %27 = vector.load %arg3[%c1_15, %c0_16, %c0_17] : memref<3x128x256xbf16, #tpu.memory_space<vmem>>, vector<1x128x256xbf16>
    %28 = vector.shape_cast %27 : vector<1x128x256xbf16> to vector<128x256xbf16>
    %cst_18 = arith.constant dense<0.000000e+00> : vector<16x256xf32>
    %29 = tpu.matmul %26, %28, %cst_18 {dimension_numbers = #tpu.dot_dimension_numbers<[1], [0], [0], [1], [0, 0, 1, 1], [], []>} : vector<16x128xbf16>, vector<128x256xbf16>, vector<16x256xf32> -> vector<16x256xf32>
    %c0_19 = arith.constant 0 : index
    %c512 = arith.constant 512 : index
    %30 = vector.load %arg7[%c0_19, %c512] : memref<1x2688xf32, #tpu.memory_space<vmem>>, vector<1x256xf32>
    %31 = vector.broadcast %30 : vector<1x256xf32> to vector<16x256xf32>
    %32 = arith.addf %29, %31 : vector<16x256xf32>
    %33 = vector.extract_strided_slice %25 {offsets = [0, 0], sizes = [16, 128], strides = [1, 1]} : vector<16x256xf32> to vector<16x128xf32>
    %34 = vector.extract_strided_slice %25 {offsets = [0, 128], sizes = [16, 128], strides = [1, 1]} : vector<16x256xf32> to vector<16x128xf32>
    %35 = vector.extract_strided_slice %32 {offsets = [0, 0], sizes = [16, 128], strides = [1, 1]} : vector<16x256xf32> to vector<16x128xf32>
    %36 = vector.extract_strided_slice %32 {offsets = [0, 128], sizes = [16, 128], strides = [1, 1]} : vector<16x256xf32> to vector<16x128xf32>
    %37 = tpu.concatenate %35, %34 in 1 : vector<16x128xf32>, vector<16x128xf32> -> vector<16x256xf32>
    %38 = tpu.concatenate %33, %36 in 1 : vector<16x128xf32>, vector<16x128xf32> -> vector<16x256xf32>
    %c0_20 = arith.constant 0 : index
    %c0_21 = arith.constant 0 : index
    %39 = vector.load %arg4[%c0_20, %c0_21] : memref<128x128xbf16, #tpu.memory_space<vmem>>, vector<128x128xbf16>
    %cst_22 = arith.constant dense<0.000000e+00> : vector<16x128xf32>
    %40 = tpu.matmul %6, %39, %cst_22 {dimension_numbers = #tpu.dot_dimension_numbers<[1], [0], [0], [1], [0, 0, 1, 1], [], []>} : vector<16x128xbf16>, vector<128x128xbf16>, vector<16x128xf32> -> vector<16x128xf32>
    %c0_23 = arith.constant 0 : index
    %c768 = arith.constant 768 : index
    %41 = vector.load %arg7[%c0_23, %c768] : memref<1x2688xf32, #tpu.memory_space<vmem>>, vector<1x128xf32>
    %42 = vector.broadcast %41 : vector<1x128xf32> to vector<16x128xf32>
    %43 = arith.addf %40, %42 : vector<16x128xf32>
    %cst_24 = arith.constant 0.000000e+00 : f32
    %44 = vector.broadcast %cst_24 : f32 to vector<16x128xf32>
    %45 = arith.cmpf ogt, %43, %44 : vector<16x128xf32>
    %46 = math.exp %43 : vector<16x128xf32>
    %cst_25 = arith.constant 1.000000e+00 : f32
    %47 = vector.broadcast %cst_25 : f32 to vector<16x128xf32>
    %48 = arith.subf %46, %47 : vector<16x128xf32>
    %cst_26 = arith.constant 1.67326319 : f32
    %49 = vector.broadcast %cst_26 : f32 to vector<16x128xf32>
    %50 = arith.mulf %49, %48 : vector<16x128xf32>
    %51 = arith.select %45, %43, %50 : vector<16x128xi1>, vector<16x128xf32>
    %cst_27 = arith.constant 1.05070102 : f32
    %52 = vector.broadcast %cst_27 : f32 to vector<16x128xf32>
    %53 = arith.mulf %52, %51 : vector<16x128xf32>
    %54 = arith.truncf %53 : vector<16x128xf32> to vector<16x128xbf16>
    %c2 = arith.constant 2 : index
    %c0_28 = arith.constant 0 : index
    %c0_29 = arith.constant 0 : index
    %55 = vector.load %arg3[%c2, %c0_28, %c0_29] : memref<3x128x256xbf16, #tpu.memory_space<vmem>>, vector<1x128x256xbf16>
    %56 = vector.shape_cast %55 : vector<1x128x256xbf16> to vector<128x256xbf16>
    %cst_30 = arith.constant dense<0.000000e+00> : vector<16x256xf32>
    %57 = tpu.matmul %54, %56, %cst_30 {dimension_numbers = #tpu.dot_dimension_numbers<[1], [0], [0], [1], [0, 0, 1, 1], [], []>} : vector<16x128xbf16>, vector<128x256xbf16>, vector<16x256xf32> -> vector<16x256xf32>
    %c0_31 = arith.constant 0 : index
    %c896 = arith.constant 896 : index
    %58 = vector.load %arg7[%c0_31, %c896] : memref<1x2688xf32, #tpu.memory_space<vmem>>, vector<1x256xf32>
    %59 = vector.broadcast %58 : vector<1x256xf32> to vector<16x256xf32>
    %60 = arith.addf %57, %59 : vector<16x256xf32>
    %61 = tpu.concatenate %37, %38, %60 in 0 : vector<16x256xf32>, vector<16x256xf32>, vector<16x256xf32> -> vector<48x256xf32>
    %62 = arith.truncf %61 : vector<48x256xf32> to vector<48x256xbf16>
    %c2_32 = arith.constant 2 : index
    %c0_33 = arith.constant 0 : index
    %c0_34 = arith.constant 0 : index
    %63 = vector.load %arg2[%c2_32, %c0_33, %c0_34] : memref<4x256x128xbf16, #tpu.memory_space<vmem>>, vector<1x256x128xbf16>
    %64 = vector.shape_cast %63 : vector<1x256x128xbf16> to vector<256x128xbf16>
    %cst_35 = arith.constant dense<0.000000e+00> : vector<48x128xf32>
    %65 = tpu.matmul %62, %64, %cst_35 {dimension_numbers = #tpu.dot_dimension_numbers<[1], [0], [0], [1], [0, 0, 1, 1], [], []>} : vector<48x256xbf16>, vector<256x128xbf16>, vector<48x128xf32> -> vector<48x128xf32>
    %66 = vector.extract_strided_slice %65 {offsets = [0, 0], sizes = [48, 64], strides = [1, 1]} : vector<48x128xf32> to vector<48x64xf32>
    %67 = vector.extract_strided_slice %65 {offsets = [0, 64], sizes = [48, 1], strides = [1, 1]} : vector<48x128xf32> to vector<48x1xf32>
    %68 = vector.extract_strided_slice %65 {offsets = [0, 65], sizes = [48, 1], strides = [1, 1]} : vector<48x128xf32> to vector<48x1xf32>
    %69 = vector.extract_strided_slice %66 {offsets = [0, 0], sizes = [16, 64], strides = [1, 1]} : vector<48x64xf32> to vector<16x64xf32>
    %70 = vector.extract_strided_slice %66 {offsets = [16, 0], sizes = [16, 64], strides = [1, 1]} : vector<48x64xf32> to vector<16x64xf32>
    %71 = vector.extract_strided_slice %66 {offsets = [32, 0], sizes = [16, 64], strides = [1, 1]} : vector<48x64xf32> to vector<16x64xf32>
    %72 = vector.extract_strided_slice %67 {offsets = [0, 0], sizes = [16, 1], strides = [1, 1]} : vector<48x1xf32> to vector<16x1xf32>
    %73 = vector.extract_strided_slice %67 {offsets = [16, 0], sizes = [16, 1], strides = [1, 1]} : vector<48x1xf32> to vector<16x1xf32>
    %74 = vector.extract_strided_slice %67 {offsets = [32, 0], sizes = [16, 1], strides = [1, 1]} : vector<48x1xf32> to vector<16x1xf32>
    %75 = vector.extract_strided_slice %68 {offsets = [0, 0], sizes = [16, 1], strides = [1, 1]} : vector<48x1xf32> to vector<16x1xf32>
    %76 = vector.extract_strided_slice %68 {offsets = [16, 0], sizes = [16, 1], strides = [1, 1]} : vector<48x1xf32> to vector<16x1xf32>
    %77 = vector.extract_strided_slice %68 {offsets = [32, 0], sizes = [16, 1], strides = [1, 1]} : vector<48x1xf32> to vector<16x1xf32>
    %c0_36 = arith.constant 0 : index
    %c1152 = arith.constant 1152 : index
    %78 = vector.load %arg7[%c0_36, %c1152] : memref<1x2688xf32, #tpu.memory_space<vmem>>, vector<1x64xf32>
    %79 = arith.addf %75, %72 : vector<16x1xf32>
    %cst_37 = arith.constant 0.000000e+00 : f32
    %80 = vector.broadcast %cst_37 : f32 to vector<16x1xf32>
    %81 = arith.cmpf ogt, %79, %80 : vector<16x1xf32>
    %cst_38 = arith.constant 2.000000e-01 : f32
    %82 = vector.broadcast %cst_38 : f32 to vector<16x1xf32>
    %83 = arith.mulf %82, %79 : vector<16x1xf32>
    %84 = arith.select %81, %79, %83 : vector<16x1xi1>, vector<16x1xf32>
    %85 = arith.addf %75, %73 : vector<16x1xf32>
    %cst_39 = arith.constant 0.000000e+00 : f32
    %86 = vector.broadcast %cst_39 : f32 to vector<16x1xf32>
    %87 = arith.cmpf ogt, %85, %86 : vector<16x1xf32>
    %cst_40 = arith.constant 2.000000e-01 : f32
    %88 = vector.broadcast %cst_40 : f32 to vector<16x1xf32>
    %89 = arith.mulf %88, %85 : vector<16x1xf32>
    %90 = arith.select %87, %85, %89 : vector<16x1xi1>, vector<16x1xf32>
    %91 = arith.addf %75, %74 : vector<16x1xf32>
    %cst_41 = arith.constant 0.000000e+00 : f32
    %92 = vector.broadcast %cst_41 : f32 to vector<16x1xf32>
    %93 = arith.cmpf ogt, %91, %92 : vector<16x1xf32>
    %cst_42 = arith.constant 2.000000e-01 : f32
    %94 = vector.broadcast %cst_42 : f32 to vector<16x1xf32>
    %95 = arith.mulf %94, %91 : vector<16x1xf32>
    %96 = arith.select %93, %91, %95 : vector<16x1xi1>, vector<16x1xf32>
    %97 = arith.maximumf %84, %90 : vector<16x1xf32>
    %98 = arith.maximumf %97, %96 : vector<16x1xf32>
    %99 = arith.subf %84, %98 : vector<16x1xf32>
    %100 = math.exp %99 : vector<16x1xf32>
    %101 = arith.subf %90, %98 : vector<16x1xf32>
    %102 = math.exp %101 : vector<16x1xf32>
    %103 = arith.subf %96, %98 : vector<16x1xf32>
    %104 = math.exp %103 : vector<16x1xf32>
    %105 = arith.addf %100, %102 : vector<16x1xf32>
    %106 = arith.addf %105, %104 : vector<16x1xf32>
    %107 = tpu.reciprocal %106 {approx = true} : vector<16x1xf32> -> vector<16x1xf32>
    %108 = vector.broadcast %100 : vector<16x1xf32> to vector<16x64xf32>
    %109 = arith.mulf %108, %69 : vector<16x64xf32>
    %110 = vector.broadcast %102 : vector<16x1xf32> to vector<16x64xf32>
    %111 = arith.mulf %110, %70 : vector<16x64xf32>
    %112 = arith.addf %109, %111 : vector<16x64xf32>
    %113 = vector.broadcast %104 : vector<16x1xf32> to vector<16x64xf32>
    %114 = arith.mulf %113, %71 : vector<16x64xf32>
    %115 = arith.addf %112, %114 : vector<16x64xf32>
    %116 = vector.broadcast %107 : vector<16x1xf32> to vector<16x64xf32>
    %117 = arith.mulf %115, %116 : vector<16x64xf32>
    %118 = vector.broadcast %78 : vector<1x64xf32> to vector<16x64xf32>
    %119 = arith.addf %117, %118 : vector<16x64xf32>
    %120 = arith.addf %76, %72 : vector<16x1xf32>
    %cst_43 = arith.constant 0.000000e+00 : f32
    %121 = vector.broadcast %cst_43 : f32 to vector<16x1xf32>
    %122 = arith.cmpf ogt, %120, %121 : vector<16x1xf32>
    %cst_44 = arith.constant 2.000000e-01 : f32
    %123 = vector.broadcast %cst_44 : f32 to vector<16x1xf32>
    %124 = arith.mulf %123, %120 : vector<16x1xf32>
    %125 = arith.select %122, %120, %124 : vector<16x1xi1>, vector<16x1xf32>
    %126 = arith.addf %76, %73 : vector<16x1xf32>
    %cst_45 = arith.constant 0.000000e+00 : f32
    %127 = vector.broadcast %cst_45 : f32 to vector<16x1xf32>
    %128 = arith.cmpf ogt, %126, %127 : vector<16x1xf32>
    %cst_46 = arith.constant 2.000000e-01 : f32
    %129 = vector.broadcast %cst_46 : f32 to vector<16x1xf32>
    %130 = arith.mulf %129, %126 : vector<16x1xf32>
    %131 = arith.select %128, %126, %130 : vector<16x1xi1>, vector<16x1xf32>
    %132 = arith.addf %76, %74 : vector<16x1xf32>
    %cst_47 = arith.constant 0.000000e+00 : f32
    %133 = vector.broadcast %cst_47 : f32 to vector<16x1xf32>
    %134 = arith.cmpf ogt, %132, %133 : vector<16x1xf32>
    %cst_48 = arith.constant 2.000000e-01 : f32
    %135 = vector.broadcast %cst_48 : f32 to vector<16x1xf32>
    %136 = arith.mulf %135, %132 : vector<16x1xf32>
    %137 = arith.select %134, %132, %136 : vector<16x1xi1>, vector<16x1xf32>
    %138 = arith.maximumf %125, %131 : vector<16x1xf32>
    %139 = arith.maximumf %138, %137 : vector<16x1xf32>
    %140 = arith.subf %125, %139 : vector<16x1xf32>
    %141 = math.exp %140 : vector<16x1xf32>
    %142 = arith.subf %131, %139 : vector<16x1xf32>
    %143 = math.exp %142 : vector<16x1xf32>
    %144 = arith.subf %137, %139 : vector<16x1xf32>
    %145 = math.exp %144 : vector<16x1xf32>
    %146 = arith.addf %141, %143 : vector<16x1xf32>
    %147 = arith.addf %146, %145 : vector<16x1xf32>
    %148 = tpu.reciprocal %147 {approx = true} : vector<16x1xf32> -> vector<16x1xf32>
    %149 = vector.broadcast %141 : vector<16x1xf32> to vector<16x64xf32>
    %150 = arith.mulf %149, %69 : vector<16x64xf32>
    %151 = vector.broadcast %143 : vector<16x1xf32> to vector<16x64xf32>
    %152 = arith.mulf %151, %70 : vector<16x64xf32>
    %153 = arith.addf %150, %152 : vector<16x64xf32>
    %154 = vector.broadcast %145 : vector<16x1xf32> to vector<16x64xf32>
    %155 = arith.mulf %154, %71 : vector<16x64xf32>
    %156 = arith.addf %153, %155 : vector<16x64xf32>
    %157 = vector.broadcast %148 : vector<16x1xf32> to vector<16x64xf32>
    %158 = arith.mulf %156, %157 : vector<16x64xf32>
    %159 = vector.broadcast %78 : vector<1x64xf32> to vector<16x64xf32>
    %160 = arith.addf %158, %159 : vector<16x64xf32>
    %161 = arith.addf %77, %72 : vector<16x1xf32>
    %cst_49 = arith.constant 0.000000e+00 : f32
    %162 = vector.broadcast %cst_49 : f32 to vector<16x1xf32>
    %163 = arith.cmpf ogt, %161, %162 : vector<16x1xf32>
    %cst_50 = arith.constant 2.000000e-01 : f32
    %164 = vector.broadcast %cst_50 : f32 to vector<16x1xf32>
    %165 = arith.mulf %164, %161 : vector<16x1xf32>
    %166 = arith.select %163, %161, %165 : vector<16x1xi1>, vector<16x1xf32>
    %167 = arith.addf %77, %73 : vector<16x1xf32>
    %cst_51 = arith.constant 0.000000e+00 : f32
    %168 = vector.broadcast %cst_51 : f32 to vector<16x1xf32>
    %169 = arith.cmpf ogt, %167, %168 : vector<16x1xf32>
    %cst_52 = arith.constant 2.000000e-01 : f32
    %170 = vector.broadcast %cst_52 : f32 to vector<16x1xf32>
    %171 = arith.mulf %170, %167 : vector<16x1xf32>
    %172 = arith.select %169, %167, %171 : vector<16x1xi1>, vector<16x1xf32>
    %173 = arith.addf %77, %74 : vector<16x1xf32>
    %cst_53 = arith.constant 0.000000e+00 : f32
    %174 = vector.broadcast %cst_53 : f32 to vector<16x1xf32>
    %175 = arith.cmpf ogt, %173, %174 : vector<16x1xf32>
    %cst_54 = arith.constant 2.000000e-01 : f32
    %176 = vector.broadcast %cst_54 : f32 to vector<16x1xf32>
    %177 = arith.mulf %176, %173 : vector<16x1xf32>
    %178 = arith.select %175, %173, %177 : vector<16x1xi1>, vector<16x1xf32>
    %179 = arith.maximumf %166, %172 : vector<16x1xf32>
    %180 = arith.maximumf %179, %178 : vector<16x1xf32>
    %181 = arith.subf %166, %180 : vector<16x1xf32>
    %182 = math.exp %181 : vector<16x1xf32>
    %183 = arith.subf %172, %180 : vector<16x1xf32>
    %184 = math.exp %183 : vector<16x1xf32>
    %185 = arith.subf %178, %180 : vector<16x1xf32>
    %186 = math.exp %185 : vector<16x1xf32>
    %187 = arith.addf %182, %184 : vector<16x1xf32>
    %188 = arith.addf %187, %186 : vector<16x1xf32>
    %189 = tpu.reciprocal %188 {approx = true} : vector<16x1xf32> -> vector<16x1xf32>
    %190 = vector.broadcast %182 : vector<16x1xf32> to vector<16x64xf32>
    %191 = arith.mulf %190, %69 : vector<16x64xf32>
    %192 = vector.broadcast %184 : vector<16x1xf32> to vector<16x64xf32>
    %193 = arith.mulf %192, %70 : vector<16x64xf32>
    %194 = arith.addf %191, %193 : vector<16x64xf32>
    %195 = vector.broadcast %186 : vector<16x1xf32> to vector<16x64xf32>
    %196 = arith.mulf %195, %71 : vector<16x64xf32>
    %197 = arith.addf %194, %196 : vector<16x64xf32>
    %198 = vector.broadcast %189 : vector<16x1xf32> to vector<16x64xf32>
    %199 = arith.mulf %197, %198 : vector<16x64xf32>
    %200 = vector.broadcast %78 : vector<1x64xf32> to vector<16x64xf32>
    %201 = arith.addf %199, %200 : vector<16x64xf32>
    %202 = arith.truncf %119 : vector<16x64xf32> to vector<16x64xbf16>
    %c0_55 = arith.constant 0 : index
    %c0_56 = arith.constant 0 : index
    %c0_57 = arith.constant 0 : index
    %203 = vector.load %arg5[%c0_55, %c0_56, %c0_57] : memref<3x64x1024xbf16, #tpu.memory_space<vmem>>, vector<1x64x1024xbf16>
    %204 = vector.shape_cast %203 : vector<1x64x1024xbf16> to vector<64x1024xbf16>
    %cst_58 = arith.constant dense<0.000000e+00> : vector<16x1024xf32>
    %205 = tpu.matmul %202, %204, %cst_58 {dimension_numbers = #tpu.dot_dimension_numbers<[1], [0], [0], [1], [0, 0, 1, 1], [], []>} : vector<16x64xbf16>, vector<64x1024xbf16>, vector<16x1024xf32> -> vector<16x1024xf32>
    %206 = arith.truncf %160 : vector<16x64xf32> to vector<16x64xbf16>
    %c1_59 = arith.constant 1 : index
    %c0_60 = arith.constant 0 : index
    %c0_61 = arith.constant 0 : index
    %207 = vector.load %arg5[%c1_59, %c0_60, %c0_61] : memref<3x64x1024xbf16, #tpu.memory_space<vmem>>, vector<1x64x1024xbf16>
    %208 = vector.shape_cast %207 : vector<1x64x1024xbf16> to vector<64x1024xbf16>
    %cst_62 = arith.constant dense<0.000000e+00> : vector<16x1024xf32>
    %209 = tpu.matmul %206, %208, %cst_62 {dimension_numbers = #tpu.dot_dimension_numbers<[1], [0], [0], [1], [0, 0, 1, 1], [], []>} : vector<16x64xbf16>, vector<64x1024xbf16>, vector<16x1024xf32> -> vector<16x1024xf32>
    %210 = arith.addf %205, %209 : vector<16x1024xf32>
    %211 = arith.truncf %201 : vector<16x64xf32> to vector<16x64xbf16>
    %c2_63 = arith.constant 2 : index
    %c0_64 = arith.constant 0 : index
    %c0_65 = arith.constant 0 : index
    %212 = vector.load %arg5[%c2_63, %c0_64, %c0_65] : memref<3x64x1024xbf16, #tpu.memory_space<vmem>>, vector<1x64x1024xbf16>
    %213 = vector.shape_cast %212 : vector<1x64x1024xbf16> to vector<64x1024xbf16>
    %cst_66 = arith.constant dense<0.000000e+00> : vector<16x1024xf32>
    %214 = tpu.matmul %211, %213, %cst_66 {dimension_numbers = #tpu.dot_dimension_numbers<[1], [0], [0], [1], [0, 0, 1, 1], [], []>} : vector<16x64xbf16>, vector<64x1024xbf16>, vector<16x1024xf32> -> vector<16x1024xf32>
    %215 = arith.addf %210, %214 : vector<16x1024xf32>
    %c0_67 = arith.constant 0 : index
    %c1280 = arith.constant 1280 : index
    %216 = vector.load %arg7[%c0_67, %c1280] : memref<1x2688xf32, #tpu.memory_space<vmem>>, vector<1x1024xf32>
    %217 = vector.broadcast %216 : vector<1x1024xf32> to vector<16x1024xf32>
    %218 = arith.addf %215, %217 : vector<16x1024xf32>
    %cst_68 = arith.constant 0.000000e+00 : f32
    %219 = vector.broadcast %cst_68 : f32 to vector<16x1024xf32>
    %220 = arith.cmpf ogt, %218, %219 : vector<16x1024xf32>
    %221 = math.exp %218 : vector<16x1024xf32>
    %cst_69 = arith.constant 1.000000e+00 : f32
    %222 = vector.broadcast %cst_69 : f32 to vector<16x1024xf32>
    %223 = arith.subf %221, %222 : vector<16x1024xf32>
    %cst_70 = arith.constant 1.67326319 : f32
    %224 = vector.broadcast %cst_70 : f32 to vector<16x1024xf32>
    %225 = arith.mulf %224, %223 : vector<16x1024xf32>
    %226 = arith.select %220, %218, %225 : vector<16x1024xi1>, vector<16x1024xf32>
    %cst_71 = arith.constant 1.05070102 : f32
    %227 = vector.broadcast %cst_71 : f32 to vector<16x1024xf32>
    %228 = arith.mulf %227, %226 : vector<16x1024xf32>
    %229 = arith.truncf %228 : vector<16x1024xf32> to vector<16x1024xbf16>
    %c0_72 = arith.constant 0 : index
    %c0_73 = arith.constant 0 : index
    %230 = vector.load %arg6[%c0_72, %c0_73] : memref<1024x256xbf16, #tpu.memory_space<vmem>>, vector<1024x256xbf16>
    %cst_74 = arith.constant dense<0.000000e+00> : vector<16x256xf32>
    %231 = tpu.matmul %229, %230, %cst_74 {dimension_numbers = #tpu.dot_dimension_numbers<[1], [0], [0], [1], [0, 0, 1, 1], [], []>} : vector<16x1024xbf16>, vector<1024x256xbf16>, vector<16x256xf32> -> vector<16x256xf32>
    %c0_75 = arith.constant 0 : index
    %c2304 = arith.constant 2304 : index
    %232 = vector.load %arg7[%c0_75, %c2304] : memref<1x2688xf32, #tpu.memory_space<vmem>>, vector<1x256xf32>
    %233 = vector.broadcast %232 : vector<1x256xf32> to vector<16x256xf32>
    %234 = arith.addf %231, %233 : vector<16x256xf32>
    %cst_76 = arith.constant 0.000000e+00 : f32
    %235 = vector.broadcast %cst_76 : f32 to vector<16x256xf32>
    %236 = arith.cmpf ogt, %234, %235 : vector<16x256xf32>
    %237 = math.exp %234 : vector<16x256xf32>
    %cst_77 = arith.constant 1.000000e+00 : f32
    %238 = vector.broadcast %cst_77 : f32 to vector<16x256xf32>
    %239 = arith.subf %237, %238 : vector<16x256xf32>
    %cst_78 = arith.constant 1.67326319 : f32
    %240 = vector.broadcast %cst_78 : f32 to vector<16x256xf32>
    %241 = arith.mulf %240, %239 : vector<16x256xf32>
    %242 = arith.select %236, %234, %241 : vector<16x256xi1>, vector<16x256xf32>
    %cst_79 = arith.constant 1.05070102 : f32
    %243 = vector.broadcast %cst_79 : f32 to vector<16x256xf32>
    %244 = arith.mulf %243, %242 : vector<16x256xf32>
    %245 = arith.truncf %244 : vector<16x256xf32> to vector<16x256xbf16>
    %c3 = arith.constant 3 : index
    %c0_80 = arith.constant 0 : index
    %c0_81 = arith.constant 0 : index
    %246 = vector.load %arg2[%c3, %c0_80, %c0_81] : memref<4x256x128xbf16, #tpu.memory_space<vmem>>, vector<1x256x128xbf16>
    %247 = vector.shape_cast %246 : vector<1x256x128xbf16> to vector<256x128xbf16>
    %cst_82 = arith.constant dense<0.000000e+00> : vector<16x128xf32>
    %248 = tpu.matmul %245, %247, %cst_82 {dimension_numbers = #tpu.dot_dimension_numbers<[1], [0], [0], [1], [0, 0, 1, 1], [], []>} : vector<16x256xbf16>, vector<256x128xbf16>, vector<16x128xf32> -> vector<16x128xf32>
    %c0_83 = arith.constant 0 : index
    %c2560 = arith.constant 2560 : index
    %249 = vector.load %arg7[%c0_83, %c2560] : memref<1x2688xf32, #tpu.memory_space<vmem>>, vector<1x128xf32>
    %250 = vector.broadcast %249 : vector<1x128xf32> to vector<16x128xf32>
    %251 = arith.addf %248, %250 : vector<16x128xf32>
    %cst_84 = arith.constant dense<0xFF800000> : vector<16xf32>
    %252 = vector.multi_reduction <maximumf>, %251, %cst_84 [1] : vector<16x128xf32> to vector<16xf32>
    %253 = vector.shape_cast %252 : vector<16xf32> to vector<16x1xf32>
    %254 = vector.broadcast %253 : vector<16x1xf32> to vector<16x128xf32>
    %255 = arith.subf %251, %254 : vector<16x128xf32>
    %256 = math.exp %255 : vector<16x128xf32>
    %cst_85 = arith.constant dense<0.000000e+00> : vector<16xf32>
    %257 = vector.multi_reduction <add>, %256, %cst_85 [1] : vector<16x128xf32> to vector<16xf32>
    %258 = vector.shape_cast %257 : vector<16xf32> to vector<16x1xf32>
    %259 = vector.broadcast %258 : vector<16x1xf32> to vector<16x128xf32>
    %260 = arith.divf %256, %259 : vector<16x128xf32>
    %c0_86 = arith.constant 0 : index
    %c0_87 = arith.constant 0 : index
    %261 = vector.load %arg8[%c0_86, %c0_87] : memref<16x896xf32, #tpu.memory_space<vmem>>, vector<16x128xf32>
    tpu.vector_store %arg8[%c0_86, %c0_87], %12 {strides = array<i32>} : memref<16x896xf32, #tpu.memory_space<vmem>>, vector<16x128xf32>,
    %c0_88 = arith.constant 0 : index
    %c128_89 = arith.constant 128 : index
    %262 = vector.load %arg8[%c0_88, %c128_89] : memref<16x896xf32, #tpu.memory_space<vmem>>, vector<16x128xf32>
    tpu.vector_store %arg8[%c0_88, %c128_89], %35 {strides = array<i32>} : memref<16x896xf32, #tpu.memory_space<vmem>>, vector<16x128xf32>,
    %c0_90 = arith.constant 0 : index
    %c256_91 = arith.constant 256 : index
    %263 = vector.load %arg8[%c0_90, %c256_91] : memref<16x896xf32, #tpu.memory_space<vmem>>, vector<16x128xf32>
    tpu.vector_store %arg8[%c0_90, %c256_91], %18 {strides = array<i32>} : memref<16x896xf32, #tpu.memory_space<vmem>>, vector<16x128xf32>,
    %c0_92 = arith.constant 0 : index
    %c384 = arith.constant 384 : index
    %264 = vector.load %arg8[%c0_92, %c384] : memref<16x896xf32, #tpu.memory_space<vmem>>, vector<16x128xf32>
    tpu.vector_store %arg8[%c0_92, %c384], %33 {strides = array<i32>} : memref<16x896xf32, #tpu.memory_space<vmem>>, vector<16x128xf32>,
    %c0_93 = arith.constant 0 : index
    %c512_94 = arith.constant 512 : index
    %265 = vector.load %arg8[%c0_93, %c512_94] : memref<16x896xf32, #tpu.memory_space<vmem>>, vector<16x64xf32>
    tpu.vector_store %arg8[%c0_93, %c512_94], %119 {strides = array<i32>} : memref<16x896xf32, #tpu.memory_space<vmem>>, vector<16x64xf32>,
    %c0_95 = arith.constant 0 : index
    %c576 = arith.constant 576 : index
    %266 = vector.load %arg8[%c0_95, %c576] : memref<16x896xf32, #tpu.memory_space<vmem>>, vector<16x64xf32>
    tpu.vector_store %arg8[%c0_95, %c576], %160 {strides = array<i32>} : memref<16x896xf32, #tpu.memory_space<vmem>>, vector<16x64xf32>,
    %c0_96 = arith.constant 0 : index
    %c640 = arith.constant 640 : index
    %267 = vector.load %arg8[%c0_96, %c640] : memref<16x896xf32, #tpu.memory_space<vmem>>, vector<16x64xf32>
    tpu.vector_store %arg8[%c0_96, %c640], %201 {strides = array<i32>} : memref<16x896xf32, #tpu.memory_space<vmem>>, vector<16x64xf32>,
    %cst_97 = arith.constant 0.000000e+00 : f32
    %268 = vector.broadcast %cst_97 : f32 to vector<16x64xf32>
    %c0_98 = arith.constant 0 : index
    %c704 = arith.constant 704 : index
    %269 = vector.load %arg8[%c0_98, %c704] : memref<16x896xf32, #tpu.memory_space<vmem>>, vector<16x64xf32>
    tpu.vector_store %arg8[%c0_98, %c704], %268 {strides = array<i32>} : memref<16x896xf32, #tpu.memory_space<vmem>>, vector<16x64xf32>,
    %c0_99 = arith.constant 0 : index
    %c768_100 = arith.constant 768 : index
    %270 = vector.load %arg8[%c0_99, %c768_100] : memref<16x896xf32, #tpu.memory_space<vmem>>, vector<16x128xf32>
    tpu.vector_store %arg8[%c0_99, %c768_100], %260 {strides = array<i32>} : memref<16x896xf32, #tpu.memory_space<vmem>>, vector<16x128xf32>,
    return
  }
  func.func @transform_0(%arg0: i32) -> (i32, i32) {
    %c0_i32 = arith.constant 0 : i32
    %c0_i32_0 = arith.constant 0 : i32
    return %arg0, %c0_i32 : i32, i32
  }
  func.func @transform_1(%arg0: i32) -> (i32, i32, i32) {
    %c0_i32 = arith.constant 0 : i32
    %c0_i32_0 = arith.constant 0 : i32
    %c0_i32_1 = arith.constant 0 : i32
    %c0_i32_2 = arith.constant 0 : i32
    return %c0_i32, %c0_i32_0, %c0_i32_1 : i32, i32, i32
  }
  func.func @transform_2(%arg0: i32) -> (i32, i32, i32) {
    %c0_i32 = arith.constant 0 : i32
    %c0_i32_0 = arith.constant 0 : i32
    %c0_i32_1 = arith.constant 0 : i32
    %c0_i32_2 = arith.constant 0 : i32
    return %c0_i32, %c0_i32_0, %c0_i32_1 : i32, i32, i32
  }
  func.func @transform_3(%arg0: i32) -> (i32, i32) {
    %c0_i32 = arith.constant 0 : i32
    %c0_i32_0 = arith.constant 0 : i32
    %c0_i32_1 = arith.constant 0 : i32
    return %c0_i32, %c0_i32_0 : i32, i32
  }
  func.func @transform_4(%arg0: i32) -> (i32, i32, i32) {
    %c0_i32 = arith.constant 0 : i32
    %c0_i32_0 = arith.constant 0 : i32
    %c0_i32_1 = arith.constant 0 : i32
    %c0_i32_2 = arith.constant 0 : i32
    return %c0_i32, %c0_i32_0, %c0_i32_1 : i32, i32, i32
  }
  func.func @transform_5(%arg0: i32) -> (i32, i32) {
    %c0_i32 = arith.constant 0 : i32
    %c0_i32_0 = arith.constant 0 : i32
    %c0_i32_1 = arith.constant 0 : i32
    return %c0_i32, %c0_i32_0 : i32, i32
  }
  func.func @transform_6(%arg0: i32) -> (i32, i32) {
    %c0_i32 = arith.constant 0 : i32
    %c0_i32_0 = arith.constant 0 : i32
    %c0_i32_1 = arith.constant 0 : i32
    return %c0_i32, %c0_i32_0 : i32, i32
  }
  func.func @transform_7(%arg0: i32) -> (i32, i32) {
    %c0_i32 = arith.constant 0 : i32
    %c0_i32_0 = arith.constant 0 : i32
    return %arg0, %c0_i32 : i32, i32
  }
}

</mosaic_0001>

<llo_original>
// kernel: build_model_forward.1
$region0: #{build_model_forward.1}
  #allocation0 [shape = 'u32[]', space=smem, size = 0x4, offset = 0x4, fixed_abs, tag = 'smem constant byte address 0x4 - core index']
  #allocation1 [shape = 'u32[144,128]{1,0:T(1,128)}', space=vmem, size = 0x12000, scoped, tag = 'internal scratch']
  %s0 = inlined_call_operand.vmem [shape: f32[16,640], index: 0, kind: input, shape index: {}]
  %s1 = inlined_call_operand.hbm [shape: bf16[4,256,128], index: 1, kind: input, shape index: {}]
  %s2 = inlined_call_operand.hbm [shape: bf16[3,128,256], index: 2, kind: input, shape index: {}]
  %s3 = inlined_call_operand.vmem [shape: bf16[128,128], index: 3, kind: input, shape index: {}]
  %s4 = inlined_call_operand.hbm [shape: bf16[3,64,1024], index: 4, kind: input, shape index: {}]
  %s5 = inlined_call_operand.hbm [shape: bf16[1024,256], index: 5, kind: input, shape index: {}]
  %s6 = inlined_call_operand.vmem [shape: f32[1,2688], index: 6, kind: input, shape index: {}]
  %s7 = inlined_call_operand.vmem [shape: f32[16,896], index: 7, kind: output, shape index: {}]
  %s8 = sld [smem:[#allocation0]]
  $region54: #{build_model_forward.1} parent=0
    _
  %s10 = ssub.s32 1, %s8
  %s11 = scalar_select 0, %s10, %s8
  $region1: #{build_model_forward.1} parent=0
    #allocation2 [shape = 'u8[262144]{0}', space=vmem, size = 0x40000, scoped, tag = 'input window, operand 1, single buffered']
    #allocation3 [shape = 's32[1]{0}', space=sflag, size = 0x4, scoped, tag = 'scoped memory for build_model_forward.1']
    #allocation4 [shape = 'u8[196608]{0}', space=vmem, size = 0x30000, scoped, tag = 'input window, operand 2, single buffered']
    #allocation5 [shape = 's32[1]{0}', space=sflag, size = 0x4, scoped, tag = 'scoped memory for build_model_forward.1']
    #allocation6 [shape = 'u8[393216]{0}', space=vmem, size = 0x60000, scoped, tag = 'input window, operand 4, single buffered']
    #allocation7 [shape = 'u8[524288]{0}', space=vmem, size = 0x80000, scoped, tag = 'input window, operand 5, single buffered']
    #allocation8 [shape = 's32[1]{0}', space=sflag, size = 0x4, scoped, tag = 'scoped memory for build_model_forward.1']
    %12 = vsyncpa [#allocation3], 0
    %13 = vsyncpa [#allocation5], 0
    %14 = vsyncpa [#allocation8], 0
    // Predicated region
    $region2: #{build_model_forward.1} parent=1 // pred_check
      _
    $region3: #{build_model_forward.1} parent=1 // pred_check_branch
      %16 = sbr.rel (0) target = $region5
    $region4: #{build_model_forward.1} parent=1 // pred_region
      _
    $region5: #{build_model_forward.1} parent=1 // pred_fallthru
      _
    // Predicated region
    $region6: #{build_model_forward.1} parent=1 // pred_check
      _
    $region7: #{build_model_forward.1} parent=1 // pred_check_branch
      %18 = sbr.rel (0) target = $region9
    $region8: #{build_model_forward.1} parent=1 // pred_region
      %s20 = ssub.s32 8192, 8192
      %21 = vsyncadd [#allocation3], %s20
      %s22 = sshll.u32 [#allocation2], 4
      %s23 = int_to_ptr.vmem [resolvable:$true] %s22
      %28 = dma.hbm_to_vmem [thread:$0]  %s1, 8192, %s23, [#allocation3], 64, 64, 4
    $region9: #{build_model_forward.1} parent=1 // pred_fallthru
      _
    // Predicated region
    $region10: #{build_model_forward.1} parent=1 // pred_check
      _
    $region11: #{build_model_forward.1} parent=1 // pred_check_branch
      %30 = sbr.rel (0) target = $region13
    $region12: #{build_model_forward.1} parent=1 // pred_region
      %s32 = ssub.s32 6144, 6144
      %33 = vsyncadd [#allocation5], %s32
      %s34 = sshll.u32 [#allocation4], 4
      %s35 = int_to_ptr.vmem [resolvable:$true] %s34
      %40 = dma.hbm_to_vmem [thread:$0]  %s2, 6144, %s35, [#allocation5], 128, 128, 8
    $region13: #{build_model_forward.1} parent=1 // pred_fallthru
      _
    // Predicated region
    $region14: #{build_model_forward.1} parent=1 // pred_check
      _
    $region15: #{build_model_forward.1} parent=1 // pred_check_branch
      %42 = sbr.rel (0) target = $region17
    $region16: #{build_model_forward.1} parent=1 // pred_region
      _
    $region17: #{build_model_forward.1} parent=1 // pred_fallthru
      _
    // Predicated region
    $region18: #{build_model_forward.1} parent=1 // pred_check
      _
    $region19: #{build_model_forward.1} parent=1 // pred_check_branch
      %44 = sbr.rel (0) target = $region21
    $region20: #{build_model_forward.1} parent=1 // pred_region
      %s46 = ssub.s32 12288, 12288
      %47 = vsyncadd [#allocation5], %s46
      %s48 = sshll.u32 [#allocation6], 4
      %s49 = int_to_ptr.vmem [resolvable:$true] %s48
      %54 = dma.hbm_to_vmem [thread:$0]  %s4, 12288, %s49, [#allocation5], 512, 512, 32
    $region21: #{build_model_forward.1} parent=1 // pred_fallthru
      _
    // Predicated region
    $region22: #{build_model_forward.1} parent=1 // pred_check
      _
    $region23: #{build_model_forward.1} parent=1 // pred_check_branch
      %56 = sbr.rel (0) target = $region25
    $region24: #{build_model_forward.1} parent=1 // pred_region
      %s58 = ssub.s32 16384, 16384
      %59 = vsyncadd [#allocation8], %s58
      %s60 = sshll.u32 [#allocation7], 4
      %s61 = int_to_ptr.vmem [resolvable:$true] %s60
      %66 = dma.hbm_to_vmem [thread:$0]  %s5, 16384, %s61, [#allocation8], 128, 128, 8
    $region25: #{build_model_forward.1} parent=1 // pred_fallthru
      _
    // Predicated region
    $region26: #{build_model_forward.1} parent=1 // pred_check
      _
    $region27: #{build_model_forward.1} parent=1 // pred_check_branch
      %68 = sbr.rel (0) target = $region29
    $region28: #{build_model_forward.1} parent=1 // pred_region
      _
    $region29: #{build_model_forward.1} parent=1 // pred_fallthru
      _
    // Predicated region
    $region30: #{build_model_forward.1} parent=1 // pred_check
      _
    $region31: #{build_model_forward.1} parent=1 // pred_check_branch
      %70 = sbr.rel (0) target = $region33
    $region32: #{build_model_forward.1} parent=1 // pred_region
      %71 = dma.done [#allocation3], 8192
    $region33: #{build_model_forward.1} parent=1 // pred_fallthru
      _
    // Predicated region
    $region34: #{build_model_forward.1} parent=1 // pred_check
      _
    $region35: #{build_model_forward.1} parent=1 // pred_check_branch
      %73 = sbr.rel (0) target = $region37
    $region36: #{build_model_forward.1} parent=1 // pred_region
      %74 = dma.done [#allocation5], 6144
    $region37: #{build_model_forward.1} parent=1 // pred_fallthru
      _
    // Predicated region
    $region38: #{build_model_forward.1} parent=1 // pred_check
      _
    $region39: #{build_model_forward.1} parent=1 // pred_check_branch
      %76 = sbr.rel (0) target = $region41
    $region40: #{build_model_forward.1} parent=1 // pred_region
      %77 = dma.done [#allocation5], 12288
    $region41: #{build_model_forward.1} parent=1 // pred_fallthru
      _
    // Predicated region
    $region42: #{build_model_forward.1} parent=1 // pred_check
      _
    $region43: #{build_model_forward.1} parent=1 // pred_check_branch
      %79 = sbr.rel (0) target = $region45
    $region44: #{build_model_forward.1} parent=1 // pred_region
      %80 = dma.done [#allocation8], 16384
    $region45: #{build_model_forward.1} parent=1 // pred_fallthru
      _
    %v82 = vld [vmem:[%s0] sm:$0xff]
    %v83 = vld [vmem:[%s0 + $0x8] sm:$0xff]
    %v84 = vld [vmem:[%s0 + $0x10] sm:$0xff]
    %v85 = vld [vmem:[%s0 + $0x18] sm:$0xff]
    %v86 = vld [vmem:[%s0 + $0x20] sm:$0xff]
    %v87 = vld [vmem:[%s0 + $0x28] sm:$0xff]
    %v88 = vld [vmem:[%s0 + $0x30] sm:$0xff]
    %v89 = vld [vmem:[%s0 + $0x38] sm:$0xff]
    %v90 = vld [vmem:[%s0 + $0x40] sm:$0xff]
    %v91 = vld [vmem:[%s0 + $0x48] sm:$0xff]
    %v92 = vpack.c.bf16 %v87, %v82
    %v93 = vpack.c.bf16 %v88, %v83
    %v94 = vpack.c.bf16 %v89, %v84
    %v95 = vpack.c.bf16 %v90, %v85
    %v96 = vpack.c.bf16 %v91, %v86
    %v97 = vld [vmem:[#allocation2] sm:$0xf]
    %v98 = vld [vmem:[#allocation2 + $0x4] sm:$0xf]
    %v99 = vld [vmem:[#allocation2 + $0x8] sm:$0xf]
    %v100 = vld [vmem:[#allocation2 + $0xc] sm:$0xf]
    %v101 = vld [vmem:[#allocation2 + $0x10] sm:$0xf]
    %v102 = vld [vmem:[#allocation2 + $0x14] sm:$0xf]
    %v103 = vld [vmem:[#allocation2 + $0x18] sm:$0xf]
    %v104 = vld [vmem:[#allocation2 + $0x1c] sm:$0xf]
    %v105 = vld [vmem:[#allocation2 + $0x20] sm:$0xf]
    %v106 = vld [vmem:[#allocation2 + $0x24] sm:$0xf]
    %v107 = vld [vmem:[#allocation2 + $0x28] sm:$0xf]
    %v108 = vld [vmem:[#allocation2 + $0x2c] sm:$0xf]
    %v109 = vld [vmem:[#allocation2 + $0x30] sm:$0xf]
    %v110 = vld [vmem:[#allocation2 + $0x34] sm:$0xf]
    %v111 = vld [vmem:[#allocation2 + $0x38] sm:$0xf]
    %v112 = vld [vmem:[#allocation2 + $0x3c] sm:$0xf]
    %v113 = vld [vmem:[#allocation2 + $0x40] sm:$0xf]
    %v114 = vld [vmem:[#allocation2 + $0x44] sm:$0xf]
    %v115 = vld [vmem:[#allocation2 + $0x48] sm:$0xf]
    %v116 = vld [vmem:[#allocation2 + $0x4c] sm:$0xf]
    %v117 = vld [vmem:[#allocation2 + $0x50] sm:$0xf]
    %v118 = vld [vmem:[#allocation2 + $0x54] sm:$0xf]
    %v119 = vld [vmem:[#allocation2 + $0x58] sm:$0xf]
    %v120 = vld [vmem:[#allocation2 + $0x5c] sm:$0xf]
    %v121 = vld [vmem:[#allocation2 + $0x60] sm:$0xf]
    %v122 = vld [vmem:[#allocation2 + $0x64] sm:$0xf]
    %v123 = vld [vmem:[#allocation2 + $0x68] sm:$0xf]
    %v124 = vld [vmem:[#allocation2 + $0x6c] sm:$0xf]
    %v125 = vld [vmem:[#allocation2 + $0x70] sm:$0xf]
    %v126 = vld [vmem:[#allocation2 + $0x74] sm:$0xf]
    %v127 = vld [vmem:[#allocation2 + $0x78] sm:$0xf]
    %v128 = vld [vmem:[#allocation2 + $0x7c] sm:$0xf]
    %v129 = vld [vmem:[%s6] sm:$0x1]
    %v131 = vlaneseq
    %v132 = vshrl.u32 %v131, 7
    %v133 = vsub.s32 0, %v132
    %v134 = vrot.slane %v129, %v133
    %v168 = vunpack.c.l.b16 %v97
    %v169 = vunpack.c.l.b16 %v98
    %v170 = vunpack.c.l.b16 %v99
    %v171 = vunpack.c.l.b16 %v100
    %v172 = vunpack.c.l.b16 %v101
    %v173 = vunpack.c.l.b16 %v102
    %v174 = vunpack.c.l.b16 %v103
    %v175 = vunpack.c.l.b16 %v104
    %v176 = vunpack.c.l.b16 %v105
    %v177 = vunpack.c.l.b16 %v106
    %v178 = vunpack.c.l.b16 %v107
    %v179 = vunpack.c.l.b16 %v108
    %v180 = vunpack.c.l.b16 %v109
    %v181 = vunpack.c.l.b16 %v110
    %v182 = vunpack.c.l.b16 %v111
    %v183 = vunpack.c.l.b16 %v112
    %v184 = vunpack.c.l.b16 %v113
    %v185 = vunpack.c.l.b16 %v114
    %v186 = vunpack.c.l.b16 %v115
    %v187 = vunpack.c.l.b16 %v116
    %v188 = vunpack.c.l.b16 %v117
    %v189 = vunpack.c.l.b16 %v118
    %v190 = vunpack.c.l.b16 %v119
    %v191 = vunpack.c.l.b16 %v120
    %v192 = vunpack.c.l.b16 %v121
    %v193 = vunpack.c.l.b16 %v122
    %v194 = vunpack.c.l.b16 %v123
    %v195 = vunpack.c.l.b16 %v124
    %v196 = vunpack.c.l.b16 %v125
    %v197 = vunpack.c.l.b16 %v126
    %v198 = vunpack.c.l.b16 %v127
    %v199 = vunpack.c.l.b16 %v128
    %v200 = vpack.c.b16 %v169, %v168
    %v201 = vpack.c.b16 %v171, %v170
    %v202 = vpack.c.b16 %v173, %v172
    %v203 = vpack.c.b16 %v175, %v174
    %v204 = vpack.c.b16 %v177, %v176
    %v205 = vpack.c.b16 %v179, %v178
    %v206 = vpack.c.b16 %v181, %v180
    %v207 = vpack.c.b16 %v183, %v182
    %v208 = vpack.c.b16 %v185, %v184
    %v209 = vpack.c.b16 %v187, %v186
    %v210 = vpack.c.b16 %v189, %v188
    %v211 = vpack.c.b16 %v191, %v190
    %v212 = vpack.c.b16 %v193, %v192
    %v213 = vpack.c.b16 %v195, %v194
    %v214 = vpack.c.b16 %v197, %v196
    %v215 = vpack.c.b16 %v199, %v198
    %232 = vmatprep.subr.bf16.mxu0 0
    %233 = vmatpush1.bf16.msra.mxu0 %v200
    %234 = vmatprep.subr.bf16.mxu0 0
    %235 = vmatpush1.bf16.msra.mxu0 %v201
    %236 = vmatprep.subr.bf16.mxu0 0
    %237 = vmatpush1.bf16.msra.mxu0 %v202
    %238 = vmatprep.subr.bf16.mxu0 0
    %239 = vmatpush1.bf16.msra.mxu0 %v203
    %240 = vmatprep.subr.bf16.mxu0 0
    %241 = vmatpush1.bf16.msra.mxu0 %v204
    %242 = vmatprep.subr.bf16.mxu0 0
    %243 = vmatpush1.bf16.msra.mxu0 %v205
    %244 = vmatprep.subr.bf16.mxu0 0
    %245 = vmatpush1.bf16.msra.mxu0 %v206
    %246 = vmatprep.subr.bf16.mxu0 0
    %247 = vmatpush1.bf16.msra.mxu0 %v207
    %248 = vmatprep.subr.bf16.mxu0 0
    %249 = vmatpush1.bf16.msra.mxu0 %v208
    %250 = vmatprep.subr.bf16.mxu0 0
    %251 = vmatpush1.bf16.msra.mxu0 %v209
    %252 = vmatprep.subr.bf16.mxu0 0
    %253 = vmatpush1.bf16.msra.mxu0 %v210
    %254 = vmatprep.subr.bf16.mxu0 0
    %255 = vmatpush1.bf16.msra.mxu0 %v211
    %256 = vmatprep.subr.bf16.mxu0 0
    %257 = vmatpush1.bf16.msra.mxu0 %v212
    %258 = vmatprep.subr.bf16.mxu0 0
    %259 = vmatpush1.bf16.msra.mxu0 %v213
    %260 = vmatprep.subr.bf16.mxu0 0
    %261 = vmatpush1.bf16.msra.mxu0 %v214
    %262 = vmatprep.subr.bf16.mxu0 0
    %263 = vmatpush1.bf16.msra.mxu0 %v215
    %264 = vmatprep.mubr.bf16.mxu0 %v93
    %265 = vmatmul.mubr.bf16.gmra.mrb[0].mxu0 %v92
    %v266 = vpop.f32.mrb[0].mxu0
    %v267 = vadd.f32 %v134, %v266
    %v268 = vpop.f32.mrb[0].mxu0
    %v269 = vpop.f32.mrb[0].mxu0
    %v270 = vadd.f32 %v134, %v269
    %v271 = vpop.f32.mrb[0].mxu0
    %272 = vdwg.mxu0
    %s273 = scalar_lea.vmem [#allocation2], 128
    %v274 = vld [vmem:[%s273] sm:$0xf]
    %v275 = vld [vmem:[%s273 + $0x4] sm:$0xf]
    %v276 = vld [vmem:[%s273 + $0x8] sm:$0xf]
    %v277 = vld [vmem:[%s273 + $0xc] sm:$0xf]
    %v278 = vld [vmem:[%s273 + $0x10] sm:$0xf]
    %v279 = vld [vmem:[%s273 + $0x14] sm:$0xf]
    %v280 = vld [vmem:[%s273 + $0x18] sm:$0xf]
    %v281 = vld [vmem:[%s273 + $0x1c] sm:$0xf]
    %v282 = vld [vmem:[%s273 + $0x20] sm:$0xf]
    %v283 = vld [vmem:[%s273 + $0x24] sm:$0xf]
    %v284 = vld [vmem:[%s273 + $0x28] sm:$0xf]
    %v285 = vld [vmem:[%s273 + $0x2c] sm:$0xf]
    %v286 = vld [vmem:[%s273 + $0x30] sm:$0xf]
    %v287 = vld [vmem:[%s273 + $0x34] sm:$0xf]
    %v288 = vld [vmem:[%s273 + $0x38] sm:$0xf]
    %v289 = vld [vmem:[%s273 + $0x3c] sm:$0xf]
    %v290 = vld [vmem:[%s273 + $0x40] sm:$0xf]
    %v291 = vld [vmem:[%s273 + $0x44] sm:$0xf]
    %v292 = vld [vmem:[%s273 + $0x48] sm:$0xf]
    %v293 = vld [vmem:[%s273 + $0x4c] sm:$0xf]
    %v294 = vld [vmem:[%s273 + $0x50] sm:$0xf]
    %v295 = vld [vmem:[%s273 + $0x54] sm:$0xf]
    %v296 = vld [vmem:[%s273 + $0x58] sm:$0xf]
    %v297 = vld [vmem:[%s273 + $0x5c] sm:$0xf]
    %v298 = vld [vmem:[%s273 + $0x60] sm:$0xf]
    %v299 = vld [vmem:[%s273 + $0x64] sm:$0xf]
    %v300 = vld [vmem:[%s273 + $0x68] sm:$0xf]
    %v301 = vld [vmem:[%s273 + $0x6c] sm:$0xf]
    %v302 = vld [vmem:[%s273 + $0x70] sm:$0xf]
    %v303 = vld [vmem:[%s273 + $0x74] sm:$0xf]
    %v304 = vld [vmem:[%s273 + $0x78] sm:$0xf]
    %v305 = vld [vmem:[%s273 + $0x7c] sm:$0xf]
    %v306 = vld [vmem:[%s6 + $0x1] sm:$0x1]
    %v308 = vlaneseq
    %v309 = vshrl.u32 %v308, 7
    %v310 = vsub.s32 0, %v309
    %v311 = vrot.slane %v306, %v310
    %v345 = vunpack.c.l.b16 %v274
    %v346 = vunpack.c.l.b16 %v275
    %v347 = vunpack.c.l.b16 %v276
    %v348 = vunpack.c.l.b16 %v277
    %v349 = vunpack.c.l.b16 %v278
    %v350 = vunpack.c.l.b16 %v279
    %v351 = vunpack.c.l.b16 %v280
    %v352 = vunpack.c.l.b16 %v281
    %v353 = vunpack.c.l.b16 %v282
    %v354 = vunpack.c.l.b16 %v283
    %v355 = vunpack.c.l.b16 %v284
    %v356 = vunpack.c.l.b16 %v285
    %v357 = vunpack.c.l.b16 %v286
    %v358 = vunpack.c.l.b16 %v287
    %v359 = vunpack.c.l.b16 %v288
    %v360 = vunpack.c.l.b16 %v289
    %v361 = vunpack.c.l.b16 %v290
    %v362 = vunpack.c.l.b16 %v291
    %v363 = vunpack.c.l.b16 %v292
    %v364 = vunpack.c.l.b16 %v293
    %v365 = vunpack.c.l.b16 %v294
    %v366 = vunpack.c.l.b16 %v295
    %v367 = vunpack.c.l.b16 %v296
    %v368 = vunpack.c.l.b16 %v297
    %v369 = vunpack.c.l.b16 %v298
    %v370 = vunpack.c.l.b16 %v299
    %v371 = vunpack.c.l.b16 %v300
    %v372 = vunpack.c.l.b16 %v301
    %v373 = vunpack.c.l.b16 %v302
    %v374 = vunpack.c.l.b16 %v303
    %v375 = vunpack.c.l.b16 %v304
    %v376 = vunpack.c.l.b16 %v305
    %v377 = vpack.c.b16 %v346, %v345
    %v378 = vpack.c.b16 %v348, %v347
    %v379 = vpack.c.b16 %v350, %v349
    %v380 = vpack.c.b16 %v352, %v351
    %v381 = vpack.c.b16 %v354, %v353
    %v382 = vpack.c.b16 %v356, %v355
    %v383 = vpack.c.b16 %v358, %v357
    %v384 = vpack.c.b16 %v360, %v359
    %v385 = vpack.c.b16 %v362, %v361
    %v386 = vpack.c.b16 %v364, %v363
    %v387 = vpack.c.b16 %v366, %v365
    %v388 = vpack.c.b16 %v368, %v367
    %v389 = vpack.c.b16 %v370, %v369
    %v390 = vpack.c.b16 %v372, %v371
    %v391 = vpack.c.b16 %v374, %v373
    %v392 = vpack.c.b16 %v376, %v375
    %409 = vmatprep.subr.bf16.mxu0 0
    %410 = vmatpush1.bf16.msra.mxu0 %v377
    %411 = vmatprep.subr.bf16.mxu0 0
    %412 = vmatpush1.bf16.msra.mxu0 %v378
    %413 = vmatprep.subr.bf16.mxu0 0
    %414 = vmatpush1.bf16.msra.mxu0 %v379
    %415 = vmatprep.subr.bf16.mxu0 0
    %416 = vmatpush1.bf16.msra.mxu0 %v380
    %417 = vmatprep.subr.bf16.mxu0 0
    %418 = vmatpush1.bf16.msra.mxu0 %v381
    %419 = vmatprep.subr.bf16.mxu0 0
    %420 = vmatpush1.bf16.msra.mxu0 %v382
    %421 = vmatprep.subr.bf16.mxu0 0
    %422 = vmatpush1.bf16.msra.mxu0 %v383
    %423 = vmatprep.subr.bf16.mxu0 0
    %424 = vmatpush1.bf16.msra.mxu0 %v384
    %425 = vmatprep.subr.bf16.mxu0 0
    %426 = vmatpush1.bf16.msra.mxu0 %v385
    %427 = vmatprep.subr.bf16.mxu0 0
    %428 = vmatpush1.bf16.msra.mxu0 %v386
    %429 = vmatprep.subr.bf16.mxu0 0
    %430 = vmatpush1.bf16.msra.mxu0 %v387
    %431 = vmatprep.subr.bf16.mxu0 0
    %432 = vmatpush1.bf16.msra.mxu0 %v388
    %433 = vmatprep.subr.bf16.mxu0 0
    %434 = vmatpush1.bf16.msra.mxu0 %v389
    %435 = vmatprep.subr.bf16.mxu0 0
    %436 = vmatpush1.bf16.msra.mxu0 %v390
    %437 = vmatprep.subr.bf16.mxu0 0
    %438 = vmatpush1.bf16.msra.mxu0 %v391
    %439 = vmatprep.subr.bf16.mxu0 0
    %440 = vmatpush1.bf16.msra.mxu0 %v392
    %441 = vmatprep.mubr.bf16.mxu0 %v95
    %442 = vmatmul.mubr.bf16.gmra.mrb[0].mxu0 %v94
    %v443 = vpop.f32.mrb[0].mxu0
    %v444 = vadd.f32 %v311, %v443
    %v445 = vpop.f32.mrb[0].mxu0
    %v446 = vpop.f32.mrb[0].mxu0
    %v447 = vadd.f32 %v311, %v446
    %v448 = vpop.f32.mrb[0].mxu0
    %449 = vdwg.mxu0
    %v450 = vpack.c.bf16 %v270, %v267
    %v451 = vld [vmem:[#allocation4] sm:$0xff]
    %v452 = vld [vmem:[#allocation4 + $0x8] sm:$0xff]
    %v453 = vld [vmem:[#allocation4 + $0x10] sm:$0xff]
    %v454 = vld [vmem:[#allocation4 + $0x18] sm:$0xff]
    %v455 = vld [vmem:[#allocation4 + $0x20] sm:$0xff]
    %v456 = vld [vmem:[#allocation4 + $0x28] sm:$0xff]
    %v457 = vld [vmem:[#allocation4 + $0x30] sm:$0xff]
    %v458 = vld [vmem:[#allocation4 + $0x38] sm:$0xff]
    %v459 = vld [vmem:[#allocation4 + $0x40] sm:$0xff]
    %v460 = vld [vmem:[#allocation4 + $0x48] sm:$0xff]
    %v461 = vld [vmem:[#allocation4 + $0x50] sm:$0xff]
    %v462 = vld [vmem:[#allocation4 + $0x58] sm:$0xff]
    %v463 = vld [vmem:[#allocation4 + $0x60] sm:$0xff]
    %v464 = vld [vmem:[#allocation4 + $0x68] sm:$0xff]
    %v465 = vld [vmem:[#allocation4 + $0x70] sm:$0xff]
    %v466 = vld [vmem:[#allocation4 + $0x78] sm:$0xff]
    %v467 = vld [vmem:[%s6 + $0x2] sm:$0x3]
    %v469 = vlaneseq
    %v470 = vshrl.u32 %v469, 7
    %v471 = vsub.s32 0, %v470
    %v472 = vrot.slane %v467, %v471
    %v473 = vlaneseq
    %v474 = vshrl.u32 %v473, 7
    %v475 = vsub.s32 1, %v474
    %v476 = vrot.slane %v467, %v475
    %v495 = vunpack.c.l.b16 %v451
    %v496 = vunpack.c.h.b16 %v451
    %v497 = vunpack.c.l.b16 %v452
    %v498 = vunpack.c.h.b16 %v452
    %v499 = vunpack.c.l.b16 %v453
    %v500 = vunpack.c.h.b16 %v453
    %v501 = vunpack.c.l.b16 %v454
    %v502 = vunpack.c.h.b16 %v454
    %v503 = vunpack.c.l.b16 %v455
    %v504 = vunpack.c.h.b16 %v455
    %v505 = vunpack.c.l.b16 %v456
    %v506 = vunpack.c.h.b16 %v456
    %v507 = vunpack.c.l.b16 %v457
    %v508 = vunpack.c.h.b16 %v457
    %v509 = vunpack.c.l.b16 %v458
    %v510 = vunpack.c.h.b16 %v458
    %v511 = vunpack.c.l.b16 %v459
    %v512 = vunpack.c.h.b16 %v459
    %v513 = vunpack.c.l.b16 %v460
    %v514 = vunpack.c.h.b16 %v460
    %v515 = vunpack.c.l.b16 %v461
    %v516 = vunpack.c.h.b16 %v461
    %v517 = vunpack.c.l.b16 %v462
    %v518 = vunpack.c.h.b16 %v462
    %v519 = vunpack.c.l.b16 %v463
    %v520 = vunpack.c.h.b16 %v463
    %v521 = vunpack.c.l.b16 %v464
    %v522 = vunpack.c.h.b16 %v464
    %v523 = vunpack.c.l.b16 %v465
    %v524 = vunpack.c.h.b16 %v465
    %v525 = vunpack.c.l.b16 %v466
    %v526 = vunpack.c.h.b16 %v466
    %v527 = vpack.c.b16 %v497, %v495
    %v528 = vpack.c.b16 %v498, %v496
    %v529 = vpack.c.b16 %v501, %v499
    %v530 = vpack.c.b16 %v502, %v500
    %v531 = vpack.c.b16 %v505, %v503
    %v532 = vpack.c.b16 %v506, %v504
    %v533 = vpack.c.b16 %v509, %v507
    %v534 = vpack.c.b16 %v510, %v508
    %v535 = vpack.c.b16 %v513, %v511
    %v536 = vpack.c.b16 %v514, %v512
    %v537 = vpack.c.b16 %v517, %v515
    %v538 = vpack.c.b16 %v518, %v516
    %v539 = vpack.c.b16 %v521, %v519
    %v540 = vpack.c.b16 %v522, %v520
    %v541 = vpack.c.b16 %v525, %v523
    %v542 = vpack.c.b16 %v526, %v524
    %559 = vmatprep.subr.bf16.mxu0 %v528
    %560 = vmatpush1.bf16.msra.mxu0 %v527
    %561 = vmatprep.subr.bf16.mxu0 %v530
    %562 = vmatpush1.bf16.msra.mxu0 %v529
    %563 = vmatprep.subr.bf16.mxu0 %v532
    %564 = vmatpush1.bf16.msra.mxu0 %v531
    %565 = vmatprep.subr.bf16.mxu0 %v534
    %566 = vmatpush1.bf16.msra.mxu0 %v533
    %567 = vmatprep.subr.bf16.mxu0 %v536
    %568 = vmatpush1.bf16.msra.mxu0 %v535
    %569 = vmatprep.subr.bf16.mxu0 %v538
    %570 = vmatpush1.bf16.msra.mxu0 %v537
    %571 = vmatprep.subr.bf16.mxu0 %v540
    %572 = vmatpush1.bf16.msra.mxu0 %v539
    %573 = vmatprep.subr.bf16.mxu0 %v542
    %574 = vmatpush1.bf16.msra.mxu0 %v541
    %575 = vmatprep.subr.bf16.mxu0 0
    %576 = vmatpush1.bf16.msra.mxu0 0
    %577 = vmatprep.subr.bf16.mxu0 0
    %578 = vmatpush1.bf16.msra.mxu0 0
    %579 = vmatprep.subr.bf16.mxu0 0
    %580 = vmatpush1.bf16.msra.mxu0 0
    %581 = vmatprep.subr.bf16.mxu0 0
    %582 = vmatpush1.bf16.msra.mxu0 0
    %583 = vmatprep.subr.bf16.mxu0 0
    %584 = vmatpush1.bf16.msra.mxu0 0
    %585 = vmatprep.subr.bf16.mxu0 0
    %586 = vmatpush1.bf16.msra.mxu0 0
    %587 = vmatprep.subr.bf16.mxu0 0
    %588 = vmatpush1.bf16.msra.mxu0 0
    %589 = vmatprep.subr.bf16.mxu0 0
    %590 = vmatpush1.bf16.msra.mxu0 0
    %591 = vmatprep.mubr.bf16.mxu0 0
    %592 = vmatmul.mubr.bf16.gmra.mrb[0].mxu0 %v450
    %v593 = vpop.f32.mrb[0].mxu0
    %v594 = vadd.f32 %v472, %v593
    %v595 = vpop.f32.mrb[0].mxu0
    %v596 = vadd.f32 %v476, %v595
    %v597 = vpop.f32.mrb[0].mxu0
    %v598 = vadd.f32 %v472, %v597
    %v599 = vpop.f32.mrb[0].mxu0
    %v600 = vadd.f32 %v476, %v599
    %601 = vdwg.mxu0
    %v602 = vpack.c.bf16 %v447, %v444
    %s603 = scalar_lea.vmem [#allocation4], 128
    %v604 = vld [vmem:[%s603] sm:$0xff]
    %v605 = vld [vmem:[%s603 + $0x8] sm:$0xff]
    %v606 = vld [vmem:[%s603 + $0x10] sm:$0xff]
    %v607 = vld [vmem:[%s603 + $0x18] sm:$0xff]
    %v608 = vld [vmem:[%s603 + $0x20] sm:$0xff]
    %v609 = vld [vmem:[%s603 + $0x28] sm:$0xff]
    %v610 = vld [vmem:[%s603 + $0x30] sm:$0xff]
    %v611 = vld [vmem:[%s603 + $0x38] sm:$0xff]
    %v612 = vld [vmem:[%s603 + $0x40] sm:$0xff]
    %v613 = vld [vmem:[%s603 + $0x48] sm:$0xff]
    %v614 = vld [vmem:[%s603 + $0x50] sm:$0xff]
    %v615 = vld [vmem:[%s603 + $0x58] sm:$0xff]
    %v616 = vld [vmem:[%s603 + $0x60] sm:$0xff]
    %v617 = vld [vmem:[%s603 + $0x68] sm:$0xff]
    %v618 = vld [vmem:[%s603 + $0x70] sm:$0xff]
    %v619 = vld [vmem:[%s603 + $0x78] sm:$0xff]
    %v620 = vld [vmem:[%s6 + $0x4] sm:$0x3]
    %v622 = vlaneseq
    %v623 = vshrl.u32 %v622, 7
    %v624 = vsub.s32 0, %v623
    %v625 = vrot.slane %v620, %v624
    %v626 = vlaneseq
    %v627 = vshrl.u32 %v626, 7
    %v628 = vsub.s32 1, %v627
    %v629 = vrot.slane %v620, %v628
    %v648 = vunpack.c.l.b16 %v604
    %v649 = vunpack.c.h.b16 %v604
    %v650 = vunpack.c.l.b16 %v605
    %v651 = vunpack.c.h.b16 %v605
    %v652 = vunpack.c.l.b16 %v606
    %v653 = vunpack.c.h.b16 %v606
    %v654 = vunpack.c.l.b16 %v607
    %v655 = vunpack.c.h.b16 %v607
    %v656 = vunpack.c.l.b16 %v608
    %v657 = vunpack.c.h.b16 %v608
    %v658 = vunpack.c.l.b16 %v609
    %v659 = vunpack.c.h.b16 %v609
    %v660 = vunpack.c.l.b16 %v610
    %v661 = vunpack.c.h.b16 %v610
    %v662 = vunpack.c.l.b16 %v611
    %v663 = vunpack.c.h.b16 %v611
    %v664 = vunpack.c.l.b16 %v612
    %v665 = vunpack.c.h.b16 %v612
    %v666 = vunpack.c.l.b16 %v613
    %v667 = vunpack.c.h.b16 %v613
    %v668 = vunpack.c.l.b16 %v614
    %v669 = vunpack.c.h.b16 %v614
    %v670 = vunpack.c.l.b16 %v615
    %v671 = vunpack.c.h.b16 %v615
    %v672 = vunpack.c.l.b16 %v616
    %v673 = vunpack.c.h.b16 %v616
    %v674 = vunpack.c.l.b16 %v617
    %v675 = vunpack.c.h.b16 %v617
    %v676 = vunpack.c.l.b16 %v618
    %v677 = vunpack.c.h.b16 %v618
    %v678 = vunpack.c.l.b16 %v619
    %v679 = vunpack.c.h.b16 %v619
    %v680 = vpack.c.b16 %v650, %v648
    %v681 = vpack.c.b16 %v651, %v649
    %v682 = vpack.c.b16 %v654, %v652
    %v683 = vpack.c.b16 %v655, %v653
    %v684 = vpack.c.b16 %v658, %v656
    %v685 = vpack.c.b16 %v659, %v657
    %v686 = vpack.c.b16 %v662, %v660
    %v687 = vpack.c.b16 %v663, %v661
    %v688 = vpack.c.b16 %v666, %v664
    %v689 = vpack.c.b16 %v667, %v665
    %v690 = vpack.c.b16 %v670, %v668
    %v691 = vpack.c.b16 %v671, %v669
    %v692 = vpack.c.b16 %v674, %v672
    %v693 = vpack.c.b16 %v675, %v673
    %v694 = vpack.c.b16 %v678, %v676
    %v695 = vpack.c.b16 %v679, %v677
    %712 = vmatprep.subr.bf16.mxu0 %v681
    %713 = vmatpush1.bf16.msra.mxu0 %v680
    %714 = vmatprep.subr.bf16.mxu0 %v683
    %715 = vmatpush1.bf16.msra.mxu0 %v682
    %716 = vmatprep.subr.bf16.mxu0 %v685
    %717 = vmatpush1.bf16.msra.mxu0 %v684
    %718 = vmatprep.subr.bf16.mxu0 %v687
    %719 = vmatpush1.bf16.msra.mxu0 %v686
    %720 = vmatprep.subr.bf16.mxu0 %v689
    %721 = vmatpush1.bf16.msra.mxu0 %v688
    %722 = vmatprep.subr.bf16.mxu0 %v691
    %723 = vmatpush1.bf16.msra.mxu0 %v690
    %724 = vmatprep.subr.bf16.mxu0 %v693
    %725 = vmatpush1.bf16.msra.mxu0 %v692
    %726 = vmatprep.subr.bf16.mxu0 %v695
    %727 = vmatpush1.bf16.msra.mxu0 %v694
    %728 = vmatprep.subr.bf16.mxu0 0
    %729 = vmatpush1.bf16.msra.mxu0 0
    %730 = vmatprep.subr.bf16.mxu0 0
    %731 = vmatpush1.bf16.msra.mxu0 0
    %732 = vmatprep.subr.bf16.mxu0 0
    %733 = vmatpush1.bf16.msra.mxu0 0
    %734 = vmatprep.subr.bf16.mxu0 0
    %735 = vmatpush1.bf16.msra.mxu0 0
    %736 = vmatprep.subr.bf16.mxu0 0
    %737 = vmatpush1.bf16.msra.mxu0 0
    %738 = vmatprep.subr.bf16.mxu0 0
    %739 = vmatpush1.bf16.msra.mxu0 0
    %740 = vmatprep.subr.bf16.mxu0 0
    %741 = vmatpush1.bf16.msra.mxu0 0
    %742 = vmatprep.subr.bf16.mxu0 0
    %743 = vmatpush1.bf16.msra.mxu0 0
    %744 = vmatprep.mubr.bf16.mxu0 0
    %745 = vmatmul.mubr.bf16.gmra.mrb[0].mxu0 %v602
    %v746 = vpop.f32.mrb[0].mxu0
    %v747 = vadd.f32 %v625, %v746
    %v748 = vpop.f32.mrb[0].mxu0
    %v749 = vadd.f32 %v629, %v748
    %v750 = vpop.f32.mrb[0].mxu0
    %v751 = vadd.f32 %v625, %v750
    %v752 = vpop.f32.mrb[0].mxu0
    %v753 = vadd.f32 %v629, %v752
    %754 = vdwg.mxu0
    %v755 = vld [vmem:[%s3] sm:$0xf]
    %v756 = vld [vmem:[%s3 + $0x4] sm:$0xf]
    %v757 = vld [vmem:[%s3 + $0x8] sm:$0xf]
    %v758 = vld [vmem:[%s3 + $0xc] sm:$0xf]
    %v759 = vld [vmem:[%s3 + $0x10] sm:$0xf]
    %v760 = vld [vmem:[%s3 + $0x14] sm:$0xf]
    %v761 = vld [vmem:[%s3 + $0x18] sm:$0xf]
    %v762 = vld [vmem:[%s3 + $0x1c] sm:$0xf]
    %v763 = vld [vmem:[%s3 + $0x20] sm:$0xf]
    %v764 = vld [vmem:[%s3 + $0x24] sm:$0xf]
    %v765 = vld [vmem:[%s3 + $0x28] sm:$0xf]
    %v766 = vld [vmem:[%s3 + $0x2c] sm:$0xf]
    %v767 = vld [vmem:[%s3 + $0x30] sm:$0xf]
    %v768 = vld [vmem:[%s3 + $0x34] sm:$0xf]
    %v769 = vld [vmem:[%s3 + $0x38] sm:$0xf]
    %v770 = vld [vmem:[%s3 + $0x3c] sm:$0xf]
    %v771 = vld [vmem:[%s6 + $0x6] sm:$0x1]
    %v773 = vlaneseq
    %v774 = vshrl.u32 %v773, 7
    %v775 = vsub.s32 0, %v774
    %v776 = vrot.slane %v771, %v775
    %v794 = vunpack.c.l.b16 %v755
    %v795 = vunpack.c.l.b16 %v756
    %v796 = vunpack.c.l.b16 %v757
    %v797 = vunpack.c.l.b16 %v758
    %v798 = vunpack.c.l.b16 %v759
    %v799 = vunpack.c.l.b16 %v760
    %v800 = vunpack.c.l.b16 %v761
    %v801 = vunpack.c.l.b16 %v762
    %v802 = vunpack.c.l.b16 %v763
    %v803 = vunpack.c.l.b16 %v764
    %v804 = vunpack.c.l.b16 %v765
    %v805 = vunpack.c.l.b16 %v766
    %v806 = vunpack.c.l.b16 %v767
    %v807 = vunpack.c.l.b16 %v768
    %v808 = vunpack.c.l.b16 %v769
    %v809 = vunpack.c.l.b16 %v770
    %v810 = vpack.c.b16 %v795, %v794
    %v811 = vpack.c.b16 %v797, %v796
    %v812 = vpack.c.b16 %v799, %v798
    %v813 = vpack.c.b16 %v801, %v800
    %v814 = vpack.c.b16 %v803, %v802
    %v815 = vpack.c.b16 %v805, %v804
    %v816 = vpack.c.b16 %v807, %v806
    %v817 = vpack.c.b16 %v809, %v808
    %826 = vmatprep.subr.bf16.mxu0 0
    %827 = vmatpush1.bf16.msra.mxu0 %v810
    %828 = vmatprep.subr.bf16.mxu0 0
    %829 = vmatpush1.bf16.msra.mxu0 %v811
    %830 = vmatprep.subr.bf16.mxu0 0
    %831 = vmatpush1.bf16.msra.mxu0 %v812
    %832 = vmatprep.subr.bf16.mxu0 0
    %833 = vmatpush1.bf16.msra.mxu0 %v813
    %834 = vmatprep.subr.bf16.mxu0 0
    %835 = vmatpush1.bf16.msra.mxu0 %v814
    %836 = vmatprep.subr.bf16.mxu0 0
    %837 = vmatpush1.bf16.msra.mxu0 %v815
    %838 = vmatprep.subr.bf16.mxu0 0
    %839 = vmatpush1.bf16.msra.mxu0 %v816
    %840 = vmatprep.subr.bf16.mxu0 0
    %841 = vmatpush1.bf16.msra.mxu0 %v817
    %842 = vmatprep.subr.bf16.mxu0 0
    %843 = vmatpush1.bf16.msra.mxu0 0
    %844 = vmatprep.subr.bf16.mxu0 0
    %845 = vmatpush1.bf16.msra.mxu0 0
    %846 = vmatprep.subr.bf16.mxu0 0
    %847 = vmatpush1.bf16.msra.mxu0 0
    %848 = vmatprep.subr.bf16.mxu0 0
    %849 = vmatpush1.bf16.msra.mxu0 0
    %850 = vmatprep.subr.bf16.mxu0 0
    %851 = vmatpush1.bf16.msra.mxu0 0
    %852 = vmatprep.subr.bf16.mxu0 0
    %853 = vmatpush1.bf16.msra.mxu0 0
    %854 = vmatprep.subr.bf16.mxu0 0
    %855 = vmatpush1.bf16.msra.mxu0 0
    %856 = vmatprep.subr.bf16.mxu0 0
    %857 = vmatpush1.bf16.msra.mxu0 0
    %858 = vmatprep.mubr.bf16.mxu0 0
    %859 = vmatmul.mubr.bf16.gmra.mrb[0].mxu0 %v96
    %v860 = vpop.f32.mrb[0].mxu0
    %v861 = vadd.f32 %v776, %v860
    %v862 = vpop.f32.mrb[0].mxu0
    %v863 = vpop.f32.mrb[0].mxu0
    %v864 = vadd.f32 %v776, %v863
    %v865 = vpop.f32.mrb[0].mxu0
    %866 = vdwg.mxu0
    %vm867 = vcmp.gt.f32.partialorder %v861, 0.0
    %vm868 = vcmp.gt.f32.partialorder %v864, 0.0
    %v869 = vmul.f32 %v861, 1.442695
    %v870 = vpow.pop %v869
    %v871 = vmul.f32 %v864, 1.442695
    %v872 = vpow.pop %v871
    %v873 = vsub.f32 %v870, 1.0
    %v874 = vsub.f32 %v872, 1.0
    %v875 = vmul.f32 %v873, 1.6732632
    %v876 = vmul.f32 %v874, 1.6732632
    %v877 = vsel %vm867, %v861, %v875
    %v878 = vsel %vm868, %v864, %v876
    %v879 = vmul.f32 %v877, 1.050701
    %v880 = vmul.f32 %v878, 1.050701
    %v881 = vpack.c.bf16 %v880, %v879
    %s882 = scalar_lea.vmem [#allocation4], 256
    %v883 = vld [vmem:[%s882] sm:$0xff]
    %v884 = vld [vmem:[%s882 + $0x8] sm:$0xff]
    %v885 = vld [vmem:[%s882 + $0x10] sm:$0xff]
    %v886 = vld [vmem:[%s882 + $0x18] sm:$0xff]
    %v887 = vld [vmem:[%s882 + $0x20] sm:$0xff]
    %v888 = vld [vmem:[%s882 + $0x28] sm:$0xff]
    %v889 = vld [vmem:[%s882 + $0x30] sm:$0xff]
    %v890 = vld [vmem:[%s882 + $0x38] sm:$0xff]
    %v891 = vld [vmem:[%s882 + $0x40] sm:$0xff]
    %v892 = vld [vmem:[%s882 + $0x48] sm:$0xff]
    %v893 = vld [vmem:[%s882 + $0x50] sm:$0xff]
    %v894 = vld [vmem:[%s882 + $0x58] sm:$0xff]
    %v895 = vld [vmem:[%s882 + $0x60] sm:$0xff]
    %v896 = vld [vmem:[%s882 + $0x68] sm:$0xff]
    %v897 = vld [vmem:[%s882 + $0x70] sm:$0xff]
    %v898 = vld [vmem:[%s882 + $0x78] sm:$0xff]
    %v899 = vld [vmem:[%s6 + $0x7] sm:$0x3]
    %v901 = vlaneseq
    %v902 = vshrl.u32 %v901, 7
    %v903 = vsub.s32 0, %v902
    %v904 = vrot.slane %v899, %v903
    %v905 = vlaneseq
    %v906 = vshrl.u32 %v905, 7
    %v907 = vsub.s32 1, %v906
    %v908 = vrot.slane %v899, %v907
    %v927 = vunpack.c.l.b16 %v883
    %v928 = vunpack.c.h.b16 %v883
    %v929 = vunpack.c.l.b16 %v884
    %v930 = vunpack.c.h.b16 %v884
    %v931 = vunpack.c.l.b16 %v885
    %v932 = vunpack.c.h.b16 %v885
    %v933 = vunpack.c.l.b16 %v886
    %v934 = vunpack.c.h.b16 %v886
    %v935 = vunpack.c.l.b16 %v887
    %v936 = vunpack.c.h.b16 %v887
    %v937 = vunpack.c.l.b16 %v888
    %v938 = vunpack.c.h.b16 %v888
    %v939 = vunpack.c.l.b16 %v889
    %v940 = vunpack.c.h.b16 %v889
    %v941 = vunpack.c.l.b16 %v890
    %v942 = vunpack.c.h.b16 %v890
    %v943 = vunpack.c.l.b16 %v891
    %v944 = vunpack.c.h.b16 %v891
    %v945 = vunpack.c.l.b16 %v892
    %v946 = vunpack.c.h.b16 %v892
    %v947 = vunpack.c.l.b16 %v893
    %v948 = vunpack.c.h.b16 %v893
    %v949 = vunpack.c.l.b16 %v894
    %v950 = vunpack.c.h.b16 %v894
    %v951 = vunpack.c.l.b16 %v895
    %v952 = vunpack.c.h.b16 %v895
    %v953 = vunpack.c.l.b16 %v896
    %v954 = vunpack.c.h.b16 %v896
    %v955 = vunpack.c.l.b16 %v897
    %v956 = vunpack.c.h.b16 %v897
    %v957 = vunpack.c.l.b16 %v898
    %v958 = vunpack.c.h.b16 %v898
    %v959 = vpack.c.b16 %v929, %v927
    %v960 = vpack.c.b16 %v930, %v928
    %v961 = vpack.c.b16 %v933, %v931
    %v962 = vpack.c.b16 %v934, %v932
    %v963 = vpack.c.b16 %v937, %v935
    %v964 = vpack.c.b16 %v938, %v936
    %v965 = vpack.c.b16 %v941, %v939
    %v966 = vpack.c.b16 %v942, %v940
    %v967 = vpack.c.b16 %v945, %v943
    %v968 = vpack.c.b16 %v946, %v944
    %v969 = vpack.c.b16 %v949, %v947
    %v970 = vpack.c.b16 %v950, %v948
    %v971 = vpack.c.b16 %v953, %v951
    %v972 = vpack.c.b16 %v954, %v952
    %v973 = vpack.c.b16 %v957, %v955
    %v974 = vpack.c.b16 %v958, %v956
    %991 = vmatprep.subr.bf16.mxu0 %v960
    %992 = vmatpush1.bf16.msra.mxu0 %v959
    %993 = vmatprep.subr.bf16.mxu0 %v962
    %994 = vmatpush1.bf16.msra.mxu0 %v961
    %995 = vmatprep.subr.bf16.mxu0 %v964
    %996 = vmatpush1.bf16.msra.mxu0 %v963
    %997 = vmatprep.subr.bf16.mxu0 %v966
    %998 = vmatpush1.bf16.msra.mxu0 %v965
    %999 = vmatprep.subr.bf16.mxu0 %v968
    %1000 = vmatpush1.bf16.msra.mxu0 %v967
    %1001 = vmatprep.subr.bf16.mxu0 %v970
    %1002 = vmatpush1.bf16.msra.mxu0 %v969
    %1003 = vmatprep.subr.bf16.mxu0 %v972
    %1004 = vmatpush1.bf16.msra.mxu0 %v971
    %1005 = vmatprep.subr.bf16.mxu0 %v974
    %1006 = vmatpush1.bf16.msra.mxu0 %v973
    %1007 = vmatprep.subr.bf16.mxu0 0
    %1008 = vmatpush1.bf16.msra.mxu0 0
    %1009 = vmatprep.subr.bf16.mxu0 0
    %1010 = vmatpush1.bf16.msra.mxu0 0
    %1011 = vmatprep.subr.bf16.mxu0 0
    %1012 = vmatpush1.bf16.msra.mxu0 0
    %1013 = vmatprep.subr.bf16.mxu0 0
    %1014 = vmatpush1.bf16.msra.mxu0 0
    %1015 = vmatprep.subr.bf16.mxu0 0
    %1016 = vmatpush1.bf16.msra.mxu0 0
    %1017 = vmatprep.subr.bf16.mxu0 0
    %1018 = vmatpush1.bf16.msra.mxu0 0
    %1019 = vmatprep.subr.bf16.mxu0 0
    %1020 = vmatpush1.bf16.msra.mxu0 0
    %1021 = vmatprep.subr.bf16.mxu0 0
    %1022 = vmatpush1.bf16.msra.mxu0 0
    %1023 = vmatprep.mubr.bf16.mxu0 0
    %1024 = vmatmul.mubr.bf16.gmra.mrb[0].mxu0 %v881
    %v1025 = vpop.f32.mrb[0].mxu0
    %v1026 = vadd.f32 %v904, %v1025
    %v1027 = vpop.f32.mrb[0].mxu0
    %v1028 = vadd.f32 %v908, %v1027
    %v1029 = vpop.f32.mrb[0].mxu0
    %v1030 = vadd.f32 %v904, %v1029
    %v1031 = vpop.f32.mrb[0].mxu0
    %v1032 = vadd.f32 %v908, %v1031
    %1033 = vdwg.mxu0
    %v1034 = vpack.c.bf16 %v751, %v747
    %v1035 = vpack.c.bf16 %v600, %v596
    %v1036 = vpack.c.bf16 %v598, %v594
    %v1037 = vpack.c.bf16 %v753, %v749
    %v1038 = vpack.c.bf16 %v1030, %v1026
    %v1039 = vpack.c.bf16 %v1032, %v1028
    %s1040 = scalar_lea.vmem [#allocation2], 256
    %v1041 = vld [vmem:[%s1040] sm:$0xf]
    %v1042 = vld [vmem:[%s1040 + $0x4] sm:$0xf]
    %v1043 = vld [vmem:[%s1040 + $0x8] sm:$0xf]
    %v1044 = vld [vmem:[%s1040 + $0xc] sm:$0xf]
    %v1045 = vld [vmem:[%s1040 + $0x10] sm:$0xf]
    %v1046 = vld [vmem:[%s1040 + $0x14] sm:$0xf]
    %v1047 = vld [vmem:[%s1040 + $0x18] sm:$0xf]
    %v1048 = vld [vmem:[%s1040 + $0x1c] sm:$0xf]
    %v1049 = vld [vmem:[%s1040 + $0x20] sm:$0xf]
    %v1050 = vld [vmem:[%s1040 + $0x24] sm:$0xf]
    %v1051 = vld [vmem:[%s1040 + $0x28] sm:$0xf]
    %v1052 = vld [vmem:[%s1040 + $0x2c] sm:$0xf]
    %v1053 = vld [vmem:[%s1040 + $0x30] sm:$0xf]
    %v1054 = vld [vmem:[%s1040 + $0x34] sm:$0xf]
    %v1055 = vld [vmem:[%s1040 + $0x38] sm:$0xf]
    %v1056 = vld [vmem:[%s1040 + $0x3c] sm:$0xf]
    %v1057 = vld [vmem:[%s1040 + $0x40] sm:$0xf]
    %v1058 = vld [vmem:[%s1040 + $0x44] sm:$0xf]
    %v1059 = vld [vmem:[%s1040 + $0x48] sm:$0xf]
    %v1060 = vld [vmem:[%s1040 + $0x4c] sm:$0xf]
    %v1061 = vld [vmem:[%s1040 + $0x50] sm:$0xf]
    %v1062 = vld [vmem:[%s1040 + $0x54] sm:$0xf]
    %v1063 = vld [vmem:[%s1040 + $0x58] sm:$0xf]
    %v1064 = vld [vmem:[%s1040 + $0x5c] sm:$0xf]
    %v1065 = vld [vmem:[%s1040 + $0x60] sm:$0xf]
    %v1066 = vld [vmem:[%s1040 + $0x64] sm:$0xf]
    %v1067 = vld [vmem:[%s1040 + $0x68] sm:$0xf]
    %v1068 = vld [vmem:[%s1040 + $0x6c] sm:$0xf]
    %v1069 = vld [vmem:[%s1040 + $0x70] sm:$0xf]
    %v1070 = vld [vmem:[%s1040 + $0x74] sm:$0xf]
    %v1071 = vld [vmem:[%s1040 + $0x78] sm:$0xf]
    %v1072 = vld [vmem:[%s1040 + $0x7c] sm:$0xf]
    %v1105 = vunpack.c.l.b16 %v1041
    %v1106 = vunpack.c.l.b16 %v1042
    %v1107 = vunpack.c.l.b16 %v1043
    %v1108 = vunpack.c.l.b16 %v1044
    %v1109 = vunpack.c.l.b16 %v1045
    %v1110 = vunpack.c.l.b16 %v1046
    %v1111 = vunpack.c.l.b16 %v1047
    %v1112 = vunpack.c.l.b16 %v1048
    %v1113 = vunpack.c.l.b16 %v1049
    %v1114 = vunpack.c.l.b16 %v1050
    %v1115 = vunpack.c.l.b16 %v1051
    %v1116 = vunpack.c.l.b16 %v1052
    %v1117 = vunpack.c.l.b16 %v1053
    %v1118 = vunpack.c.l.b16 %v1054
    %v1119 = vunpack.c.l.b16 %v1055
    %v1120 = vunpack.c.l.b16 %v1056
    %v1121 = vunpack.c.l.b16 %v1057
    %v1122 = vunpack.c.l.b16 %v1058
    %v1123 = vunpack.c.l.b16 %v1059
    %v1124 = vunpack.c.l.b16 %v1060
    %v1125 = vunpack.c.l.b16 %v1061
    %v1126 = vunpack.c.l.b16 %v1062
    %v1127 = vunpack.c.l.b16 %v1063
    %v1128 = vunpack.c.l.b16 %v1064
    %v1129 = vunpack.c.l.b16 %v1065
    %v1130 = vunpack.c.l.b16 %v1066
    %v1131 = vunpack.c.l.b16 %v1067
    %v1132 = vunpack.c.l.b16 %v1068
    %v1133 = vunpack.c.l.b16 %v1069
    %v1134 = vunpack.c.l.b16 %v1070
    %v1135 = vunpack.c.l.b16 %v1071
    %v1136 = vunpack.c.l.b16 %v1072
    %v1137 = vpack.c.b16 %v1106, %v1105
    %v1138 = vpack.c.b16 %v1108, %v1107
    %v1139 = vpack.c.b16 %v1110, %v1109
    %v1140 = vpack.c.b16 %v1112, %v1111
    %v1141 = vpack.c.b16 %v1114, %v1113
    %v1142 = vpack.c.b16 %v1116, %v1115
    %v1143 = vpack.c.b16 %v1118, %v1117
    %v1144 = vpack.c.b16 %v1120, %v1119
    %v1145 = vpack.c.b16 %v1122, %v1121
    %v1146 = vpack.c.b16 %v1124, %v1123
    %v1147 = vpack.c.b16 %v1126, %v1125
    %v1148 = vpack.c.b16 %v1128, %v1127
    %v1149 = vpack.c.b16 %v1130, %v1129
    %v1150 = vpack.c.b16 %v1132, %v1131
    %v1151 = vpack.c.b16 %v1134, %v1133
    %v1152 = vpack.c.b16 %v1136, %v1135
    %1169 = vmatprep.subr.bf16.mxu0 0
    %1170 = vmatpush1.bf16.msra.mxu0 %v1137
    %1171 = vmatprep.subr.bf16.mxu0 0
    %1172 = vmatpush1.bf16.msra.mxu0 %v1138
    %1173 = vmatprep.subr.bf16.mxu0 0
    %1174 = vmatpush1.bf16.msra.mxu0 %v1139
    %1175 = vmatprep.subr.bf16.mxu0 0
    %1176 = vmatpush1.bf16.msra.mxu0 %v1140
    %1177 = vmatprep.subr.bf16.mxu0 0
    %1178 = vmatpush1.bf16.msra.mxu0 %v1141
    %1179 = vmatprep.subr.bf16.mxu0 0
    %1180 = vmatpush1.bf16.msra.mxu0 %v1142
    %1181 = vmatprep.subr.bf16.mxu0 0
    %1182 = vmatpush1.bf16.msra.mxu0 %v1143
    %1183 = vmatprep.subr.bf16.mxu0 0
    %1184 = vmatpush1.bf16.msra.mxu0 %v1144
    %1185 = vmatprep.subr.bf16.mxu0 0
    %1186 = vmatpush1.bf16.msra.mxu0 %v1145
    %1187 = vmatprep.subr.bf16.mxu0 0
    %1188 = vmatpush1.bf16.msra.mxu0 %v1146
    %1189 = vmatprep.subr.bf16.mxu0 0
    %1190 = vmatpush1.bf16.msra.mxu0 %v1147
    %1191 = vmatprep.subr.bf16.mxu0 0
    %1192 = vmatpush1.bf16.msra.mxu0 %v1148
    %1193 = vmatprep.subr.bf16.mxu0 0
    %1194 = vmatpush1.bf16.msra.mxu0 %v1149
    %1195 = vmatprep.subr.bf16.mxu0 0
    %1196 = vmatpush1.bf16.msra.mxu0 %v1150
    %1197 = vmatprep.subr.bf16.mxu0 0
    %1198 = vmatpush1.bf16.msra.mxu0 %v1151
    %1199 = vmatprep.subr.bf16.mxu0 0
    %1200 = vmatpush1.bf16.msra.mxu0 %v1152
    %1201 = vmatprep.mubr.bf16.mxu0 %v1035
    %1202 = vmatmul.mubr.bf16.gmra.mrb[0].mxu0 %v1034
    %v1203 = vpop.f32.mrb[0].mxu0
    %v1204 = vadd.f32 0.0, %v1203
    %v1205 = vpop.f32.mrb[0].mxu0
    %v1206 = vpop.f32.mrb[0].mxu0
    %v1207 = vadd.f32 0.0, %v1206
    %v1208 = vpop.f32.mrb[0].mxu0
    %1209 = vmatprep.mubr.bf16.mxu0 %v1037
    %1210 = vmatmul.mubr.bf16.gmra.mrb[0].mxu0 %v1036
    %v1211 = vpop.f32.mrb[0].mxu0
    %v1212 = vadd.f32 0.0, %v1211
    %v1213 = vpop.f32.mrb[0].mxu0
    %v1214 = vpop.f32.mrb[0].mxu0
    %v1215 = vadd.f32 0.0, %v1214
    %v1216 = vpop.f32.mrb[0].mxu0
    %1217 = vmatprep.mubr.bf16.mxu0 %v1039
    %1218 = vmatmul.mubr.bf16.gmra.mrb[0].mxu0 %v1038
    %v1219 = vpop.f32.mrb[0].mxu0
    %v1220 = vadd.f32 0.0, %v1219
    %v1221 = vpop.f32.mrb[0].mxu0
    %v1222 = vpop.f32.mrb[0].mxu0
    %v1223 = vadd.f32 0.0, %v1222
    %v1224 = vpop.f32.mrb[0].mxu0
    %1225 = vdwg.mxu0
    %v1226 = vld [vmem:[%s6 + $0x9] sm:$0x1]
    %1229 = vrot.lane.b32.xlu0 %v1204, 1
    %v1230 = vpop.permute.xlu0 %1229
    %1231 = vrot.lane.b32.xlu0 %v1207, 1
    %v1232 = vpop.permute.xlu0 %1231
    %v1235 = vadd.f32 %v1204, %v1230
    %v1236 = vadd.f32 %v1207, %v1232
    %vm1237 = vcmp.gt.f32.partialorder %v1235, 0.0
    %vm1238 = vcmp.gt.f32.partialorder %v1236, 0.0
    %v1239 = vmul.f32 %v1235, 0.2
    %v1240 = vmul.f32 %v1236, 0.2
    %v1241 = vsel %vm1237, %v1235, %v1239
    %v1242 = vsel %vm1238, %v1236, %v1240
    %1245 = vrot.lane.b32.xlu0 %v1212, 1
    %v1246 = vpop.permute.xlu0 %1245
    %1247 = vrot.lane.b32.xlu0 %v1215, 1
    %v1248 = vpop.permute.xlu0 %1247
    %v1251 = vadd.f32 %v1204, %v1246
    %v1252 = vadd.f32 %v1207, %v1248
    %vm1253 = vcmp.gt.f32.partialorder %v1251, 0.0
    %vm1254 = vcmp.gt.f32.partialorder %v1252, 0.0
    %v1255 = vmul.f32 %v1251, 0.2
    %v1256 = vmul.f32 %v1252, 0.2
    %v1257 = vsel %vm1253, %v1251, %v1255
    %v1258 = vsel %vm1254, %v1252, %v1256
    %1261 = vrot.lane.b32.xlu0 %v1220, 1
    %v1262 = vpop.permute.xlu0 %1261
    %1263 = vrot.lane.b32.xlu0 %v1223, 1
    %v1264 = vpop.permute.xlu0 %1263
    %v1267 = vadd.f32 %v1204, %v1262
    %v1268 = vadd.f32 %v1207, %v1264
    %vm1269 = vcmp.gt.f32.partialorder %v1267, 0.0
    %vm1270 = vcmp.gt.f32.partialorder %v1268, 0.0
    %v1271 = vmul.f32 %v1267, 0.2
    %v1272 = vmul.f32 %v1268, 0.2
    %v1273 = vsel %vm1269, %v1267, %v1271
    %v1274 = vsel %vm1270, %v1268, %v1272
    %v1275 = vmax.f32 %v1241, %v1257
    %v1276 = vmax.f32 %v1242, %v1258
    %v1277 = vmax.f32 %v1275, %v1273
    %v1278 = vmax.f32 %v1276, %v1274
    %v1279 = vsub.f32 %v1241, %v1277
    %v1280 = vsub.f32 %v1242, %v1278
    %v1281 = vmul.f32 %v1279, 1.442695
    %v1282 = vpow.pop %v1281
    %v1283 = vmul.f32 %v1280, 1.442695
    %v1284 = vpow.pop %v1283
    %v1285 = vsub.f32 %v1257, %v1277
    %v1286 = vsub.f32 %v1258, %v1278
    %v1287 = vmul.f32 %v1285, 1.442695
    %v1288 = vpow.pop %v1287
    %v1289 = vmul.f32 %v1286, 1.442695
    %v1290 = vpow.pop %v1289
    %v1291 = vsub.f32 %v1273, %v1277
    %v1292 = vsub.f32 %v1274, %v1278
    %v1293 = vmul.f32 %v1291, 1.442695
    %v1294 = vpow.pop %v1293
    %v1295 = vmul.f32 %v1292, 1.442695
    %v1296 = vpow.pop %v1295
    %v1297 = vadd.f32 %v1282, %v1288
    %v1298 = vadd.f32 %v1284, %v1290
    %v1299 = vadd.f32 %v1297, %v1294
    %v1300 = vadd.f32 %v1298, %v1296
    %v1301 = vrcp.pop %v1299
    %v1302 = vrcp.pop %v1300
    %1304 = vset.pattern.permute.xlu0 65
    %1305 = vperm.xlu0 %1304, %v1282
    %v1306 = vpop.permute.xlu0 %1305
    %1309 = vset.pattern.permute.xlu0 65
    %1310 = vperm.xlu0 %1309, %v1284
    %v1311 = vpop.permute.xlu0 %1310
    %v1313 = vmul.f32 %v1306, %v1204
    %v1314 = vmul.f32 %v1311, %v1207
    %1316 = vset.pattern.permute.xlu0 65
    %1317 = vperm.xlu0 %1316, %v1288
    %v1318 = vpop.permute.xlu0 %1317
    %1321 = vset.pattern.permute.xlu0 65
    %1322 = vperm.xlu0 %1321, %v1290
    %v1323 = vpop.permute.xlu0 %1322
    %v1325 = vmul.f32 %v1318, %v1212
    %v1326 = vmul.f32 %v1323, %v1215
    %v1327 = vadd.f32 %v1313, %v1325
    %v1328 = vadd.f32 %v1314, %v1326
    %1330 = vset.pattern.permute.xlu0 65
    %1331 = vperm.xlu0 %1330, %v1294
    %v1332 = vpop.permute.xlu0 %1331
    %1335 = vset.pattern.permute.xlu0 65
    %1336 = vperm.xlu0 %1335, %v1296
    %v1337 = vpop.permute.xlu0 %1336
    %v1339 = vmul.f32 %v1332, %v1220
    %v1340 = vmul.f32 %v1337, %v1223
    %v1341 = vadd.f32 %v1327, %v1339
    %v1342 = vadd.f32 %v1328, %v1340
    %1344 = vset.pattern.permute.xlu0 65
    %1345 = vperm.xlu0 %1344, %v1301
    %v1346 = vpop.permute.xlu0 %1345
    %1349 = vset.pattern.permute.xlu0 65
    %1350 = vperm.xlu0 %1349, %v1302
    %v1351 = vpop.permute.xlu0 %1350
    %v1353 = vmul.f32 %v1341, %v1346
    %v1354 = vmul.f32 %v1342, %v1351
    %v1356 = vlaneseq
    %v1357 = vshrl.u32 %v1356, 7
    %v1358 = vsub.s32 0, %v1357
    %v1359 = vrot.slane %v1226, %v1358
    %v1361 = vadd.f32 %v1353, %v1359
    %v1362 = vadd.f32 %v1354, %v1359
    %v1363 = vadd.f32 %v1212, %v1230
    %v1364 = vadd.f32 %v1215, %v1232
    %vm1365 = vcmp.gt.f32.partialorder %v1363, 0.0
    %vm1366 = vcmp.gt.f32.partialorder %v1364, 0.0
    %v1367 = vmul.f32 %v1363, 0.2
    %v1368 = vmul.f32 %v1364, 0.2
    %v1369 = vsel %vm1365, %v1363, %v1367
    %v1370 = vsel %vm1366, %v1364, %v1368
    %v1371 = vadd.f32 %v1212, %v1246
    %v1372 = vadd.f32 %v1215, %v1248
    %vm1373 = vcmp.gt.f32.partialorder %v1371, 0.0
    %vm1374 = vcmp.gt.f32.partialorder %v1372, 0.0
    %v1375 = vmul.f32 %v1371, 0.2
    %v1376 = vmul.f32 %v1372, 0.2
    %v1377 = vsel %vm1373, %v1371, %v1375
    %v1378 = vsel %vm1374, %v1372, %v1376
    %v1379 = vadd.f32 %v1212, %v1262
    %v1380 = vadd.f32 %v1215, %v1264
    %vm1381 = vcmp.gt.f32.partialorder %v1379, 0.0
    %vm1382 = vcmp.gt.f32.partialorder %v1380, 0.0
    %v1383 = vmul.f32 %v1379, 0.2
    %v1384 = vmul.f32 %v1380, 0.2
    %v1385 = vsel %vm1381, %v1379, %v1383
    %v1386 = vsel %vm1382, %v1380, %v1384
    %v1387 = vmax.f32 %v1369, %v1377
    %v1388 = vmax.f32 %v1370, %v1378
    %v1389 = vmax.f32 %v1387, %v1385
    %v1390 = vmax.f32 %v1388, %v1386
    %v1391 = vsub.f32 %v1369, %v1389
    %v1392 = vsub.f32 %v1370, %v1390
    %v1393 = vmul.f32 %v1391, 1.442695
    %v1394 = vpow.pop %v1393
    %v1395 = vmul.f32 %v1392, 1.442695
    %v1396 = vpow.pop %v1395
    %v1397 = vsub.f32 %v1377, %v1389
    %v1398 = vsub.f32 %v1378, %v1390
    %v1399 = vmul.f32 %v1397, 1.442695
    %v1400 = vpow.pop %v1399
    %v1401 = vmul.f32 %v1398, 1.442695
    %v1402 = vpow.pop %v1401
    %v1403 = vsub.f32 %v1385, %v1389
    %v1404 = vsub.f32 %v1386, %v1390
    %v1405 = vmul.f32 %v1403, 1.442695
    %v1406 = vpow.pop %v1405
    %v1407 = vmul.f32 %v1404, 1.442695
    %v1408 = vpow.pop %v1407
    %v1409 = vadd.f32 %v1394, %v1400
    %v1410 = vadd.f32 %v1396, %v1402
    %v1411 = vadd.f32 %v1409, %v1406
    %v1412 = vadd.f32 %v1410, %v1408
    %v1413 = vrcp.pop %v1411
    %v1414 = vrcp.pop %v1412
    %1416 = vset.pattern.permute.xlu0 65
    %1417 = vperm.xlu0 %1416, %v1394
    %v1418 = vpop.permute.xlu0 %1417
    %1421 = vset.pattern.permute.xlu0 65
    %1422 = vperm.xlu0 %1421, %v1396
    %v1423 = vpop.permute.xlu0 %1422
    %v1425 = vmul.f32 %v1418, %v1204
    %v1426 = vmul.f32 %v1423, %v1207
    %1428 = vset.pattern.permute.xlu0 65
    %1429 = vperm.xlu0 %1428, %v1400
    %v1430 = vpop.permute.xlu0 %1429
    %1433 = vset.pattern.permute.xlu0 65
    %1434 = vperm.xlu0 %1433, %v1402
    %v1435 = vpop.permute.xlu0 %1434
    %v1437 = vmul.f32 %v1430, %v1212
    %v1438 = vmul.f32 %v1435, %v1215
    %v1439 = vadd.f32 %v1425, %v1437
    %v1440 = vadd.f32 %v1426, %v1438
    %1442 = vset.pattern.permute.xlu0 65
    %1443 = vperm.xlu0 %1442, %v1406
    %v1444 = vpop.permute.xlu0 %1443
    %1447 = vset.pattern.permute.xlu0 65
    %1448 = vperm.xlu0 %1447, %v1408
    %v1449 = vpop.permute.xlu0 %1448
    %v1451 = vmul.f32 %v1444, %v1220
    %v1452 = vmul.f32 %v1449, %v1223
    %v1453 = vadd.f32 %v1439, %v1451
    %v1454 = vadd.f32 %v1440, %v1452
    %1456 = vset.pattern.permute.xlu0 65
    %1457 = vperm.xlu0 %1456, %v1413
    %v1458 = vpop.permute.xlu0 %1457
    %1461 = vset.pattern.permute.xlu0 65
    %1462 = vperm.xlu0 %1461, %v1414
    %v1463 = vpop.permute.xlu0 %1462
    %v1465 = vmul.f32 %v1453, %v1458
    %v1466 = vmul.f32 %v1454, %v1463
    %v1467 = vadd.f32 %v1465, %v1359
    %v1468 = vadd.f32 %v1466, %v1359
    %v1469 = vadd.f32 %v1220, %v1230
    %v1470 = vadd.f32 %v1223, %v1232
    %vm1471 = vcmp.gt.f32.partialorder %v1469, 0.0
    %vm1472 = vcmp.gt.f32.partialorder %v1470, 0.0
    %v1473 = vmul.f32 %v1469, 0.2
    %v1474 = vmul.f32 %v1470, 0.2
    %v1475 = vsel %vm1471, %v1469, %v1473
    %v1476 = vsel %vm1472, %v1470, %v1474
    %v1477 = vadd.f32 %v1220, %v1246
    %v1478 = vadd.f32 %v1223, %v1248
    %vm1479 = vcmp.gt.f32.partialorder %v1477, 0.0
    %vm1480 = vcmp.gt.f32.partialorder %v1478, 0.0
    %v1481 = vmul.f32 %v1477, 0.2
    %v1482 = vmul.f32 %v1478, 0.2
    %v1483 = vsel %vm1479, %v1477, %v1481
    %v1484 = vsel %vm1480, %v1478, %v1482
    %v1485 = vadd.f32 %v1220, %v1262
    %v1486 = vadd.f32 %v1223, %v1264
    %vm1487 = vcmp.gt.f32.partialorder %v1485, 0.0
    %vm1488 = vcmp.gt.f32.partialorder %v1486, 0.0
    %v1489 = vmul.f32 %v1485, 0.2
    %v1490 = vmul.f32 %v1486, 0.2
    %v1491 = vsel %vm1487, %v1485, %v1489
    %v1492 = vsel %vm1488, %v1486, %v1490
    %v1493 = vmax.f32 %v1475, %v1483
    %v1494 = vmax.f32 %v1476, %v1484
    %v1495 = vmax.f32 %v1493, %v1491
    %v1496 = vmax.f32 %v1494, %v1492
    %v1497 = vsub.f32 %v1475, %v1495
    %v1498 = vsub.f32 %v1476, %v1496
    %v1499 = vmul.f32 %v1497, 1.442695
    %v1500 = vpow.pop %v1499
    %v1501 = vmul.f32 %v1498, 1.442695
    %v1502 = vpow.pop %v1501
    %v1503 = vsub.f32 %v1483, %v1495
    %v1504 = vsub.f32 %v1484, %v1496
    %v1505 = vmul.f32 %v1503, 1.442695
    %v1506 = vpow.pop %v1505
    %v1507 = vmul.f32 %v1504, 1.442695
    %v1508 = vpow.pop %v1507
    %v1509 = vsub.f32 %v1491, %v1495
    %v1510 = vsub.f32 %v1492, %v1496
    %v1511 = vmul.f32 %v1509, 1.442695
    %v1512 = vpow.pop %v1511
    %v1513 = vmul.f32 %v1510, 1.442695
    %v1514 = vpow.pop %v1513
    %v1515 = vadd.f32 %v1500, %v1506
    %v1516 = vadd.f32 %v1502, %v1508
    %v1517 = vadd.f32 %v1515, %v1512
    %v1518 = vadd.f32 %v1516, %v1514
    %v1519 = vrcp.pop %v1517
    %v1520 = vrcp.pop %v1518
    %1522 = vset.pattern.permute.xlu0 65
    %1523 = vperm.xlu0 %1522, %v1500
    %v1524 = vpop.permute.xlu0 %1523
    %1527 = vset.pattern.permute.xlu0 65
    %1528 = vperm.xlu0 %1527, %v1502
    %v1529 = vpop.permute.xlu0 %1528
    %v1531 = vmul.f32 %v1524, %v1204
    %v1532 = vmul.f32 %v1529, %v1207
    %1534 = vset.pattern.permute.xlu0 65
    %1535 = vperm.xlu0 %1534, %v1506
    %v1536 = vpop.permute.xlu0 %1535
    %1539 = vset.pattern.permute.xlu0 65
    %1540 = vperm.xlu0 %1539, %v1508
    %v1541 = vpop.permute.xlu0 %1540
    %v1543 = vmul.f32 %v1536, %v1212
    %v1544 = vmul.f32 %v1541, %v1215
    %v1545 = vadd.f32 %v1531, %v1543
    %v1546 = vadd.f32 %v1532, %v1544
    %1548 = vset.pattern.permute.xlu0 65
    %1549 = vperm.xlu0 %1548, %v1512
    %v1550 = vpop.permute.xlu0 %1549
    %1553 = vset.pattern.permute.xlu0 65
    %1554 = vperm.xlu0 %1553, %v1514
    %v1555 = vpop.permute.xlu0 %1554
    %v1557 = vmul.f32 %v1550, %v1220
    %v1558 = vmul.f32 %v1555, %v1223
    %v1559 = vadd.f32 %v1545, %v1557
    %v1560 = vadd.f32 %v1546, %v1558
    %1562 = vset.pattern.permute.xlu0 65
    %1563 = vperm.xlu0 %1562, %v1519
    %v1564 = vpop.permute.xlu0 %1563
    %1567 = vset.pattern.permute.xlu0 65
    %1568 = vperm.xlu0 %1567, %v1520
    %v1569 = vpop.permute.xlu0 %1568
    %v1571 = vmul.f32 %v1559, %v1564
    %v1572 = vmul.f32 %v1560, %v1569
    %v1573 = vadd.f32 %v1571, %v1359
    %v1574 = vadd.f32 %v1572, %v1359
    %v1575 = vpack.c.bf16 %v1362, %v1361
    %v1576 = vld [vmem:[#allocation6] sm:$0xff]
    %v1577 = vld [vmem:[#allocation6 + $0x8] sm:$0xff]
    %v1578 = vld [vmem:[#allocation6 + $0x10] sm:$0xff]
    %v1579 = vld [vmem:[#allocation6 + $0x18] sm:$0xff]
    %v1580 = vld [vmem:[#allocation6 + $0x20] sm:$0xff]
    %v1581 = vld [vmem:[#allocation6 + $0x28] sm:$0xff]
    %v1582 = vld [vmem:[#allocation6 + $0x30] sm:$0xff]
    %v1583 = vld [vmem:[#allocation6 + $0x38] sm:$0xff]
    %v1584 = vld [vmem:[#allocation6 + $0x40] sm:$0xff]
    %v1585 = vld [vmem:[#allocation6 + $0x48] sm:$0xff]
    %v1586 = vld [vmem:[#allocation6 + $0x50] sm:$0xff]
    %v1587 = vld [vmem:[#allocation6 + $0x58] sm:$0xff]
    %v1588 = vld [vmem:[#allocation6 + $0x60] sm:$0xff]
    %v1589 = vld [vmem:[#allocation6 + $0x68] sm:$0xff]
    %v1590 = vld [vmem:[#allocation6 + $0x70] sm:$0xff]
    %v1591 = vld [vmem:[#allocation6 + $0x78] sm:$0xff]
    %v1592 = vld [vmem:[#allocation6 + $0x80] sm:$0xff]
    %v1593 = vld [vmem:[#allocation6 + $0x88] sm:$0xff]
    %v1594 = vld [vmem:[#allocation6 + $0x90] sm:$0xff]
    %v1595 = vld [vmem:[#allocation6 + $0x98] sm:$0xff]
    %v1596 = vld [vmem:[#allocation6 + $0xa0] sm:$0xff]
    %v1597 = vld [vmem:[#allocation6 + $0xa8] sm:$0xff]
    %v1598 = vld [vmem:[#allocation6 + $0xb0] sm:$0xff]
    %v1599 = vld [vmem:[#allocation6 + $0xb8] sm:$0xff]
    %v1600 = vld [vmem:[#allocation6 + $0xc0] sm:$0xff]
    %v1601 = vld [vmem:[#allocation6 + $0xc8] sm:$0xff]
    %v1602 = vld [vmem:[#allocation6 + $0xd0] sm:$0xff]
    %v1603 = vld [vmem:[#allocation6 + $0xd8] sm:$0xff]
    %v1604 = vld [vmem:[#allocation6 + $0xe0] sm:$0xff]
    %v1605 = vld [vmem:[#allocation6 + $0xe8] sm:$0xff]
    %v1606 = vld [vmem:[#allocation6 + $0xf0] sm:$0xff]
    %v1607 = vld [vmem:[#allocation6 + $0xf8] sm:$0xff]
    %v1608 = vpack.c.bf16 %v1468, %v1467
    %s1609 = scalar_lea.vmem [#allocation6], 256
    %v1610 = vld [vmem:[%s1609] sm:$0xff]
    %v1611 = vld [vmem:[%s1609 + $0x8] sm:$0xff]
    %v1612 = vld [vmem:[%s1609 + $0x10] sm:$0xff]
    %v1613 = vld [vmem:[%s1609 + $0x18] sm:$0xff]
    %v1614 = vld [vmem:[%s1609 + $0x20] sm:$0xff]
    %v1615 = vld [vmem:[%s1609 + $0x28] sm:$0xff]
    %v1616 = vld [vmem:[%s1609 + $0x30] sm:$0xff]
    %v1617 = vld [vmem:[%s1609 + $0x38] sm:$0xff]
    %v1618 = vld [vmem:[%s1609 + $0x40] sm:$0xff]
    %v1619 = vld [vmem:[%s1609 + $0x48] sm:$0xff]
    %v1620 = vld [vmem:[%s1609 + $0x50] sm:$0xff]
    %v1621 = vld [vmem:[%s1609 + $0x58] sm:$0xff]
    %v1622 = vld [vmem:[%s1609 + $0x60] sm:$0xff]
    %v1623 = vld [vmem:[%s1609 + $0x68] sm:$0xff]
    %v1624 = vld [vmem:[%s1609 + $0x70] sm:$0xff]
    %v1625 = vld [vmem:[%s1609 + $0x78] sm:$0xff]
    %v1626 = vld [vmem:[%s1609 + $0x80] sm:$0xff]
    %v1627 = vld [vmem:[%s1609 + $0x88] sm:$0xff]
    %v1628 = vld [vmem:[%s1609 + $0x90] sm:$0xff]
    %v1629 = vld [vmem:[%s1609 + $0x98] sm:$0xff]
    %v1630 = vld [vmem:[%s1609 + $0xa0] sm:$0xff]
    %v1631 = vld [vmem:[%s1609 + $0xa8] sm:$0xff]
    %v1632 = vld [vmem:[%s1609 + $0xb0] sm:$0xff]
    %v1633 = vld [vmem:[%s1609 + $0xb8] sm:$0xff]
    %v1634 = vld [vmem:[%s1609 + $0xc0] sm:$0xff]
    %v1635 = vld [vmem:[%s1609 + $0xc8] sm:$0xff]
    %v1636 = vld [vmem:[%s1609 + $0xd0] sm:$0xff]
    %v1637 = vld [vmem:[%s1609 + $0xd8] sm:$0xff]
    %v1638 = vld [vmem:[%s1609 + $0xe0] sm:$0xff]
    %v1639 = vld [vmem:[%s1609 + $0xe8] sm:$0xff]
    %v1640 = vld [vmem:[%s1609 + $0xf0] sm:$0xff]
    %v1641 = vld [vmem:[%s1609 + $0xf8] sm:$0xff]
    %v1674 = vunpack.c.l.b16 %v1610
    %v1675 = vunpack.c.h.b16 %v1610
    %v1676 = vunpack.c.l.b16 %v1611
    %v1677 = vunpack.c.h.b16 %v1611
    %v1678 = vunpack.c.l.b16 %v1612
    %v1679 = vunpack.c.h.b16 %v1612
    %v1680 = vunpack.c.l.b16 %v1613
    %v1681 = vunpack.c.h.b16 %v1613
    %v1682 = vunpack.c.l.b16 %v1614
    %v1683 = vunpack.c.h.b16 %v1614
    %v1684 = vunpack.c.l.b16 %v1615
    %v1685 = vunpack.c.h.b16 %v1615
    %v1686 = vunpack.c.l.b16 %v1616
    %v1687 = vunpack.c.h.b16 %v1616
    %v1688 = vunpack.c.l.b16 %v1617
    %v1689 = vunpack.c.h.b16 %v1617
    %v1690 = vunpack.c.l.b16 %v1618
    %v1691 = vunpack.c.h.b16 %v1618
    %v1692 = vunpack.c.l.b16 %v1619
    %v1693 = vunpack.c.h.b16 %v1619
    %v1694 = vunpack.c.l.b16 %v1620
    %v1695 = vunpack.c.h.b16 %v1620
    %v1696 = vunpack.c.l.b16 %v1621
    %v1697 = vunpack.c.h.b16 %v1621
    %v1698 = vunpack.c.l.b16 %v1622
    %v1699 = vunpack.c.h.b16 %v1622
    %v1700 = vunpack.c.l.b16 %v1623
    %v1701 = vunpack.c.h.b16 %v1623
    %v1702 = vunpack.c.l.b16 %v1624
    %v1703 = vunpack.c.h.b16 %v1624
    %v1704 = vunpack.c.l.b16 %v1625
    %v1705 = vunpack.c.h.b16 %v1625
    %v1706 = vunpack.c.l.b16 %v1626
    %v1707 = vunpack.c.h.b16 %v1626
    %v1708 = vunpack.c.l.b16 %v1627
    %v1709 = vunpack.c.h.b16 %v1627
    %v1710 = vunpack.c.l.b16 %v1628
    %v1711 = vunpack.c.h.b16 %v1628
    %v1712 = vunpack.c.l.b16 %v1629
    %v1713 = vunpack.c.h.b16 %v1629
    %v1714 = vunpack.c.l.b16 %v1630
    %v1715 = vunpack.c.h.b16 %v1630
    %v1716 = vunpack.c.l.b16 %v1631
    %v1717 = vunpack.c.h.b16 %v1631
    %v1718 = vunpack.c.l.b16 %v1632
    %v1719 = vunpack.c.h.b16 %v1632
    %v1720 = vunpack.c.l.b16 %v1633
    %v1721 = vunpack.c.h.b16 %v1633
    %v1722 = vunpack.c.l.b16 %v1634
    %v1723 = vunpack.c.h.b16 %v1634
    %v1724 = vunpack.c.l.b16 %v1635
    %v1725 = vunpack.c.h.b16 %v1635
    %v1726 = vunpack.c.l.b16 %v1636
    %v1727 = vunpack.c.h.b16 %v1636
    %v1728 = vunpack.c.l.b16 %v1637
    %v1729 = vunpack.c.h.b16 %v1637
    %v1730 = vunpack.c.l.b16 %v1638
    %v1731 = vunpack.c.h.b16 %v1638
    %v1732 = vunpack.c.l.b16 %v1639
    %v1733 = vunpack.c.h.b16 %v1639
    %v1734 = vunpack.c.l.b16 %v1640
    %v1735 = vunpack.c.h.b16 %v1640
    %v1736 = vunpack.c.l.b16 %v1641
    %v1737 = vunpack.c.h.b16 %v1641
    %v1738 = vpack.c.b16 %v1682, %v1674
    %v1739 = vpack.c.b16 %v1683, %v1675
    %v1740 = vpack.c.b16 %v1684, %v1676
    %v1741 = vpack.c.b16 %v1685, %v1677
    %v1742 = vpack.c.b16 %v1686, %v1678
    %v1743 = vpack.c.b16 %v1687, %v1679
    %v1744 = vpack.c.b16 %v1688, %v1680
    %v1745 = vpack.c.b16 %v1689, %v1681
    %v1746 = vpack.c.b16 %v1698, %v1690
    %v1747 = vpack.c.b16 %v1699, %v1691
    %v1748 = vpack.c.b16 %v1700, %v1692
    %v1749 = vpack.c.b16 %v1701, %v1693
    %v1750 = vpack.c.b16 %v1702, %v1694
    %v1751 = vpack.c.b16 %v1703, %v1695
    %v1752 = vpack.c.b16 %v1704, %v1696
    %v1753 = vpack.c.b16 %v1705, %v1697
    %v1754 = vpack.c.b16 %v1714, %v1706
    %v1755 = vpack.c.b16 %v1715, %v1707
    %v1756 = vpack.c.b16 %v1716, %v1708
    %v1757 = vpack.c.b16 %v1717, %v1709
    %v1758 = vpack.c.b16 %v1718, %v1710
    %v1759 = vpack.c.b16 %v1719, %v1711
    %v1760 = vpack.c.b16 %v1720, %v1712
    %v1761 = vpack.c.b16 %v1721, %v1713
    %v1762 = vpack.c.b16 %v1730, %v1722
    %v1763 = vpack.c.b16 %v1731, %v1723
    %v1764 = vpack.c.b16 %v1732, %v1724
    %v1765 = vpack.c.b16 %v1733, %v1725
    %v1766 = vpack.c.b16 %v1734, %v1726
    %v1767 = vpack.c.b16 %v1735, %v1727
    %v1768 = vpack.c.b16 %v1736, %v1728
    %v1769 = vpack.c.b16 %v1737, %v1729
    %vm1802 = vcmask 523264
    %v1804 = vsel %vm1802, %v1608, 0
    %1806 = vmatprep.subr.bf16.mxu0 %v1739
    %1807 = vmatpush1.bf16.msra.mxu0 %v1738
    %1808 = vmatprep.subr.bf16.mxu0 %v1747
    %1809 = vmatpush1.bf16.msra.mxu0 %v1746
    %1810 = vmatprep.subr.bf16.mxu0 %v1755
    %1811 = vmatpush1.bf16.msra.mxu0 %v1754
    %1812 = vmatprep.subr.bf16.mxu0 %v1763
    %1813 = vmatpush1.bf16.msra.mxu0 %v1762
    %1814 = vmatprep.subr.bf16.mxu0 0
    %1815 = vmatpush1.bf16.msra.mxu0 0
    %1816 = vmatprep.subr.bf16.mxu0 0
    %1817 = vmatpush1.bf16.msra.mxu0 0
    %1818 = vmatprep.subr.bf16.mxu0 0
    %1819 = vmatpush1.bf16.msra.mxu0 0
    %1820 = vmatprep.subr.bf16.mxu0 0
    %1821 = vmatpush1.bf16.msra.mxu0 0
    %1822 = vmatprep.subr.bf16.mxu0 0
    %1823 = vmatpush1.bf16.msra.mxu0 0
    %1824 = vmatprep.subr.bf16.mxu0 0
    %1825 = vmatpush1.bf16.msra.mxu0 0
    %1826 = vmatprep.subr.bf16.mxu0 0
    %1827 = vmatpush1.bf16.msra.mxu0 0
    %1828 = vmatprep.subr.bf16.mxu0 0
    %1829 = vmatpush1.bf16.msra.mxu0 0
    %1830 = vmatprep.subr.bf16.mxu0 0
    %1831 = vmatpush1.bf16.msra.mxu0 0
    %1832 = vmatprep.subr.bf16.mxu0 0
    %1833 = vmatpush1.bf16.msra.mxu0 0
    %1834 = vmatprep.subr.bf16.mxu0 0
    %1835 = vmatpush1.bf16.msra.mxu0 0
    %1836 = vmatprep.subr.bf16.mxu0 0
    %1837 = vmatpush1.bf16.msra.mxu0 0
    %1838 = vmatprep.mubr.bf16.mxu0 0
    %1839 = vmatmul.mubr.bf16.gmra.mrb[0].mxu0 %v1804
    %v1840 = vpop.f32.mrb[0].mxu0
    %v1841 = vadd.f32 0.0, %v1840
    %v1842 = vpop.f32.mrb[0].mxu0
    %v1843 = vadd.f32 0.0, %v1842
    %v1844 = vpop.f32.mrb[0].mxu0
    %v1845 = vadd.f32 0.0, %v1844
    %v1846 = vpop.f32.mrb[0].mxu0
    %v1847 = vadd.f32 0.0, %v1846
    %1848 = vdwg.mxu0
    %1849 = vmatprep.subr.bf16.mxu0 %v1741
    %1850 = vmatpush1.bf16.msra.mxu0 %v1740
    %1851 = vmatprep.subr.bf16.mxu0 %v1749
    %1852 = vmatpush1.bf16.msra.mxu0 %v1748
    %1853 = vmatprep.subr.bf16.mxu0 %v1757
    %1854 = vmatpush1.bf16.msra.mxu0 %v1756
    %1855 = vmatprep.subr.bf16.mxu0 %v1765
    %1856 = vmatpush1.bf16.msra.mxu0 %v1764
    %1857 = vmatprep.subr.bf16.mxu0 0
    %1858 = vmatpush1.bf16.msra.mxu0 0
    %1859 = vmatprep.subr.bf16.mxu0 0
    %1860 = vmatpush1.bf16.msra.mxu0 0
    %1861 = vmatprep.subr.bf16.mxu0 0
    %1862 = vmatpush1.bf16.msra.mxu0 0
    %1863 = vmatprep.subr.bf16.mxu0 0
    %1864 = vmatpush1.bf16.msra.mxu0 0
    %1865 = vmatprep.subr.bf16.mxu0 0
    %1866 = vmatpush1.bf16.msra.mxu0 0
    %1867 = vmatprep.subr.bf16.mxu0 0
    %1868 = vmatpush1.bf16.msra.mxu0 0
    %1869 = vmatprep.subr.bf16.mxu0 0
    %1870 = vmatpush1.bf16.msra.mxu0 0
    %1871 = vmatprep.subr.bf16.mxu0 0
    %1872 = vmatpush1.bf16.msra.mxu0 0
    %1873 = vmatprep.subr.bf16.mxu0 0
    %1874 = vmatpush1.bf16.msra.mxu0 0
    %1875 = vmatprep.subr.bf16.mxu0 0
    %1876 = vmatpush1.bf16.msra.mxu0 0
    %1877 = vmatprep.subr.bf16.mxu0 0
    %1878 = vmatpush1.bf16.msra.mxu0 0
    %1879 = vmatprep.subr.bf16.mxu0 0
    %1880 = vmatpush1.bf16.msra.mxu0 0
    %1881 = vmatprep.mubr.bf16.mxu0 0
    %1882 = vmatmul.mubr.bf16.gmra.mrb[0].mxu0 %v1804
    %v1883 = vpop.f32.mrb[0].mxu0
    %v1884 = vadd.f32 0.0, %v1883
    %v1885 = vpop.f32.mrb[0].mxu0
    %v1886 = vadd.f32 0.0, %v1885
    %v1887 = vpop.f32.mrb[0].mxu0
    %v1888 = vadd.f32 0.0, %v1887
    %v1889 = vpop.f32.mrb[0].mxu0
    %v1890 = vadd.f32 0.0, %v1889
    %1891 = vdwg.mxu0
    %1892 = vmatprep.subr.bf16.mxu0 %v1743
    %1893 = vmatpush1.bf16.msra.mxu0 %v1742
    %1894 = vmatprep.subr.bf16.mxu0 %v1751
    %1895 = vmatpush1.bf16.msra.mxu0 %v1750
    %1896 = vmatprep.subr.bf16.mxu0 %v1759
    %1897 = vmatpush1.bf16.msra.mxu0 %v1758
    %1898 = vmatprep.subr.bf16.mxu0 %v1767
    %1899 = vmatpush1.bf16.msra.mxu0 %v1766
    %1900 = vmatprep.subr.bf16.mxu0 0
    %1901 = vmatpush1.bf16.msra.mxu0 0
    %1902 = vmatprep.subr.bf16.mxu0 0
    %1903 = vmatpush1.bf16.msra.mxu0 0
    %1904 = vmatprep.subr.bf16.mxu0 0
    %1905 = vmatpush1.bf16.msra.mxu0 0
    %1906 = vmatprep.subr.bf16.mxu0 0
    %1907 = vmatpush1.bf16.msra.mxu0 0
    %1908 = vmatprep.subr.bf16.mxu0 0
    %1909 = vmatpush1.bf16.msra.mxu0 0
    %1910 = vmatprep.subr.bf16.mxu0 0
    %1911 = vmatpush1.bf16.msra.mxu0 0
    %1912 = vmatprep.subr.bf16.mxu0 0
    %1913 = vmatpush1.bf16.msra.mxu0 0
    %1914 = vmatprep.subr.bf16.mxu0 0
    %1915 = vmatpush1.bf16.msra.mxu0 0
    %1916 = vmatprep.subr.bf16.mxu0 0
    %1917 = vmatpush1.bf16.msra.mxu0 0
    %1918 = vmatprep.subr.bf16.mxu0 0
    %1919 = vmatpush1.bf16.msra.mxu0 0
    %1920 = vmatprep.subr.bf16.mxu0 0
    %1921 = vmatpush1.bf16.msra.mxu0 0
    %1922 = vmatprep.subr.bf16.mxu0 0
    %1923 = vmatpush1.bf16.msra.mxu0 0
    %1924 = vmatprep.mubr.bf16.mxu0 0
    %1925 = vmatmul.mubr.bf16.gmra.mrb[0].mxu0 %v1804
    %v1926 = vpop.f32.mrb[0].mxu0
    %v1927 = vadd.f32 0.0, %v1926
    %v1928 = vpop.f32.mrb[0].mxu0
    %v1929 = vadd.f32 0.0, %v1928
    %v1930 = vpop.f32.mrb[0].mxu0
    %v1931 = vadd.f32 0.0, %v1930
    %v1932 = vpop.f32.mrb[0].mxu0
    %v1933 = vadd.f32 0.0, %v1932
    %1934 = vdwg.mxu0
    %1935 = vmatprep.subr.bf16.mxu0 %v1745
    %1936 = vmatpush1.bf16.msra.mxu0 %v1744
    %1937 = vmatprep.subr.bf16.mxu0 %v1753
    %1938 = vmatpush1.bf16.msra.mxu0 %v1752
    %1939 = vmatprep.subr.bf16.mxu0 %v1761
    %1940 = vmatpush1.bf16.msra.mxu0 %v1760
    %1941 = vmatprep.subr.bf16.mxu0 %v1769
    %1942 = vmatpush1.bf16.msra.mxu0 %v1768
    %1943 = vmatprep.subr.bf16.mxu0 0
    %1944 = vmatpush1.bf16.msra.mxu0 0
    %1945 = vmatprep.subr.bf16.mxu0 0
    %1946 = vmatpush1.bf16.msra.mxu0 0
    %1947 = vmatprep.subr.bf16.mxu0 0
    %1948 = vmatpush1.bf16.msra.mxu0 0
    %1949 = vmatprep.subr.bf16.mxu0 0
    %1950 = vmatpush1.bf16.msra.mxu0 0
    %1951 = vmatprep.subr.bf16.mxu0 0
    %1952 = vmatpush1.bf16.msra.mxu0 0
    %1953 = vmatprep.subr.bf16.mxu0 0
    %1954 = vmatpush1.bf16.msra.mxu0 0
    %1955 = vmatprep.subr.bf16.mxu0 0
    %1956 = vmatpush1.bf16.msra.mxu0 0
    %1957 = vmatprep.subr.bf16.mxu0 0
    %1958 = vmatpush1.bf16.msra.mxu0 0
    %1959 = vmatprep.subr.bf16.mxu0 0
    %1960 = vmatpush1.bf16.msra.mxu0 0
    %1961 = vmatprep.subr.bf16.mxu0 0
    %1962 = vmatpush1.bf16.msra.mxu0 0
    %1963 = vmatprep.subr.bf16.mxu0 0
    %1964 = vmatpush1.bf16.msra.mxu0 0
    %1965 = vmatprep.subr.bf16.mxu0 0
    %1966 = vmatpush1.bf16.msra.mxu0 0
    %1967 = vmatprep.mubr.bf16.mxu0 0
    %1968 = vmatmul.mubr.bf16.gmra.mrb[0].mxu0 %v1804
    %v1969 = vpop.f32.mrb[0].mxu0
    %v1970 = vadd.f32 0.0, %v1969
    %v1971 = vpop.f32.mrb[0].mxu0
    %v1972 = vadd.f32 0.0, %v1971
    %v1973 = vpop.f32.mrb[0].mxu0
    %v1974 = vadd.f32 0.0, %v1973
    %v1975 = vpop.f32.mrb[0].mxu0
    %v1976 = vadd.f32 0.0, %v1975
    %1977 = vdwg.mxu0
    %v2010 = vunpack.c.l.b16 %v1576
    %v2011 = vunpack.c.h.b16 %v1576
    %v2012 = vunpack.c.l.b16 %v1577
    %v2013 = vunpack.c.h.b16 %v1577
    %v2014 = vunpack.c.l.b16 %v1578
    %v2015 = vunpack.c.h.b16 %v1578
    %v2016 = vunpack.c.l.b16 %v1579
    %v2017 = vunpack.c.h.b16 %v1579
    %v2018 = vunpack.c.l.b16 %v1580
    %v2019 = vunpack.c.h.b16 %v1580
    %v2020 = vunpack.c.l.b16 %v1581
    %v2021 = vunpack.c.h.b16 %v1581
    %v2022 = vunpack.c.l.b16 %v1582
    %v2023 = vunpack.c.h.b16 %v1582
    %v2024 = vunpack.c.l.b16 %v1583
    %v2025 = vunpack.c.h.b16 %v1583
    %v2026 = vunpack.c.l.b16 %v1584
    %v2027 = vunpack.c.h.b16 %v1584
    %v2028 = vunpack.c.l.b16 %v1585
    %v2029 = vunpack.c.h.b16 %v1585
    %v2030 = vunpack.c.l.b16 %v1586
    %v2031 = vunpack.c.h.b16 %v1586
    %v2032 = vunpack.c.l.b16 %v1587
    %v2033 = vunpack.c.h.b16 %v1587
    %v2034 = vunpack.c.l.b16 %v1588
    %v2035 = vunpack.c.h.b16 %v1588
    %v2036 = vunpack.c.l.b16 %v1589
    %v2037 = vunpack.c.h.b16 %v1589
    %v2038 = vunpack.c.l.b16 %v1590
    %v2039 = vunpack.c.h.b16 %v1590
    %v2040 = vunpack.c.l.b16 %v1591
    %v2041 = vunpack.c.h.b16 %v1591
    %v2042 = vunpack.c.l.b16 %v1592
    %v2043 = vunpack.c.h.b16 %v1592
    %v2044 = vunpack.c.l.b16 %v1593
    %v2045 = vunpack.c.h.b16 %v1593
    %v2046 = vunpack.c.l.b16 %v1594
    %v2047 = vunpack.c.h.b16 %v1594
    %v2048 = vunpack.c.l.b16 %v1595
    %v2049 = vunpack.c.h.b16 %v1595
    %v2050 = vunpack.c.l.b16 %v1596
    %v2051 = vunpack.c.h.b16 %v1596
    %v2052 = vunpack.c.l.b16 %v1597
    %v2053 = vunpack.c.h.b16 %v1597
    %v2054 = vunpack.c.l.b16 %v1598
    %v2055 = vunpack.c.h.b16 %v1598
    %v2056 = vunpack.c.l.b16 %v1599
    %v2057 = vunpack.c.h.b16 %v1599
    %v2058 = vunpack.c.l.b16 %v1600
    %v2059 = vunpack.c.h.b16 %v1600
    %v2060 = vunpack.c.l.b16 %v1601
    %v2061 = vunpack.c.h.b16 %v1601
    %v2062 = vunpack.c.l.b16 %v1602
    %v2063 = vunpack.c.h.b16 %v1602
    %v2064 = vunpack.c.l.b16 %v1603
    %v2065 = vunpack.c.h.b16 %v1603
    %v2066 = vunpack.c.l.b16 %v1604
    %v2067 = vunpack.c.h.b16 %v1604
    %v2068 = vunpack.c.l.b16 %v1605
    %v2069 = vunpack.c.h.b16 %v1605
    %v2070 = vunpack.c.l.b16 %v1606
    %v2071 = vunpack.c.h.b16 %v1606
    %v2072 = vunpack.c.l.b16 %v1607
    %v2073 = vunpack.c.h.b16 %v1607
    %v2074 = vpack.c.b16 %v2018, %v2010
    %v2075 = vpack.c.b16 %v2019, %v2011
    %v2076 = vpack.c.b16 %v2020, %v2012
    %v2077 = vpack.c.b16 %v2021, %v2013
    %v2078 = vpack.c.b16 %v2022, %v2014
    %v2079 = vpack.c.b16 %v2023, %v2015
    %v2080 = vpack.c.b16 %v2024, %v2016
    %v2081 = vpack.c.b16 %v2025, %v2017
    %v2082 = vpack.c.b16 %v2034, %v2026
    %v2083 = vpack.c.b16 %v2035, %v2027
    %v2084 = vpack.c.b16 %v2036, %v2028
    %v2085 = vpack.c.b16 %v2037, %v2029
    %v2086 = vpack.c.b16 %v2038, %v2030
    %v2087 = vpack.c.b16 %v2039, %v2031
    %v2088 = vpack.c.b16 %v2040, %v2032
    %v2089 = vpack.c.b16 %v2041, %v2033
    %v2090 = vpack.c.b16 %v2050, %v2042
    %v2091 = vpack.c.b16 %v2051, %v2043
    %v2092 = vpack.c.b16 %v2052, %v2044
    %v2093 = vpack.c.b16 %v2053, %v2045
    %v2094 = vpack.c.b16 %v2054, %v2046
    %v2095 = vpack.c.b16 %v2055, %v2047
    %v2096 = vpack.c.b16 %v2056, %v2048
    %v2097 = vpack.c.b16 %v2057, %v2049
    %v2098 = vpack.c.b16 %v2066, %v2058
    %v2099 = vpack.c.b16 %v2067, %v2059
    %v2100 = vpack.c.b16 %v2068, %v2060
    %v2101 = vpack.c.b16 %v2069, %v2061
    %v2102 = vpack.c.b16 %v2070, %v2062
    %v2103 = vpack.c.b16 %v2071, %v2063
    %v2104 = vpack.c.b16 %v2072, %v2064
    %v2105 = vpack.c.b16 %v2073, %v2065
    %v2139 = vsel %vm1802, %v1575, 0
    %2141 = vmatprep.subr.bf16.mxu0 %v2075
    %2142 = vmatpush1.bf16.msra.mxu0 %v2074
    %2143 = vmatprep.subr.bf16.mxu0 %v2083
    %2144 = vmatpush1.bf16.msra.mxu0 %v2082
    %2145 = vmatprep.subr.bf16.mxu0 %v2091
    %2146 = vmatpush1.bf16.msra.mxu0 %v2090
    %2147 = vmatprep.subr.bf16.mxu0 %v2099
    %2148 = vmatpush1.bf16.msra.mxu0 %v2098
    %2149 = vmatprep.subr.bf16.mxu0 0
    %2150 = vmatpush1.bf16.msra.mxu0 0
    %2151 = vmatprep.subr.bf16.mxu0 0
    %2152 = vmatpush1.bf16.msra.mxu0 0
    %2153 = vmatprep.subr.bf16.mxu0 0
    %2154 = vmatpush1.bf16.msra.mxu0 0
    %2155 = vmatprep.subr.bf16.mxu0 0
    %2156 = vmatpush1.bf16.msra.mxu0 0
    %2157 = vmatprep.subr.bf16.mxu0 0
    %2158 = vmatpush1.bf16.msra.mxu0 0
    %2159 = vmatprep.subr.bf16.mxu0 0
    %2160 = vmatpush1.bf16.msra.mxu0 0
    %2161 = vmatprep.subr.bf16.mxu0 0
    %2162 = vmatpush1.bf16.msra.mxu0 0
    %2163 = vmatprep.subr.bf16.mxu0 0
    %2164 = vmatpush1.bf16.msra.mxu0 0
    %2165 = vmatprep.subr.bf16.mxu0 0
    %2166 = vmatpush1.bf16.msra.mxu0 0
    %2167 = vmatprep.subr.bf16.mxu0 0
    %2168 = vmatpush1.bf16.msra.mxu0 0
    %2169 = vmatprep.subr.bf16.mxu0 0
    %2170 = vmatpush1.bf16.msra.mxu0 0
    %2171 = vmatprep.subr.bf16.mxu0 0
    %2172 = vmatpush1.bf16.msra.mxu0 0
    %2173 = vmatprep.mubr.bf16.mxu0 0
    %2174 = vmatmul.mubr.bf16.gmra.mrb[0].mxu0 %v2139
    %v2175 = vpop.f32.mrb[0].mxu0
    %v2176 = vadd.f32 %v1841, %v2175
    %v2177 = vpop.f32.mrb[0].mxu0
    %v2178 = vadd.f32 %v1843, %v2177
    %v2179 = vpop.f32.mrb[0].mxu0
    %v2180 = vadd.f32 %v1845, %v2179
    %v2181 = vpop.f32.mrb[0].mxu0
    %v2182 = vadd.f32 %v1847, %v2181
    %2183 = vdwg.mxu0
    %2184 = vmatprep.subr.bf16.mxu0 %v2077
    %2185 = vmatpush1.bf16.msra.mxu0 %v2076
    %2186 = vmatprep.subr.bf16.mxu0 %v2085
    %2187 = vmatpush1.bf16.msra.mxu0 %v2084
    %2188 = vmatprep.subr.bf16.mxu0 %v2093
    %2189 = vmatpush1.bf16.msra.mxu0 %v2092
    %2190 = vmatprep.subr.bf16.mxu0 %v2101
    %2191 = vmatpush1.bf16.msra.mxu0 %v2100
    %2192 = vmatprep.subr.bf16.mxu0 0
    %2193 = vmatpush1.bf16.msra.mxu0 0
    %2194 = vmatprep.subr.bf16.mxu0 0
    %2195 = vmatpush1.bf16.msra.mxu0 0
    %2196 = vmatprep.subr.bf16.mxu0 0
    %2197 = vmatpush1.bf16.msra.mxu0 0
    %2198 = vmatprep.subr.bf16.mxu0 0
    %2199 = vmatpush1.bf16.msra.mxu0 0
    %2200 = vmatprep.subr.bf16.mxu0 0
    %2201 = vmatpush1.bf16.msra.mxu0 0
    %2202 = vmatprep.subr.bf16.mxu0 0
    %2203 = vmatpush1.bf16.msra.mxu0 0
    %2204 = vmatprep.subr.bf16.mxu0 0
    %2205 = vmatpush1.bf16.msra.mxu0 0
    %2206 = vmatprep.subr.bf16.mxu0 0
    %2207 = vmatpush1.bf16.msra.mxu0 0
    %2208 = vmatprep.subr.bf16.mxu0 0
    %2209 = vmatpush1.bf16.msra.mxu0 0
    %2210 = vmatprep.subr.bf16.mxu0 0
    %2211 = vmatpush1.bf16.msra.mxu0 0
    %2212 = vmatprep.subr.bf16.mxu0 0
    %2213 = vmatpush1.bf16.msra.mxu0 0
    %2214 = vmatprep.subr.bf16.mxu0 0
    %2215 = vmatpush1.bf16.msra.mxu0 0
    %2216 = vmatprep.mubr.bf16.mxu0 0
    %2217 = vmatmul.mubr.bf16.gmra.mrb[0].mxu0 %v2139
    %v2218 = vpop.f32.mrb[0].mxu0
    %v2219 = vadd.f32 %v1884, %v2218
    %v2220 = vpop.f32.mrb[0].mxu0
    %v2221 = vadd.f32 %v1886, %v2220
    %v2222 = vpop.f32.mrb[0].mxu0
    %v2223 = vadd.f32 %v1888, %v2222
    %v2224 = vpop.f32.mrb[0].mxu0
    %v2225 = vadd.f32 %v1890, %v2224
    %2226 = vdwg.mxu0
    %2227 = vmatprep.subr.bf16.mxu0 %v2079
    %2228 = vmatpush1.bf16.msra.mxu0 %v2078
    %2229 = vmatprep.subr.bf16.mxu0 %v2087
    %2230 = vmatpush1.bf16.msra.mxu0 %v2086
    %2231 = vmatprep.subr.bf16.mxu0 %v2095
    %2232 = vmatpush1.bf16.msra.mxu0 %v2094
    %2233 = vmatprep.subr.bf16.mxu0 %v2103
    %2234 = vmatpush1.bf16.msra.mxu0 %v2102
    %2235 = vmatprep.subr.bf16.mxu0 0
    %2236 = vmatpush1.bf16.msra.mxu0 0
    %2237 = vmatprep.subr.bf16.mxu0 0
    %2238 = vmatpush1.bf16.msra.mxu0 0
    %2239 = vmatprep.subr.bf16.mxu0 0
    %2240 = vmatpush1.bf16.msra.mxu0 0
    %2241 = vmatprep.subr.bf16.mxu0 0
    %2242 = vmatpush1.bf16.msra.mxu0 0
    %2243 = vmatprep.subr.bf16.mxu0 0
    %2244 = vmatpush1.bf16.msra.mxu0 0
    %2245 = vmatprep.subr.bf16.mxu0 0
    %2246 = vmatpush1.bf16.msra.mxu0 0
    %2247 = vmatprep.subr.bf16.mxu0 0
    %2248 = vmatpush1.bf16.msra.mxu0 0
    %2249 = vmatprep.subr.bf16.mxu0 0
    %2250 = vmatpush1.bf16.msra.mxu0 0
    %2251 = vmatprep.subr.bf16.mxu0 0
    %2252 = vmatpush1.bf16.msra.mxu0 0
    %2253 = vmatprep.subr.bf16.mxu0 0
    %2254 = vmatpush1.bf16.msra.mxu0 0
    %2255 = vmatprep.subr.bf16.mxu0 0
    %2256 = vmatpush1.bf16.msra.mxu0 0
    %2257 = vmatprep.subr.bf16.mxu0 0
    %2258 = vmatpush1.bf16.msra.mxu0 0
    %2259 = vmatprep.mubr.bf16.mxu0 0
    %2260 = vmatmul.mubr.bf16.gmra.mrb[0].mxu0 %v2139
    %v2261 = vpop.f32.mrb[0].mxu0
    %v2262 = vadd.f32 %v1927, %v2261
    %v2263 = vpop.f32.mrb[0].mxu0
    %v2264 = vadd.f32 %v1929, %v2263
    %v2265 = vpop.f32.mrb[0].mxu0
    %v2266 = vadd.f32 %v1931, %v2265
    %v2267 = vpop.f32.mrb[0].mxu0
    %v2268 = vadd.f32 %v1933, %v2267
    %2269 = vdwg.mxu0
    %2270 = vmatprep.subr.bf16.mxu0 %v2081
    %2271 = vmatpush1.bf16.msra.mxu0 %v2080
    %2272 = vmatprep.subr.bf16.mxu0 %v2089
    %2273 = vmatpush1.bf16.msra.mxu0 %v2088
    %2274 = vmatprep.subr.bf16.mxu0 %v2097
    %2275 = vmatpush1.bf16.msra.mxu0 %v2096
    %2276 = vmatprep.subr.bf16.mxu0 %v2105
    %2277 = vmatpush1.bf16.msra.mxu0 %v2104
    %2278 = vmatprep.subr.bf16.mxu0 0
    %2279 = vmatpush1.bf16.msra.mxu0 0
    %2280 = vmatprep.subr.bf16.mxu0 0
    %2281 = vmatpush1.bf16.msra.mxu0 0
    %2282 = vmatprep.subr.bf16.mxu0 0
    %2283 = vmatpush1.bf16.msra.mxu0 0
    %2284 = vmatprep.subr.bf16.mxu0 0
    %2285 = vmatpush1.bf16.msra.mxu0 0
    %2286 = vmatprep.subr.bf16.mxu0 0
    %2287 = vmatpush1.bf16.msra.mxu0 0
    %2288 = vmatprep.subr.bf16.mxu0 0
    %2289 = vmatpush1.bf16.msra.mxu0 0
    %2290 = vmatprep.subr.bf16.mxu0 0
    %2291 = vmatpush1.bf16.msra.mxu0 0
    %2292 = vmatprep.subr.bf16.mxu0 0
    %2293 = vmatpush1.bf16.msra.mxu0 0
    %2294 = vmatprep.subr.bf16.mxu0 0
    %2295 = vmatpush1.bf16.msra.mxu0 0
    %2296 = vmatprep.subr.bf16.mxu0 0
    %2297 = vmatpush1.bf16.msra.mxu0 0
    %2298 = vmatprep.subr.bf16.mxu0 0
    %2299 = vmatpush1.bf16.msra.mxu0 0
    %2300 = vmatprep.subr.bf16.mxu0 0
    %2301 = vmatpush1.bf16.msra.mxu0 0
    %2302 = vmatprep.mubr.bf16.mxu0 0
    %2303 = vmatmul.mubr.bf16.gmra.mrb[0].mxu0 %v2139
    %v2304 = vpop.f32.mrb[0].mxu0
    %v2305 = vadd.f32 %v1970, %v2304
    %v2306 = vpop.f32.mrb[0].mxu0
    %v2307 = vadd.f32 %v1972, %v2306
    %v2308 = vpop.f32.mrb[0].mxu0
    %v2309 = vadd.f32 %v1974, %v2308
    %v2310 = vpop.f32.mrb[0].mxu0
    %v2311 = vadd.f32 %v1976, %v2310
    %2312 = vdwg.mxu0
    %v2313 = vpack.c.bf16 %v1574, %v1573
    %s2314 = scalar_lea.vmem [#allocation6], 512
    %v2315 = vld [vmem:[%s2314] sm:$0xff]
    %v2316 = vld [vmem:[%s2314 + $0x8] sm:$0xff]
    %v2317 = vld [vmem:[%s2314 + $0x10] sm:$0xff]
    %v2318 = vld [vmem:[%s2314 + $0x18] sm:$0xff]
    %v2319 = vld [vmem:[%s2314 + $0x20] sm:$0xff]
    %v2320 = vld [vmem:[%s2314 + $0x28] sm:$0xff]
    %v2321 = vld [vmem:[%s2314 + $0x30] sm:$0xff]
    %v2322 = vld [vmem:[%s2314 + $0x38] sm:$0xff]
    %v2323 = vld [vmem:[%s2314 + $0x40] sm:$0xff]
    %v2324 = vld [vmem:[%s2314 + $0x48] sm:$0xff]
    %v2325 = vld [vmem:[%s2314 + $0x50] sm:$0xff]
    %v2326 = vld [vmem:[%s2314 + $0x58] sm:$0xff]
    %v2327 = vld [vmem:[%s2314 + $0x60] sm:$0xff]
    %v2328 = vld [vmem:[%s2314 + $0x68] sm:$0xff]
    %v2329 = vld [vmem:[%s2314 + $0x70] sm:$0xff]
    %v2330 = vld [vmem:[%s2314 + $0x78] sm:$0xff]
    %v2331 = vld [vmem:[%s2314 + $0x80] sm:$0xff]
    %v2332 = vld [vmem:[%s2314 + $0x88] sm:$0xff]
    %v2333 = vld [vmem:[%s2314 + $0x90] sm:$0xff]
    %v2334 = vld [vmem:[%s2314 + $0x98] sm:$0xff]
    %v2335 = vld [vmem:[%s2314 + $0xa0] sm:$0xff]
    %v2336 = vld [vmem:[%s2314 + $0xa8] sm:$0xff]
    %v2337 = vld [vmem:[%s2314 + $0xb0] sm:$0xff]
    %v2338 = vld [vmem:[%s2314 + $0xb8] sm:$0xff]
    %v2339 = vld [vmem:[%s2314 + $0xc0] sm:$0xff]
    %v2340 = vld [vmem:[%s2314 + $0xc8] sm:$0xff]
    %v2341 = vld [vmem:[%s2314 + $0xd0] sm:$0xff]
    %v2342 = vld [vmem:[%s2314 + $0xd8] sm:$0xff]
    %v2343 = vld [vmem:[%s2314 + $0xe0] sm:$0xff]
    %v2344 = vld [vmem:[%s2314 + $0xe8] sm:$0xff]
    %v2345 = vld [vmem:[%s2314 + $0xf0] sm:$0xff]
    %v2346 = vld [vmem:[%s2314 + $0xf8] sm:$0xff]
    %v2379 = vunpack.c.l.b16 %v2315
    %v2380 = vunpack.c.h.b16 %v2315
    %v2381 = vunpack.c.l.b16 %v2316
    %v2382 = vunpack.c.h.b16 %v2316
    %v2383 = vunpack.c.l.b16 %v2317
    %v2384 = vunpack.c.h.b16 %v2317
    %v2385 = vunpack.c.l.b16 %v2318
    %v2386 = vunpack.c.h.b16 %v2318
    %v2387 = vunpack.c.l.b16 %v2319
    %v2388 = vunpack.c.h.b16 %v2319
    %v2389 = vunpack.c.l.b16 %v2320
    %v2390 = vunpack.c.h.b16 %v2320
    %v2391 = vunpack.c.l.b16 %v2321
    %v2392 = vunpack.c.h.b16 %v2321
    %v2393 = vunpack.c.l.b16 %v2322
    %v2394 = vunpack.c.h.b16 %v2322
    %v2395 = vunpack.c.l.b16 %v2323
    %v2396 = vunpack.c.h.b16 %v2323
    %v2397 = vunpack.c.l.b16 %v2324
    %v2398 = vunpack.c.h.b16 %v2324
    %v2399 = vunpack.c.l.b16 %v2325
    %v2400 = vunpack.c.h.b16 %v2325
    %v2401 = vunpack.c.l.b16 %v2326
    %v2402 = vunpack.c.h.b16 %v2326
    %v2403 = vunpack.c.l.b16 %v2327
    %v2404 = vunpack.c.h.b16 %v2327
    %v2405 = vunpack.c.l.b16 %v2328
    %v2406 = vunpack.c.h.b16 %v2328
    %v2407 = vunpack.c.l.b16 %v2329
    %v2408 = vunpack.c.h.b16 %v2329
    %v2409 = vunpack.c.l.b16 %v2330
    %v2410 = vunpack.c.h.b16 %v2330
    %v2411 = vunpack.c.l.b16 %v2331
    %v2412 = vunpack.c.h.b16 %v2331
    %v2413 = vunpack.c.l.b16 %v2332
    %v2414 = vunpack.c.h.b16 %v2332
    %v2415 = vunpack.c.l.b16 %v2333
    %v2416 = vunpack.c.h.b16 %v2333
    %v2417 = vunpack.c.l.b16 %v2334
    %v2418 = vunpack.c.h.b16 %v2334
    %v2419 = vunpack.c.l.b16 %v2335
    %v2420 = vunpack.c.h.b16 %v2335
    %v2421 = vunpack.c.l.b16 %v2336
    %v2422 = vunpack.c.h.b16 %v2336
    %v2423 = vunpack.c.l.b16 %v2337
    %v2424 = vunpack.c.h.b16 %v2337
    %v2425 = vunpack.c.l.b16 %v2338
    %v2426 = vunpack.c.h.b16 %v2338
    %v2427 = vunpack.c.l.b16 %v2339
    %v2428 = vunpack.c.h.b16 %v2339
    %v2429 = vunpack.c.l.b16 %v2340
    %v2430 = vunpack.c.h.b16 %v2340
    %v2431 = vunpack.c.l.b16 %v2341
    %v2432 = vunpack.c.h.b16 %v2341
    %v2433 = vunpack.c.l.b16 %v2342
    %v2434 = vunpack.c.h.b16 %v2342
    %v2435 = vunpack.c.l.b16 %v2343
    %v2436 = vunpack.c.h.b16 %v2343
    %v2437 = vunpack.c.l.b16 %v2344
    %v2438 = vunpack.c.h.b16 %v2344
    %v2439 = vunpack.c.l.b16 %v2345
    %v2440 = vunpack.c.h.b16 %v2345
    %v2441 = vunpack.c.l.b16 %v2346
    %v2442 = vunpack.c.h.b16 %v2346
    %v2443 = vpack.c.b16 %v2387, %v2379
    %v2444 = vpack.c.b16 %v2388, %v2380
    %v2445 = vpack.c.b16 %v2389, %v2381
    %v2446 = vpack.c.b16 %v2390, %v2382
    %v2447 = vpack.c.b16 %v2391, %v2383
    %v2448 = vpack.c.b16 %v2392, %v2384
    %v2449 = vpack.c.b16 %v2393, %v2385
    %v2450 = vpack.c.b16 %v2394, %v2386
    %v2451 = vpack.c.b16 %v2403, %v2395
    %v2452 = vpack.c.b16 %v2404, %v2396
    %v2453 = vpack.c.b16 %v2405, %v2397
    %v2454 = vpack.c.b16 %v2406, %v2398
    %v2455 = vpack.c.b16 %v2407, %v2399
    %v2456 = vpack.c.b16 %v2408, %v2400
    %v2457 = vpack.c.b16 %v2409, %v2401
    %v2458 = vpack.c.b16 %v2410, %v2402
    %v2459 = vpack.c.b16 %v2419, %v2411
    %v2460 = vpack.c.b16 %v2420, %v2412
    %v2461 = vpack.c.b16 %v2421, %v2413
    %v2462 = vpack.c.b16 %v2422, %v2414
    %v2463 = vpack.c.b16 %v2423, %v2415
    %v2464 = vpack.c.b16 %v2424, %v2416
    %v2465 = vpack.c.b16 %v2425, %v2417
    %v2466 = vpack.c.b16 %v2426, %v2418
    %v2467 = vpack.c.b16 %v2435, %v2427
    %v2468 = vpack.c.b16 %v2436, %v2428
    %v2469 = vpack.c.b16 %v2437, %v2429
    %v2470 = vpack.c.b16 %v2438, %v2430
    %v2471 = vpack.c.b16 %v2439, %v2431
    %v2472 = vpack.c.b16 %v2440, %v2432
    %v2473 = vpack.c.b16 %v2441, %v2433
    %v2474 = vpack.c.b16 %v2442, %v2434
    %v2508 = vsel %vm1802, %v2313, 0
    %2510 = vmatprep.subr.bf16.mxu0 %v2444
    %2511 = vmatpush1.bf16.msra.mxu0 %v2443
    %2512 = vmatprep.subr.bf16.mxu0 %v2452
    %2513 = vmatpush1.bf16.msra.mxu0 %v2451
    %2514 = vmatprep.subr.bf16.mxu0 %v2460
    %2515 = vmatpush1.bf16.msra.mxu0 %v2459
    %2516 = vmatprep.subr.bf16.mxu0 %v2468
    %2517 = vmatpush1.bf16.msra.mxu0 %v2467
    %2518 = vmatprep.subr.bf16.mxu0 0
    %2519 = vmatpush1.bf16.msra.mxu0 0
    %2520 = vmatprep.subr.bf16.mxu0 0
    %2521 = vmatpush1.bf16.msra.mxu0 0
    %2522 = vmatprep.subr.bf16.mxu0 0
    %2523 = vmatpush1.bf16.msra.mxu0 0
    %2524 = vmatprep.subr.bf16.mxu0 0
    %2525 = vmatpush1.bf16.msra.mxu0 0
    %2526 = vmatprep.subr.bf16.mxu0 0
    %2527 = vmatpush1.bf16.msra.mxu0 0
    %2528 = vmatprep.subr.bf16.mxu0 0
    %2529 = vmatpush1.bf16.msra.mxu0 0
    %2530 = vmatprep.subr.bf16.mxu0 0
    %2531 = vmatpush1.bf16.msra.mxu0 0
    %2532 = vmatprep.subr.bf16.mxu0 0
    %2533 = vmatpush1.bf16.msra.mxu0 0
    %2534 = vmatprep.subr.bf16.mxu0 0
    %2535 = vmatpush1.bf16.msra.mxu0 0
    %2536 = vmatprep.subr.bf16.mxu0 0
    %2537 = vmatpush1.bf16.msra.mxu0 0
    %2538 = vmatprep.subr.bf16.mxu0 0
    %2539 = vmatpush1.bf16.msra.mxu0 0
    %2540 = vmatprep.subr.bf16.mxu0 0
    %2541 = vmatpush1.bf16.msra.mxu0 0
    %2542 = vmatprep.mubr.bf16.mxu0 0
    %2543 = vmatmul.mubr.bf16.gmra.mrb[0].mxu0 %v2508
    %v2544 = vpop.f32.mrb[0].mxu0
    %v2545 = vadd.f32 0.0, %v2544
    %v2546 = vpop.f32.mrb[0].mxu0
    %v2547 = vadd.f32 0.0, %v2546
    %v2548 = vpop.f32.mrb[0].mxu0
    %v2549 = vadd.f32 0.0, %v2548
    %v2550 = vpop.f32.mrb[0].mxu0
    %v2551 = vadd.f32 0.0, %v2550
    %2552 = vdwg.mxu0
    %2553 = vmatprep.subr.bf16.mxu0 %v2446
    %2554 = vmatpush1.bf16.msra.mxu0 %v2445
    %2555 = vmatprep.subr.bf16.mxu0 %v2454
    %2556 = vmatpush1.bf16.msra.mxu0 %v2453
    %2557 = vmatprep.subr.bf16.mxu0 %v2462
    %2558 = vmatpush1.bf16.msra.mxu0 %v2461
    %2559 = vmatprep.subr.bf16.mxu0 %v2470
    %2560 = vmatpush1.bf16.msra.mxu0 %v2469
    %2561 = vmatprep.subr.bf16.mxu0 0
    %2562 = vmatpush1.bf16.msra.mxu0 0
    %2563 = vmatprep.subr.bf16.mxu0 0
    %2564 = vmatpush1.bf16.msra.mxu0 0
    %2565 = vmatprep.subr.bf16.mxu0 0
    %2566 = vmatpush1.bf16.msra.mxu0 0
    %2567 = vmatprep.subr.bf16.mxu0 0
    %2568 = vmatpush1.bf16.msra.mxu0 0
    %2569 = vmatprep.subr.bf16.mxu0 0
    %2570 = vmatpush1.bf16.msra.mxu0 0
    %2571 = vmatprep.subr.bf16.mxu0 0
    %2572 = vmatpush1.bf16.msra.mxu0 0
    %2573 = vmatprep.subr.bf16.mxu0 0
    %2574 = vmatpush1.bf16.msra.mxu0 0
    %2575 = vmatprep.subr.bf16.mxu0 0
    %2576 = vmatpush1.bf16.msra.mxu0 0
    %2577 = vmatprep.subr.bf16.mxu0 0
    %2578 = vmatpush1.bf16.msra.mxu0 0
    %2579 = vmatprep.subr.bf16.mxu0 0
    %2580 = vmatpush1.bf16.msra.mxu0 0
    %2581 = vmatprep.subr.bf16.mxu0 0
    %2582 = vmatpush1.bf16.msra.mxu0 0
    %2583 = vmatprep.subr.bf16.mxu0 0
    %2584 = vmatpush1.bf16.msra.mxu0 0
    %2585 = vmatprep.mubr.bf16.mxu0 0
    %2586 = vmatmul.mubr.bf16.gmra.mrb[0].mxu0 %v2508
    %v2587 = vpop.f32.mrb[0].mxu0
    %v2588 = vadd.f32 0.0, %v2587
    %v2589 = vpop.f32.mrb[0].mxu0
    %v2590 = vadd.f32 0.0, %v2589
    %v2591 = vpop.f32.mrb[0].mxu0
    %v2592 = vadd.f32 0.0, %v2591
    %v2593 = vpop.f32.mrb[0].mxu0
    %v2594 = vadd.f32 0.0, %v2593
    %2595 = vdwg.mxu0
    %2596 = vmatprep.subr.bf16.mxu0 %v2448
    %2597 = vmatpush1.bf16.msra.mxu0 %v2447
    %2598 = vmatprep.subr.bf16.mxu0 %v2456
    %2599 = vmatpush1.bf16.msra.mxu0 %v2455
    %2600 = vmatprep.subr.bf16.mxu0 %v2464
    %2601 = vmatpush1.bf16.msra.mxu0 %v2463
    %2602 = vmatprep.subr.bf16.mxu0 %v2472
    %2603 = vmatpush1.bf16.msra.mxu0 %v2471
    %2604 = vmatprep.subr.bf16.mxu0 0
    %2605 = vmatpush1.bf16.msra.mxu0 0
    %2606 = vmatprep.subr.bf16.mxu0 0
    %2607 = vmatpush1.bf16.msra.mxu0 0
    %2608 = vmatprep.subr.bf16.mxu0 0
    %2609 = vmatpush1.bf16.msra.mxu0 0
    %2610 = vmatprep.subr.bf16.mxu0 0
    %2611 = vmatpush1.bf16.msra.mxu0 0
    %2612 = vmatprep.subr.bf16.mxu0 0
    %2613 = vmatpush1.bf16.msra.mxu0 0
    %2614 = vmatprep.subr.bf16.mxu0 0
    %2615 = vmatpush1.bf16.msra.mxu0 0
    %2616 = vmatprep.subr.bf16.mxu0 0
    %2617 = vmatpush1.bf16.msra.mxu0 0
    %2618 = vmatprep.subr.bf16.mxu0 0
    %2619 = vmatpush1.bf16.msra.mxu0 0
    %2620 = vmatprep.subr.bf16.mxu0 0
    %2621 = vmatpush1.bf16.msra.mxu0 0
    %2622 = vmatprep.subr.bf16.mxu0 0
    %2623 = vmatpush1.bf16.msra.mxu0 0
    %2624 = vmatprep.subr.bf16.mxu0 0
    %2625 = vmatpush1.bf16.msra.mxu0 0
    %2626 = vmatprep.subr.bf16.mxu0 0
    %2627 = vmatpush1.bf16.msra.mxu0 0
    %2628 = vmatprep.mubr.bf16.mxu0 0
    %2629 = vmatmul.mubr.bf16.gmra.mrb[0].mxu0 %v2508
    %v2630 = vpop.f32.mrb[0].mxu0
    %v2631 = vadd.f32 0.0, %v2630
    %v2632 = vpop.f32.mrb[0].mxu0
    %v2633 = vadd.f32 0.0, %v2632
    %v2634 = vpop.f32.mrb[0].mxu0
    %v2635 = vadd.f32 0.0, %v2634
    %v2636 = vpop.f32.mrb[0].mxu0
    %v2637 = vadd.f32 0.0, %v2636
    %2638 = vdwg.mxu0
    %2639 = vmatprep.subr.bf16.mxu0 %v2450
    %2640 = vmatpush1.bf16.msra.mxu0 %v2449
    %2641 = vmatprep.subr.bf16.mxu0 %v2458
    %2642 = vmatpush1.bf16.msra.mxu0 %v2457
    %2643 = vmatprep.subr.bf16.mxu0 %v2466
    %2644 = vmatpush1.bf16.msra.mxu0 %v2465
    %2645 = vmatprep.subr.bf16.mxu0 %v2474
    %2646 = vmatpush1.bf16.msra.mxu0 %v2473
    %2647 = vmatprep.subr.bf16.mxu0 0
    %2648 = vmatpush1.bf16.msra.mxu0 0
    %2649 = vmatprep.subr.bf16.mxu0 0
    %2650 = vmatpush1.bf16.msra.mxu0 0
    %2651 = vmatprep.subr.bf16.mxu0 0
    %2652 = vmatpush1.bf16.msra.mxu0 0
    %2653 = vmatprep.subr.bf16.mxu0 0
    %2654 = vmatpush1.bf16.msra.mxu0 0
    %2655 = vmatprep.subr.bf16.mxu0 0
    %2656 = vmatpush1.bf16.msra.mxu0 0
    %2657 = vmatprep.subr.bf16.mxu0 0
    %2658 = vmatpush1.bf16.msra.mxu0 0
    %2659 = vmatprep.subr.bf16.mxu0 0
    %2660 = vmatpush1.bf16.msra.mxu0 0
    %2661 = vmatprep.subr.bf16.mxu0 0
    %2662 = vmatpush1.bf16.msra.mxu0 0
    %2663 = vmatprep.subr.bf16.mxu0 0
    %2664 = vmatpush1.bf16.msra.mxu0 0
    %2665 = vmatprep.subr.bf16.mxu0 0
    %2666 = vmatpush1.bf16.msra.mxu0 0
    %2667 = vmatprep.subr.bf16.mxu0 0
    %2668 = vmatpush1.bf16.msra.mxu0 0
    %2669 = vmatprep.subr.bf16.mxu0 0
    %2670 = vmatpush1.bf16.msra.mxu0 0
    %2671 = vmatprep.mubr.bf16.mxu0 0
    %2672 = vmatmul.mubr.bf16.gmra.mrb[0].mxu0 %v2508
    %v2673 = vpop.f32.mrb[0].mxu0
    %v2674 = vadd.f32 0.0, %v2673
    %v2675 = vpop.f32.mrb[0].mxu0
    %v2676 = vadd.f32 0.0, %v2675
    %v2677 = vpop.f32.mrb[0].mxu0
    %v2678 = vadd.f32 0.0, %v2677
    %v2679 = vpop.f32.mrb[0].mxu0
    %v2680 = vadd.f32 0.0, %v2679
    %2681 = vdwg.mxu0
    %v2682 = vadd.f32 %v2176, %v2545
    %v2683 = vadd.f32 %v2178, %v2547
    %v2684 = vadd.f32 %v2219, %v2588
    %v2685 = vadd.f32 %v2221, %v2590
    %v2686 = vadd.f32 %v2262, %v2631
    %v2687 = vadd.f32 %v2264, %v2633
    %v2688 = vadd.f32 %v2305, %v2674
    %v2689 = vadd.f32 %v2307, %v2676
    %v2690 = vadd.f32 %v2180, %v2549
    %v2691 = vadd.f32 %v2182, %v2551
    %v2692 = vadd.f32 %v2223, %v2592
    %v2693 = vadd.f32 %v2225, %v2594
    %v2694 = vadd.f32 %v2266, %v2635
    %v2695 = vadd.f32 %v2268, %v2637
    %v2696 = vadd.f32 %v2309, %v2678
    %v2697 = vadd.f32 %v2311, %v2680
    %v2698 = vld [vmem:[%s6 + $0xa] sm:$0xff]
    %v2700 = vlaneseq
    %v2701 = vshrl.u32 %v2700, 7
    %v2702 = vsub.s32 0, %v2701
    %v2703 = vrot.slane %v2698, %v2702
    %v2704 = vlaneseq
    %v2705 = vshrl.u32 %v2704, 7
    %v2706 = vsub.s32 1, %v2705
    %v2707 = vrot.slane %v2698, %v2706
    %v2708 = vlaneseq
    %v2709 = vshrl.u32 %v2708, 7
    %v2710 = vsub.s32 2, %v2709
    %v2711 = vrot.slane %v2698, %v2710
    %v2712 = vlaneseq
    %v2713 = vshrl.u32 %v2712, 7
    %v2714 = vsub.s32 3, %v2713
    %v2715 = vrot.slane %v2698, %v2714
    %v2716 = vlaneseq
    %v2717 = vshrl.u32 %v2716, 7
    %v2718 = vsub.s32 4, %v2717
    %v2719 = vrot.slane %v2698, %v2718
    %v2720 = vlaneseq
    %v2721 = vshrl.u32 %v2720, 7
    %v2722 = vsub.s32 5, %v2721
    %v2723 = vrot.slane %v2698, %v2722
    %v2724 = vlaneseq
    %v2725 = vshrl.u32 %v2724, 7
    %v2726 = vsub.s32 6, %v2725
    %v2727 = vrot.slane %v2698, %v2726
    %v2728 = vlaneseq
    %v2729 = vshrl.u32 %v2728, 7
    %v2730 = vsub.s32 7, %v2729
    %v2731 = vrot.slane %v2698, %v2730
    %v2740 = vadd.f32 %v2682, %v2703
    %v2741 = vadd.f32 %v2683, %v2707
    %v2742 = vadd.f32 %v2684, %v2711
    %v2743 = vadd.f32 %v2685, %v2715
    %v2744 = vadd.f32 %v2686, %v2719
    %v2745 = vadd.f32 %v2687, %v2723
    %v2746 = vadd.f32 %v2688, %v2727
    %v2747 = vadd.f32 %v2689, %v2731
    %v2748 = vadd.f32 %v2690, %v2703
    %v2749 = vadd.f32 %v2691, %v2707
    %v2750 = vadd.f32 %v2692, %v2711
    %v2751 = vadd.f32 %v2693, %v2715
    %v2752 = vadd.f32 %v2694, %v2719
    %v2753 = vadd.f32 %v2695, %v2723
    %v2754 = vadd.f32 %v2696, %v2727
    %v2755 = vadd.f32 %v2697, %v2731
    %vm2756 = vcmp.gt.f32.partialorder %v2740, 0.0
    %vm2757 = vcmp.gt.f32.partialorder %v2741, 0.0
    %vm2758 = vcmp.gt.f32.partialorder %v2742, 0.0
    %vm2759 = vcmp.gt.f32.partialorder %v2743, 0.0
    %vm2760 = vcmp.gt.f32.partialorder %v2744, 0.0
    %vm2761 = vcmp.gt.f32.partialorder %v2745, 0.0
    %vm2762 = vcmp.gt.f32.partialorder %v2746, 0.0
    %vm2763 = vcmp.gt.f32.partialorder %v2747, 0.0
    %vm2764 = vcmp.gt.f32.partialorder %v2748, 0.0
    %vm2765 = vcmp.gt.f32.partialorder %v2749, 0.0
    %vm2766 = vcmp.gt.f32.partialorder %v2750, 0.0
    %vm2767 = vcmp.gt.f32.partialorder %v2751, 0.0
    %vm2768 = vcmp.gt.f32.partialorder %v2752, 0.0
    %vm2769 = vcmp.gt.f32.partialorder %v2753, 0.0
    %vm2770 = vcmp.gt.f32.partialorder %v2754, 0.0
    %vm2771 = vcmp.gt.f32.partialorder %v2755, 0.0
    %v2772 = vmul.f32 %v2740, 1.442695
    %v2773 = vpow.pop %v2772
    %v2774 = vmul.f32 %v2741, 1.442695
    %v2775 = vpow.pop %v2774
    %v2776 = vmul.f32 %v2742, 1.442695
    %v2777 = vpow.pop %v2776
    %v2778 = vmul.f32 %v2743, 1.442695
    %v2779 = vpow.pop %v2778
    %v2780 = vmul.f32 %v2744, 1.442695
    %v2781 = vpow.pop %v2780
    %v2782 = vmul.f32 %v2745, 1.442695
    %v2783 = vpow.pop %v2782
    %v2784 = vmul.f32 %v2746, 1.442695
    %v2785 = vpow.pop %v2784
    %v2786 = vmul.f32 %v2747, 1.442695
    %v2787 = vpow.pop %v2786
    %v2788 = vmul.f32 %v2748, 1.442695
    %v2789 = vpow.pop %v2788
    %v2790 = vmul.f32 %v2749, 1.442695
    %v2791 = vpow.pop %v2790
    %v2792 = vmul.f32 %v2750, 1.442695
    %v2793 = vpow.pop %v2792
    %v2794 = vmul.f32 %v2751, 1.442695
    %v2795 = vpow.pop %v2794
    %v2796 = vmul.f32 %v2752, 1.442695
    %v2797 = vpow.pop %v2796
    %v2798 = vmul.f32 %v2753, 1.442695
    %v2799 = vpow.pop %v2798
    %v2800 = vmul.f32 %v2754, 1.442695
    %v2801 = vpow.pop %v2800
    %v2802 = vmul.f32 %v2755, 1.442695
    %v2803 = vpow.pop %v2802
    %v2804 = vsub.f32 %v2773, 1.0
    %v2805 = vsub.f32 %v2775, 1.0
    %v2806 = vsub.f32 %v2777, 1.0
    %v2807 = vsub.f32 %v2779, 1.0
    %v2808 = vsub.f32 %v2781, 1.0
    %v2809 = vsub.f32 %v2783, 1.0
    %v2810 = vsub.f32 %v2785, 1.0
    %v2811 = vsub.f32 %v2787, 1.0
    %v2812 = vsub.f32 %v2789, 1.0
    %v2813 = vsub.f32 %v2791, 1.0
    %v2814 = vsub.f32 %v2793, 1.0
    %v2815 = vsub.f32 %v2795, 1.0
    %v2816 = vsub.f32 %v2797, 1.0
    %v2817 = vsub.f32 %v2799, 1.0
    %v2818 = vsub.f32 %v2801, 1.0
    %v2819 = vsub.f32 %v2803, 1.0
    %v2820 = vmul.f32 %v2804, 1.6732632
    %v2821 = vmul.f32 %v2805, 1.6732632
    %v2822 = vmul.f32 %v2806, 1.6732632
    %v2823 = vmul.f32 %v2807, 1.6732632
    %v2824 = vmul.f32 %v2808, 1.6732632
    %v2825 = vmul.f32 %v2809, 1.6732632
    %v2826 = vmul.f32 %v2810, 1.6732632
    %v2827 = vmul.f32 %v2811, 1.6732632
    %v2828 = vmul.f32 %v2812, 1.6732632
    %v2829 = vmul.f32 %v2813, 1.6732632
    %v2830 = vmul.f32 %v2814, 1.6732632
    %v2831 = vmul.f32 %v2815, 1.6732632
    %v2832 = vmul.f32 %v2816, 1.6732632
    %v2833 = vmul.f32 %v2817, 1.6732632
    %v2834 = vmul.f32 %v2818, 1.6732632
    %v2835 = vmul.f32 %v2819, 1.6732632
    %v2836 = vsel %vm2756, %v2740, %v2820
    %v2837 = vsel %vm2757, %v2741, %v2821
    %v2838 = vsel %vm2758, %v2742, %v2822
    %v2839 = vsel %vm2759, %v2743, %v2823
    %v2840 = vsel %vm2760, %v2744, %v2824
    %v2841 = vsel %vm2761, %v2745, %v2825
    %v2842 = vsel %vm2762, %v2746, %v2826
    %v2843 = vsel %vm2763, %v2747, %v2827
    %v2844 = vsel %vm2764, %v2748, %v2828
    %v2845 = vsel %vm2765, %v2749, %v2829
    %v2846 = vsel %vm2766, %v2750, %v2830
    %v2847 = vsel %vm2767, %v2751, %v2831
    %v2848 = vsel %vm2768, %v2752, %v2832
    %v2849 = vsel %vm2769, %v2753, %v2833
    %v2850 = vsel %vm2770, %v2754, %v2834
    %v2851 = vsel %vm2771, %v2755, %v2835
    %v2852 = vmul.f32 %v2836, 1.050701
    %v2853 = vmul.f32 %v2837, 1.050701
    %v2854 = vmul.f32 %v2838, 1.050701
    %v2855 = vmul.f32 %v2839, 1.050701
    %v2856 = vmul.f32 %v2840, 1.050701
    %v2857 = vmul.f32 %v2841, 1.050701
    %v2858 = vmul.f32 %v2842, 1.050701
    %v2859 = vmul.f32 %v2843, 1.050701
    %v2860 = vmul.f32 %v2844, 1.050701
    %v2861 = vmul.f32 %v2845, 1.050701
    %v2862 = vmul.f32 %v2846, 1.050701
    %v2863 = vmul.f32 %v2847, 1.050701
    %v2864 = vmul.f32 %v2848, 1.050701
    %v2865 = vmul.f32 %v2849, 1.050701
    %v2866 = vmul.f32 %v2850, 1.050701
    %v2867 = vmul.f32 %v2851, 1.050701
    %v2868 = vpack.c.bf16 %v2860, %v2852
    %v2869 = vpack.c.bf16 %v2861, %v2853
    %v2870 = vpack.c.bf16 %v2862, %v2854
    %v2871 = vpack.c.bf16 %v2863, %v2855
    %v2872 = vpack.c.bf16 %v2864, %v2856
    %v2873 = vpack.c.bf16 %v2865, %v2857
    %v2874 = vpack.c.bf16 %v2866, %v2858
    %v2875 = vpack.c.bf16 %v2867, %v2859
    %v2876 = vld [vmem:[#allocation7] sm:$0xff]
    %v2877 = vld [vmem:[#allocation7 + $0x8] sm:$0xff]
    %v2878 = vld [vmem:[#allocation7 + $0x10] sm:$0xff]
    %v2879 = vld [vmem:[#allocation7 + $0x18] sm:$0xff]
    %v2880 = vld [vmem:[#allocation7 + $0x20] sm:$0xff]
    %v2881 = vld [vmem:[#allocation7 + $0x28] sm:$0xff]
    %v2882 = vld [vmem:[#allocation7 + $0x30] sm:$0xff]
    %v2883 = vld [vmem:[#allocation7 + $0x38] sm:$0xff]
    %v2884 = vld [vmem:[#allocation7 + $0x40] sm:$0xff]
    %v2885 = vld [vmem:[#allocation7 + $0x48] sm:$0xff]
    %v2886 = vld [vmem:[#allocation7 + $0x50] sm:$0xff]
    %v2887 = vld [vmem:[#allocation7 + $0x58] sm:$0xff]
    %v2888 = vld [vmem:[#allocation7 + $0x60] sm:$0xff]
    %v2889 = vld [vmem:[#allocation7 + $0x68] sm:$0xff]
    %v2890 = vld [vmem:[#allocation7 + $0x70] sm:$0xff]
    %v2891 = vld [vmem:[#allocation7 + $0x78] sm:$0xff]
    %v2892 = vld [vmem:[#allocation7 + $0x80] sm:$0xff]
    %v2893 = vld [vmem:[#allocation7 + $0x88] sm:$0xff]
    %v2894 = vld [vmem:[#allocation7 + $0x90] sm:$0xff]
    %v2895 = vld [vmem:[#allocation7 + $0x98] sm:$0xff]
    %v2896 = vld [vmem:[#allocation7 + $0xa0] sm:$0xff]
    %v2897 = vld [vmem:[#allocation7 + $0xa8] sm:$0xff]
    %v2898 = vld [vmem:[#allocation7 + $0xb0] sm:$0xff]
    %v2899 = vld [vmem:[#allocation7 + $0xb8] sm:$0xff]
    %v2900 = vld [vmem:[#allocation7 + $0xc0] sm:$0xff]
    %v2901 = vld [vmem:[#allocation7 + $0xc8] sm:$0xff]
    %v2902 = vld [vmem:[#allocation7 + $0xd0] sm:$0xff]
    %v2903 = vld [vmem:[#allocation7 + $0xd8] sm:$0xff]
    %v2904 = vld [vmem:[#allocation7 + $0xe0] sm:$0xff]
    %v2905 = vld [vmem:[#allocation7 + $0xe8] sm:$0xff]
    %v2906 = vld [vmem:[#allocation7 + $0xf0] sm:$0xff]
    %v2907 = vld [vmem:[#allocation7 + $0xf8] sm:$0xff]
    %v2908 = vld [vmem:[#allocation7 + $0x100] sm:$0xff]
    %v2909 = vld [vmem:[#allocation7 + $0x108] sm:$0xff]
    %v2910 = vld [vmem:[#allocation7 + $0x110] sm:$0xff]
    %v2911 = vld [vmem:[#allocation7 + $0x118] sm:$0xff]
    %v2912 = vld [vmem:[#allocation7 + $0x120] sm:$0xff]
    %v2913 = vld [vmem:[#allocation7 + $0x128] sm:$0xff]
    %v2914 = vld [vmem:[#allocation7 + $0x130] sm:$0xff]
    %v2915 = vld [vmem:[#allocation7 + $0x138] sm:$0xff]
    %v2916 = vld [vmem:[#allocation7 + $0x140] sm:$0xff]
    %v2917 = vld [vmem:[#allocation7 + $0x148] sm:$0xff]
    %v2918 = vld [vmem:[#allocation7 + $0x150] sm:$0xff]
    %v2919 = vld [vmem:[#allocation7 + $0x158] sm:$0xff]
    %v2920 = vld [vmem:[#allocation7 + $0x160] sm:$0xff]
    %v2921 = vld [vmem:[#allocation7 + $0x168] sm:$0xff]
    %v2922 = vld [vmem:[#allocation7 + $0x170] sm:$0xff]
    %v2923 = vld [vmem:[#allocation7 + $0x178] sm:$0xff]
    %v2924 = vld [vmem:[#allocation7 + $0x180] sm:$0xff]
    %v2925 = vld [vmem:[#allocation7 + $0x188] sm:$0xff]
    %v2926 = vld [vmem:[#allocation7 + $0x190] sm:$0xff]
    %v2927 = vld [vmem:[#allocation7 + $0x198] sm:$0xff]
    %v2928 = vld [vmem:[#allocation7 + $0x1a0] sm:$0xff]
    %v2929 = vld [vmem:[#allocation7 + $0x1a8] sm:$0xff]
    %v2930 = vld [vmem:[#allocation7 + $0x1b0] sm:$0xff]
    %v2931 = vld [vmem:[#allocation7 + $0x1b8] sm:$0xff]
    %v2932 = vld [vmem:[#allocation7 + $0x1c0] sm:$0xff]
    %v2933 = vld [vmem:[#allocation7 + $0x1c8] sm:$0xff]
    %v2934 = vld [vmem:[#allocation7 + $0x1d0] sm:$0xff]
    %v2935 = vld [vmem:[#allocation7 + $0x1d8] sm:$0xff]
    %v2936 = vld [vmem:[#allocation7 + $0x1e0] sm:$0xff]
    %v2937 = vld [vmem:[#allocation7 + $0x1e8] sm:$0xff]
    %v2938 = vld [vmem:[#allocation7 + $0x1f0] sm:$0xff]
    %v2939 = vld [vmem:[#allocation7 + $0x1f8] sm:$0xff]
    %v2940 = vld [vmem:[#allocation7 + $0x200] sm:$0xff]
    %v2941 = vld [vmem:[#allocation7 + $0x208] sm:$0xff]
    %v2942 = vld [vmem:[#allocation7 + $0x210] sm:$0xff]
    %v2943 = vld [vmem:[#allocation7 + $0x218] sm:$0xff]
    %v2944 = vld [vmem:[#allocation7 + $0x220] sm:$0xff]
    %v2945 = vld [vmem:[#allocation7 + $0x228] sm:$0xff]
    %v2946 = vld [vmem:[#allocation7 + $0x230] sm:$0xff]
    %v2947 = vld [vmem:[#allocation7 + $0x238] sm:$0xff]
    %v2948 = vld [vmem:[#allocation7 + $0x240] sm:$0xff]
    %v2949 = vld [vmem:[#allocation7 + $0x248] sm:$0xff]
    %v2950 = vld [vmem:[#allocation7 + $0x250] sm:$0xff]
    %v2951 = vld [vmem:[#allocation7 + $0x258] sm:$0xff]
    %v2952 = vld [vmem:[#allocation7 + $0x260] sm:$0xff]
    %v2953 = vld [vmem:[#allocation7 + $0x268] sm:$0xff]
    %v2954 = vld [vmem:[#allocation7 + $0x270] sm:$0xff]
    %v2955 = vld [vmem:[#allocation7 + $0x278] sm:$0xff]
    %v2956 = vld [vmem:[#allocation7 + $0x280] sm:$0xff]
    %v2957 = vld [vmem:[#allocation7 + $0x288] sm:$0xff]
    %v2958 = vld [vmem:[#allocation7 + $0x290] sm:$0xff]
    %v2959 = vld [vmem:[#allocation7 + $0x298] sm:$0xff]
    %v2960 = vld [vmem:[#allocation7 + $0x2a0] sm:$0xff]
    %v2961 = vld [vmem:[#allocation7 + $0x2a8] sm:$0xff]
    %v2962 = vld [vmem:[#allocation7 + $0x2b0] sm:$0xff]
    %v2963 = vld [vmem:[#allocation7 + $0x2b8] sm:$0xff]
    %v2964 = vld [vmem:[#allocation7 + $0x2c0] sm:$0xff]
    %v2965 = vld [vmem:[#allocation7 + $0x2c8] sm:$0xff]
    %v2966 = vld [vmem:[#allocation7 + $0x2d0] sm:$0xff]
    %v2967 = vld [vmem:[#allocation7 + $0x2d8] sm:$0xff]
    %v2968 = vld [vmem:[#allocation7 + $0x2e0] sm:$0xff]
    %v2969 = vld [vmem:[#allocation7 + $0x2e8] sm:$0xff]
    %v2970 = vld [vmem:[#allocation7 + $0x2f0] sm:$0xff]
    %v2971 = vld [vmem:[#allocation7 + $0x2f8] sm:$0xff]
    %v2972 = vld [vmem:[#allocation7 + $0x300] sm:$0xff]
    %v2973 = vld [vmem:[#allocation7 + $0x308] sm:$0xff]
    %v2974 = vld [vmem:[#allocation7 + $0x310] sm:$0xff]
    %v2975 = vld [vmem:[#allocation7 + $0x318] sm:$0xff]
    %v2976 = vld [vmem:[#allocation7 + $0x320] sm:$0xff]
    %v2977 = vld [vmem:[#allocation7 + $0x328] sm:$0xff]
    %v2978 = vld [vmem:[#allocation7 + $0x330] sm:$0xff]
    %v2979 = vld [vmem:[#allocation7 + $0x338] sm:$0xff]
    %v2980 = vld [vmem:[#allocation7 + $0x340] sm:$0xff]
    %v2981 = vld [vmem:[#allocation7 + $0x348] sm:$0xff]
    %v2982 = vld [vmem:[#allocation7 + $0x350] sm:$0xff]
    %v2983 = vld [vmem:[#allocation7 + $0x358] sm:$0xff]
    %v2984 = vld [vmem:[#allocation7 + $0x360] sm:$0xff]
    %v2985 = vld [vmem:[#allocation7 + $0x368] sm:$0xff]
    %v2986 = vld [vmem:[#allocation7 + $0x370] sm:$0xff]
    %v2987 = vld [vmem:[#allocation7 + $0x378] sm:$0xff]
    %v2988 = vld [vmem:[#allocation7 + $0x380] sm:$0xff]
    %v2989 = vld [vmem:[#allocation7 + $0x388] sm:$0xff]
    %v2990 = vld [vmem:[#allocation7 + $0x390] sm:$0xff]
    %v2991 = vld [vmem:[#allocation7 + $0x398] sm:$0xff]
    %v2992 = vld [vmem:[#allocation7 + $0x3a0] sm:$0xff]
    %v2993 = vld [vmem:[#allocation7 + $0x3a8] sm:$0xff]
    %v2994 = vld [vmem:[#allocation7 + $0x3b0] sm:$0xff]
    %v2995 = vld [vmem:[#allocation7 + $0x3b8] sm:$0xff]
    %v2996 = vld [vmem:[#allocation7 + $0x3c0] sm:$0xff]
    %v2997 = vld [vmem:[#allocation7 + $0x3c8] sm:$0xff]
    %v2998 = vld [vmem:[#allocation7 + $0x3d0] sm:$0xff]
    %v2999 = vld [vmem:[#allocation7 + $0x3d8] sm:$0xff]
    %v3000 = vld [vmem:[#allocation7 + $0x3e0] sm:$0xff]
    %v3001 = vld [vmem:[#allocation7 + $0x3e8] sm:$0xff]
    %v3002 = vld [vmem:[#allocation7 + $0x3f0] sm:$0xff]
    %v3003 = vld [vmem:[#allocation7 + $0x3f8] sm:$0xff]
    %v3004 = vld [vmem:[%s6 + $0x12] sm:$0x3]
    %v3006 = vlaneseq
    %v3007 = vshrl.u32 %v3006, 7
    %v3008 = vsub.s32 0, %v3007
    %v3009 = vrot.slane %v3004, %v3008
    %v3010 = vlaneseq
    %v3011 = vshrl.u32 %v3010, 7
    %v3012 = vsub.s32 1, %v3011
    %v3013 = vrot.slane %v3004, %v3012
    %v3144 = vunpack.c.l.b16 %v2876
    %v3145 = vunpack.c.h.b16 %v2876
    %v3146 = vunpack.c.l.b16 %v2877
    %v3147 = vunpack.c.h.b16 %v2877
    %v3148 = vunpack.c.l.b16 %v2878
    %v3149 = vunpack.c.h.b16 %v2878
    %v3150 = vunpack.c.l.b16 %v2879
    %v3151 = vunpack.c.h.b16 %v2879
    %v3152 = vunpack.c.l.b16 %v2880
    %v3153 = vunpack.c.h.b16 %v2880
    %v3154 = vunpack.c.l.b16 %v2881
    %v3155 = vunpack.c.h.b16 %v2881
    %v3156 = vunpack.c.l.b16 %v2882
    %v3157 = vunpack.c.h.b16 %v2882
    %v3158 = vunpack.c.l.b16 %v2883
    %v3159 = vunpack.c.h.b16 %v2883
    %v3160 = vunpack.c.l.b16 %v2884
    %v3161 = vunpack.c.h.b16 %v2884
    %v3162 = vunpack.c.l.b16 %v2885
    %v3163 = vunpack.c.h.b16 %v2885
    %v3164 = vunpack.c.l.b16 %v2886
    %v3165 = vunpack.c.h.b16 %v2886
    %v3166 = vunpack.c.l.b16 %v2887
    %v3167 = vunpack.c.h.b16 %v2887
    %v3168 = vunpack.c.l.b16 %v2888
    %v3169 = vunpack.c.h.b16 %v2888
    %v3170 = vunpack.c.l.b16 %v2889
    %v3171 = vunpack.c.h.b16 %v2889
    %v3172 = vunpack.c.l.b16 %v2890
    %v3173 = vunpack.c.h.b16 %v2890
    %v3174 = vunpack.c.l.b16 %v2891
    %v3175 = vunpack.c.h.b16 %v2891
    %v3176 = vunpack.c.l.b16 %v2892
    %v3177 = vunpack.c.h.b16 %v2892
    %v3178 = vunpack.c.l.b16 %v2893
    %v3179 = vunpack.c.h.b16 %v2893
    %v3180 = vunpack.c.l.b16 %v2894
    %v3181 = vunpack.c.h.b16 %v2894
    %v3182 = vunpack.c.l.b16 %v2895
    %v3183 = vunpack.c.h.b16 %v2895
    %v3184 = vunpack.c.l.b16 %v2896
    %v3185 = vunpack.c.h.b16 %v2896
    %v3186 = vunpack.c.l.b16 %v2897
    %v3187 = vunpack.c.h.b16 %v2897
    %v3188 = vunpack.c.l.b16 %v2898
    %v3189 = vunpack.c.h.b16 %v2898
    %v3190 = vunpack.c.l.b16 %v2899
    %v3191 = vunpack.c.h.b16 %v2899
    %v3192 = vunpack.c.l.b16 %v2900
    %v3193 = vunpack.c.h.b16 %v2900
    %v3194 = vunpack.c.l.b16 %v2901
    %v3195 = vunpack.c.h.b16 %v2901
    %v3196 = vunpack.c.l.b16 %v2902
    %v3197 = vunpack.c.h.b16 %v2902
    %v3198 = vunpack.c.l.b16 %v2903
    %v3199 = vunpack.c.h.b16 %v2903
    %v3200 = vunpack.c.l.b16 %v2904
    %v3201 = vunpack.c.h.b16 %v2904
    %v3202 = vunpack.c.l.b16 %v2905
    %v3203 = vunpack.c.h.b16 %v2905
    %v3204 = vunpack.c.l.b16 %v2906
    %v3205 = vunpack.c.h.b16 %v2906
    %v3206 = vunpack.c.l.b16 %v2907
    %v3207 = vunpack.c.h.b16 %v2907
    %v3208 = vunpack.c.l.b16 %v2908
    %v3209 = vunpack.c.h.b16 %v2908
    %v3210 = vunpack.c.l.b16 %v2909
    %v3211 = vunpack.c.h.b16 %v2909
    %v3212 = vunpack.c.l.b16 %v2910
    %v3213 = vunpack.c.h.b16 %v2910
    %v3214 = vunpack.c.l.b16 %v2911
    %v3215 = vunpack.c.h.b16 %v2911
    %v3216 = vunpack.c.l.b16 %v2912
    %v3217 = vunpack.c.h.b16 %v2912
    %v3218 = vunpack.c.l.b16 %v2913
    %v3219 = vunpack.c.h.b16 %v2913
    %v3220 = vunpack.c.l.b16 %v2914
    %v3221 = vunpack.c.h.b16 %v2914
    %v3222 = vunpack.c.l.b16 %v2915
    %v3223 = vunpack.c.h.b16 %v2915
    %v3224 = vunpack.c.l.b16 %v2916
    %v3225 = vunpack.c.h.b16 %v2916
    %v3226 = vunpack.c.l.b16 %v2917
    %v3227 = vunpack.c.h.b16 %v2917
    %v3228 = vunpack.c.l.b16 %v2918
    %v3229 = vunpack.c.h.b16 %v2918
    %v3230 = vunpack.c.l.b16 %v2919
    %v3231 = vunpack.c.h.b16 %v2919
    %v3232 = vunpack.c.l.b16 %v2920
    %v3233 = vunpack.c.h.b16 %v2920
    %v3234 = vunpack.c.l.b16 %v2921
    %v3235 = vunpack.c.h.b16 %v2921
    %v3236 = vunpack.c.l.b16 %v2922
    %v3237 = vunpack.c.h.b16 %v2922
    %v3238 = vunpack.c.l.b16 %v2923
    %v3239 = vunpack.c.h.b16 %v2923
    %v3240 = vunpack.c.l.b16 %v2924
    %v3241 = vunpack.c.h.b16 %v2924
    %v3242 = vunpack.c.l.b16 %v2925
    %v3243 = vunpack.c.h.b16 %v2925
    %v3244 = vunpack.c.l.b16 %v2926
    %v3245 = vunpack.c.h.b16 %v2926
    %v3246 = vunpack.c.l.b16 %v2927
    %v3247 = vunpack.c.h.b16 %v2927
    %v3248 = vunpack.c.l.b16 %v2928
    %v3249 = vunpack.c.h.b16 %v2928
    %v3250 = vunpack.c.l.b16 %v2929
    %v3251 = vunpack.c.h.b16 %v2929
    %v3252 = vunpack.c.l.b16 %v2930
    %v3253 = vunpack.c.h.b16 %v2930
    %v3254 = vunpack.c.l.b16 %v2931
    %v3255 = vunpack.c.h.b16 %v2931
    %v3256 = vunpack.c.l.b16 %v2932
    %v3257 = vunpack.c.h.b16 %v2932
    %v3258 = vunpack.c.l.b16 %v2933
    %v3259 = vunpack.c.h.b16 %v2933
    %v3260 = vunpack.c.l.b16 %v2934
    %v3261 = vunpack.c.h.b16 %v2934
    %v3262 = vunpack.c.l.b16 %v2935
    %v3263 = vunpack.c.h.b16 %v2935
    %v3264 = vunpack.c.l.b16 %v2936
    %v3265 = vunpack.c.h.b16 %v2936
    %v3266 = vunpack.c.l.b16 %v2937
    %v3267 = vunpack.c.h.b16 %v2937
    %v3268 = vunpack.c.l.b16 %v2938
    %v3269 = vunpack.c.h.b16 %v2938
    %v3270 = vunpack.c.l.b16 %v2939
    %v3271 = vunpack.c.h.b16 %v2939
    %v3272 = vunpack.c.l.b16 %v2940
    %v3273 = vunpack.c.h.b16 %v2940
    %v3274 = vunpack.c.l.b16 %v2941
    %v3275 = vunpack.c.h.b16 %v2941
    %v3276 = vunpack.c.l.b16 %v2942
    %v3277 = vunpack.c.h.b16 %v2942
    %v3278 = vunpack.c.l.b16 %v2943
    %v3279 = vunpack.c.h.b16 %v2943
    %v3280 = vunpack.c.l.b16 %v2944
    %v3281 = vunpack.c.h.b16 %v2944
    %v3282 = vunpack.c.l.b16 %v2945
    %v3283 = vunpack.c.h.b16 %v2945
    %v3284 = vunpack.c.l.b16 %v2946
    %v3285 = vunpack.c.h.b16 %v2946
    %v3286 = vunpack.c.l.b16 %v2947
    %v3287 = vunpack.c.h.b16 %v2947
    %v3288 = vunpack.c.l.b16 %v2948
    %v3289 = vunpack.c.h.b16 %v2948
    %v3290 = vunpack.c.l.b16 %v2949
    %v3291 = vunpack.c.h.b16 %v2949
    %v3292 = vunpack.c.l.b16 %v2950
    %v3293 = vunpack.c.h.b16 %v2950
    %v3294 = vunpack.c.l.b16 %v2951
    %v3295 = vunpack.c.h.b16 %v2951
    %v3296 = vunpack.c.l.b16 %v2952
    %v3297 = vunpack.c.h.b16 %v2952
    %v3298 = vunpack.c.l.b16 %v2953
    %v3299 = vunpack.c.h.b16 %v2953
    %v3300 = vunpack.c.l.b16 %v2954
    %v3301 = vunpack.c.h.b16 %v2954
    %v3302 = vunpack.c.l.b16 %v2955
    %v3303 = vunpack.c.h.b16 %v2955
    %v3304 = vunpack.c.l.b16 %v2956
    %v3305 = vunpack.c.h.b16 %v2956
    %v3306 = vunpack.c.l.b16 %v2957
    %v3307 = vunpack.c.h.b16 %v2957
    %v3308 = vunpack.c.l.b16 %v2958
    %v3309 = vunpack.c.h.b16 %v2958
    %v3310 = vunpack.c.l.b16 %v2959
    %v3311 = vunpack.c.h.b16 %v2959
    %v3312 = vunpack.c.l.b16 %v2960
    %v3313 = vunpack.c.h.b16 %v2960
    %v3314 = vunpack.c.l.b16 %v2961
    %v3315 = vunpack.c.h.b16 %v2961
    %v3316 = vunpack.c.l.b16 %v2962
    %v3317 = vunpack.c.h.b16 %v2962
    %v3318 = vunpack.c.l.b16 %v2963
    %v3319 = vunpack.c.h.b16 %v2963
    %v3320 = vunpack.c.l.b16 %v2964
    %v3321 = vunpack.c.h.b16 %v2964
    %v3322 = vunpack.c.l.b16 %v2965
    %v3323 = vunpack.c.h.b16 %v2965
    %v3324 = vunpack.c.l.b16 %v2966
    %v3325 = vunpack.c.h.b16 %v2966
    %v3326 = vunpack.c.l.b16 %v2967
    %v3327 = vunpack.c.h.b16 %v2967
    %v3328 = vunpack.c.l.b16 %v2968
    %v3329 = vunpack.c.h.b16 %v2968
    %v3330 = vunpack.c.l.b16 %v2969
    %v3331 = vunpack.c.h.b16 %v2969
    %v3332 = vunpack.c.l.b16 %v2970
    %v3333 = vunpack.c.h.b16 %v2970
    %v3334 = vunpack.c.l.b16 %v2971
    %v3335 = vunpack.c.h.b16 %v2971
    %v3336 = vunpack.c.l.b16 %v2972
    %v3337 = vunpack.c.h.b16 %v2972
    %v3338 = vunpack.c.l.b16 %v2973
    %v3339 = vunpack.c.h.b16 %v2973
    %v3340 = vunpack.c.l.b16 %v2974
    %v3341 = vunpack.c.h.b16 %v2974
    %v3342 = vunpack.c.l.b16 %v2975
    %v3343 = vunpack.c.h.b16 %v2975
    %v3344 = vunpack.c.l.b16 %v2976
    %v3345 = vunpack.c.h.b16 %v2976
    %v3346 = vunpack.c.l.b16 %v2977
    %v3347 = vunpack.c.h.b16 %v2977
    %v3348 = vunpack.c.l.b16 %v2978
    %v3349 = vunpack.c.h.b16 %v2978
    %v3350 = vunpack.c.l.b16 %v2979
    %v3351 = vunpack.c.h.b16 %v2979
    %v3352 = vunpack.c.l.b16 %v2980
    %v3353 = vunpack.c.h.b16 %v2980
    %v3354 = vunpack.c.l.b16 %v2981
    %v3355 = vunpack.c.h.b16 %v2981
    %v3356 = vunpack.c.l.b16 %v2982
    %v3357 = vunpack.c.h.b16 %v2982
    %v3358 = vunpack.c.l.b16 %v2983
    %v3359 = vunpack.c.h.b16 %v2983
    %v3360 = vunpack.c.l.b16 %v2984
    %v3361 = vunpack.c.h.b16 %v2984
    %v3362 = vunpack.c.l.b16 %v2985
    %v3363 = vunpack.c.h.b16 %v2985
    %v3364 = vunpack.c.l.b16 %v2986
    %v3365 = vunpack.c.h.b16 %v2986
    %v3366 = vunpack.c.l.b16 %v2987
    %v3367 = vunpack.c.h.b16 %v2987
    %v3368 = vunpack.c.l.b16 %v2988
    %v3369 = vunpack.c.h.b16 %v2988
    %v3370 = vunpack.c.l.b16 %v2989
    %v3371 = vunpack.c.h.b16 %v2989
    %v3372 = vunpack.c.l.b16 %v2990
    %v3373 = vunpack.c.h.b16 %v2990
    %v3374 = vunpack.c.l.b16 %v2991
    %v3375 = vunpack.c.h.b16 %v2991
    %v3376 = vunpack.c.l.b16 %v2992
    %v3377 = vunpack.c.h.b16 %v2992
    %v3378 = vunpack.c.l.b16 %v2993
    %v3379 = vunpack.c.h.b16 %v2993
    %v3380 = vunpack.c.l.b16 %v2994
    %v3381 = vunpack.c.h.b16 %v2994
    %v3382 = vunpack.c.l.b16 %v2995
    %v3383 = vunpack.c.h.b16 %v2995
    %v3384 = vunpack.c.l.b16 %v2996
    %v3385 = vunpack.c.h.b16 %v2996
    %v3386 = vunpack.c.l.b16 %v2997
    %v3387 = vunpack.c.h.b16 %v2997
    %v3388 = vunpack.c.l.b16 %v2998
    %v3389 = vunpack.c.h.b16 %v2998
    %v3390 = vunpack.c.l.b16 %v2999
    %v3391 = vunpack.c.h.b16 %v2999
    %v3392 = vunpack.c.l.b16 %v3000
    %v3393 = vunpack.c.h.b16 %v3000
    %v3394 = vunpack.c.l.b16 %v3001
    %v3395 = vunpack.c.h.b16 %v3001
    %v3396 = vunpack.c.l.b16 %v3002
    %v3397 = vunpack.c.h.b16 %v3002
    %v3398 = vunpack.c.l.b16 %v3003
    %v3399 = vunpack.c.h.b16 %v3003
    %v3400 = vpack.c.b16 %v3146, %v3144
    %v3401 = vpack.c.b16 %v3147, %v3145
    %v3402 = vpack.c.b16 %v3150, %v3148
    %v3403 = vpack.c.b16 %v3151, %v3149
    %v3404 = vpack.c.b16 %v3154, %v3152
    %v3405 = vpack.c.b16 %v3155, %v3153
    %v3406 = vpack.c.b16 %v3158, %v3156
    %v3407 = vpack.c.b16 %v3159, %v3157
    %v3408 = vpack.c.b16 %v3162, %v3160
    %v3409 = vpack.c.b16 %v3163, %v3161
    %v3410 = vpack.c.b16 %v3166, %v3164
    %v3411 = vpack.c.b16 %v3167, %v3165
    %v3412 = vpack.c.b16 %v3170, %v3168
    %v3413 = vpack.c.b16 %v3171, %v3169
    %v3414 = vpack.c.b16 %v3174, %v3172
    %v3415 = vpack.c.b16 %v3175, %v3173
    %v3416 = vpack.c.b16 %v3178, %v3176
    %v3417 = vpack.c.b16 %v3179, %v3177
    %v3418 = vpack.c.b16 %v3182, %v3180
    %v3419 = vpack.c.b16 %v3183, %v3181
    %v3420 = vpack.c.b16 %v3186, %v3184
    %v3421 = vpack.c.b16 %v3187, %v3185
    %v3422 = vpack.c.b16 %v3190, %v3188
    %v3423 = vpack.c.b16 %v3191, %v3189
    %v3424 = vpack.c.b16 %v3194, %v3192
    %v3425 = vpack.c.b16 %v3195, %v3193
    %v3426 = vpack.c.b16 %v3198, %v3196
    %v3427 = vpack.c.b16 %v3199, %v3197
    %v3428 = vpack.c.b16 %v3202, %v3200
    %v3429 = vpack.c.b16 %v3203, %v3201
    %v3430 = vpack.c.b16 %v3206, %v3204
    %v3431 = vpack.c.b16 %v3207, %v3205
    %v3432 = vpack.c.b16 %v3210, %v3208
    %v3433 = vpack.c.b16 %v3211, %v3209
    %v3434 = vpack.c.b16 %v3214, %v3212
    %v3435 = vpack.c.b16 %v3215, %v3213
    %v3436 = vpack.c.b16 %v3218, %v3216
    %v3437 = vpack.c.b16 %v3219, %v3217
    %v3438 = vpack.c.b16 %v3222, %v3220
    %v3439 = vpack.c.b16 %v3223, %v3221
    %v3440 = vpack.c.b16 %v3226, %v3224
    %v3441 = vpack.c.b16 %v3227, %v3225
    %v3442 = vpack.c.b16 %v3230, %v3228
    %v3443 = vpack.c.b16 %v3231, %v3229
    %v3444 = vpack.c.b16 %v3234, %v3232
    %v3445 = vpack.c.b16 %v3235, %v3233
    %v3446 = vpack.c.b16 %v3238, %v3236
    %v3447 = vpack.c.b16 %v3239, %v3237
    %v3448 = vpack.c.b16 %v3242, %v3240
    %v3449 = vpack.c.b16 %v3243, %v3241
    %v3450 = vpack.c.b16 %v3246, %v3244
    %v3451 = vpack.c.b16 %v3247, %v3245
    %v3452 = vpack.c.b16 %v3250, %v3248
    %v3453 = vpack.c.b16 %v3251, %v3249
    %v3454 = vpack.c.b16 %v3254, %v3252
    %v3455 = vpack.c.b16 %v3255, %v3253
    %v3456 = vpack.c.b16 %v3258, %v3256
    %v3457 = vpack.c.b16 %v3259, %v3257
    %v3458 = vpack.c.b16 %v3262, %v3260
    %v3459 = vpack.c.b16 %v3263, %v3261
    %v3460 = vpack.c.b16 %v3266, %v3264
    %v3461 = vpack.c.b16 %v3267, %v3265
    %v3462 = vpack.c.b16 %v3270, %v3268
    %v3463 = vpack.c.b16 %v3271, %v3269
    %v3464 = vpack.c.b16 %v3274, %v3272
    %v3465 = vpack.c.b16 %v3275, %v3273
    %v3466 = vpack.c.b16 %v3278, %v3276
    %v3467 = vpack.c.b16 %v3279, %v3277
    %v3468 = vpack.c.b16 %v3282, %v3280
    %v3469 = vpack.c.b16 %v3283, %v3281
    %v3470 = vpack.c.b16 %v3286, %v3284
    %v3471 = vpack.c.b16 %v3287, %v3285
    %v3472 = vpack.c.b16 %v3290, %v3288
    %v3473 = vpack.c.b16 %v3291, %v3289
    %v3474 = vpack.c.b16 %v3294, %v3292
    %v3475 = vpack.c.b16 %v3295, %v3293
    %v3476 = vpack.c.b16 %v3298, %v3296
    %v3477 = vpack.c.b16 %v3299, %v3297
    %v3478 = vpack.c.b16 %v3302, %v3300
    %v3479 = vpack.c.b16 %v3303, %v3301
    %v3480 = vpack.c.b16 %v3306, %v3304
    %v3481 = vpack.c.b16 %v3307, %v3305
    %v3482 = vpack.c.b16 %v3310, %v3308
    %v3483 = vpack.c.b16 %v3311, %v3309
    %v3484 = vpack.c.b16 %v3314, %v3312
    %v3485 = vpack.c.b16 %v3315, %v3313
    %v3486 = vpack.c.b16 %v3318, %v3316
    %v3487 = vpack.c.b16 %v3319, %v3317
    %v3488 = vpack.c.b16 %v3322, %v3320
    %v3489 = vpack.c.b16 %v3323, %v3321
    %v3490 = vpack.c.b16 %v3326, %v3324
    %v3491 = vpack.c.b16 %v3327, %v3325
    %v3492 = vpack.c.b16 %v3330, %v3328
    %v3493 = vpack.c.b16 %v3331, %v3329
    %v3494 = vpack.c.b16 %v3334, %v3332
    %v3495 = vpack.c.b16 %v3335, %v3333
    %v3496 = vpack.c.b16 %v3338, %v3336
    %v3497 = vpack.c.b16 %v3339, %v3337
    %v3498 = vpack.c.b16 %v3342, %v3340
    %v3499 = vpack.c.b16 %v3343, %v3341
    %v3500 = vpack.c.b16 %v3346, %v3344
    %v3501 = vpack.c.b16 %v3347, %v3345
    %v3502 = vpack.c.b16 %v3350, %v3348
    %v3503 = vpack.c.b16 %v3351, %v3349
    %v3504 = vpack.c.b16 %v3354, %v3352
    %v3505 = vpack.c.b16 %v3355, %v3353
    %v3506 = vpack.c.b16 %v3358, %v3356
    %v3507 = vpack.c.b16 %v3359, %v3357
    %v3508 = vpack.c.b16 %v3362, %v3360
    %v3509 = vpack.c.b16 %v3363, %v3361
    %v3510 = vpack.c.b16 %v3366, %v3364
    %v3511 = vpack.c.b16 %v3367, %v3365
    %v3512 = vpack.c.b16 %v3370, %v3368
    %v3513 = vpack.c.b16 %v3371, %v3369
    %v3514 = vpack.c.b16 %v3374, %v3372
    %v3515 = vpack.c.b16 %v3375, %v3373
    %v3516 = vpack.c.b16 %v3378, %v3376
    %v3517 = vpack.c.b16 %v3379, %v3377
    %v3518 = vpack.c.b16 %v3382, %v3380
    %v3519 = vpack.c.b16 %v3383, %v3381
    %v3520 = vpack.c.b16 %v3386, %v3384
    %v3521 = vpack.c.b16 %v3387, %v3385
    %v3522 = vpack.c.b16 %v3390, %v3388
    %v3523 = vpack.c.b16 %v3391, %v3389
    %v3524 = vpack.c.b16 %v3394, %v3392
    %v3525 = vpack.c.b16 %v3395, %v3393
    %v3526 = vpack.c.b16 %v3398, %v3396
    %v3527 = vpack.c.b16 %v3399, %v3397
    %3656 = vmatprep.subr.bf16.mxu0 %v3401
    %3657 = vmatpush1.bf16.msra.mxu0 %v3400
    %3658 = vmatprep.subr.bf16.mxu0 %v3403
    %3659 = vmatpush1.bf16.msra.mxu0 %v3402
    %3660 = vmatprep.subr.bf16.mxu0 %v3405
    %3661 = vmatpush1.bf16.msra.mxu0 %v3404
    %3662 = vmatprep.subr.bf16.mxu0 %v3407
    %3663 = vmatpush1.bf16.msra.mxu0 %v3406
    %3664 = vmatprep.subr.bf16.mxu0 %v3409
    %3665 = vmatpush1.bf16.msra.mxu0 %v3408
    %3666 = vmatprep.subr.bf16.mxu0 %v3411
    %3667 = vmatpush1.bf16.msra.mxu0 %v3410
    %3668 = vmatprep.subr.bf16.mxu0 %v3413
    %3669 = vmatpush1.bf16.msra.mxu0 %v3412
    %3670 = vmatprep.subr.bf16.mxu0 %v3415
    %3671 = vmatpush1.bf16.msra.mxu0 %v3414
    %3672 = vmatprep.subr.bf16.mxu0 %v3417
    %3673 = vmatpush1.bf16.msra.mxu0 %v3416
    %3674 = vmatprep.subr.bf16.mxu0 %v3419
    %3675 = vmatpush1.bf16.msra.mxu0 %v3418
    %3676 = vmatprep.subr.bf16.mxu0 %v3421
    %3677 = vmatpush1.bf16.msra.mxu0 %v3420
    %3678 = vmatprep.subr.bf16.mxu0 %v3423
    %3679 = vmatpush1.bf16.msra.mxu0 %v3422
    %3680 = vmatprep.subr.bf16.mxu0 %v3425
    %3681 = vmatpush1.bf16.msra.mxu0 %v3424
    %3682 = vmatprep.subr.bf16.mxu0 %v3427
    %3683 = vmatpush1.bf16.msra.mxu0 %v3426
    %3684 = vmatprep.subr.bf16.mxu0 %v3429
    %3685 = vmatpush1.bf16.msra.mxu0 %v3428
    %3686 = vmatprep.subr.bf16.mxu0 %v3431
    %3687 = vmatpush1.bf16.msra.mxu0 %v3430
    %3688 = vmatprep.mubr.bf16.mxu0 %v2869
    %3689 = vmatmul.mubr.bf16.gmra.mrb[0].mxu0 %v2868
    %v3690 = vpop.f32.mrb[0].mxu0
    %v3691 = vadd.f32 %v3009, %v3690
    %v3692 = vpop.f32.mrb[0].mxu0
    %v3693 = vadd.f32 %v3013, %v3692
    %v3694 = vpop.f32.mrb[0].mxu0
    %v3695 = vadd.f32 %v3009, %v3694
    %v3696 = vpop.f32.mrb[0].mxu0
    %v3697 = vadd.f32 %v3013, %v3696
    %3698 = vdwg.mxu0
    %3699 = vmatprep.subr.bf16.mxu0 %v3433
    %3700 = vmatpush1.bf16.msra.mxu0 %v3432
    %3701 = vmatprep.subr.bf16.mxu0 %v3435
    %3702 = vmatpush1.bf16.msra.mxu0 %v3434
    %3703 = vmatprep.subr.bf16.mxu0 %v3437
    %3704 = vmatpush1.bf16.msra.mxu0 %v3436
    %3705 = vmatprep.subr.bf16.mxu0 %v3439
    %3706 = vmatpush1.bf16.msra.mxu0 %v3438
    %3707 = vmatprep.subr.bf16.mxu0 %v3441
    %3708 = vmatpush1.bf16.msra.mxu0 %v3440
    %3709 = vmatprep.subr.bf16.mxu0 %v3443
    %3710 = vmatpush1.bf16.msra.mxu0 %v3442
    %3711 = vmatprep.subr.bf16.mxu0 %v3445
    %3712 = vmatpush1.bf16.msra.mxu0 %v3444
    %3713 = vmatprep.subr.bf16.mxu0 %v3447
    %3714 = vmatpush1.bf16.msra.mxu0 %v3446
    %3715 = vmatprep.subr.bf16.mxu0 %v3449
    %3716 = vmatpush1.bf16.msra.mxu0 %v3448
    %3717 = vmatprep.subr.bf16.mxu0 %v3451
    %3718 = vmatpush1.bf16.msra.mxu0 %v3450
    %3719 = vmatprep.subr.bf16.mxu0 %v3453
    %3720 = vmatpush1.bf16.msra.mxu0 %v3452
    %3721 = vmatprep.subr.bf16.mxu0 %v3455
    %3722 = vmatpush1.bf16.msra.mxu0 %v3454
    %3723 = vmatprep.subr.bf16.mxu0 %v3457
    %3724 = vmatpush1.bf16.msra.mxu0 %v3456
    %3725 = vmatprep.subr.bf16.mxu0 %v3459
    %3726 = vmatpush1.bf16.msra.mxu0 %v3458
    %3727 = vmatprep.subr.bf16.mxu0 %v3461
    %3728 = vmatpush1.bf16.msra.mxu0 %v3460
    %3729 = vmatprep.subr.bf16.mxu0 %v3463
    %3730 = vmatpush1.bf16.msra.mxu0 %v3462
    %3731 = vmatprep.mubr.bf16.mxu0 %v2871
    %3732 = vmatmul.mubr.bf16.gmra.mrb[0].mxu0 %v2870
    %v3733 = vpop.f32.mrb[0].mxu0
    %v3734 = vadd.f32 %v3691, %v3733
    %v3735 = vpop.f32.mrb[0].mxu0
    %v3736 = vadd.f32 %v3693, %v3735
    %v3737 = vpop.f32.mrb[0].mxu0
    %v3738 = vadd.f32 %v3695, %v3737
    %v3739 = vpop.f32.mrb[0].mxu0
    %v3740 = vadd.f32 %v3697, %v3739
    %3741 = vdwg.mxu0
    %3742 = vmatprep.subr.bf16.mxu0 %v3465
    %3743 = vmatpush1.bf16.msra.mxu0 %v3464
    %3744 = vmatprep.subr.bf16.mxu0 %v3467
    %3745 = vmatpush1.bf16.msra.mxu0 %v3466
    %3746 = vmatprep.subr.bf16.mxu0 %v3469
    %3747 = vmatpush1.bf16.msra.mxu0 %v3468
    %3748 = vmatprep.subr.bf16.mxu0 %v3471
    %3749 = vmatpush1.bf16.msra.mxu0 %v3470
    %3750 = vmatprep.subr.bf16.mxu0 %v3473
    %3751 = vmatpush1.bf16.msra.mxu0 %v3472
    %3752 = vmatprep.subr.bf16.mxu0 %v3475
    %3753 = vmatpush1.bf16.msra.mxu0 %v3474
    %3754 = vmatprep.subr.bf16.mxu0 %v3477
    %3755 = vmatpush1.bf16.msra.mxu0 %v3476
    %3756 = vmatprep.subr.bf16.mxu0 %v3479
    %3757 = vmatpush1.bf16.msra.mxu0 %v3478
    %3758 = vmatprep.subr.bf16.mxu0 %v3481
    %3759 = vmatpush1.bf16.msra.mxu0 %v3480
    %3760 = vmatprep.subr.bf16.mxu0 %v3483
    %3761 = vmatpush1.bf16.msra.mxu0 %v3482
    %3762 = vmatprep.subr.bf16.mxu0 %v3485
    %3763 = vmatpush1.bf16.msra.mxu0 %v3484
    %3764 = vmatprep.subr.bf16.mxu0 %v3487
    %3765 = vmatpush1.bf16.msra.mxu0 %v3486
    %3766 = vmatprep.subr.bf16.mxu0 %v3489
    %3767 = vmatpush1.bf16.msra.mxu0 %v3488
    %3768 = vmatprep.subr.bf16.mxu0 %v3491
    %3769 = vmatpush1.bf16.msra.mxu0 %v3490
    %3770 = vmatprep.subr.bf16.mxu0 %v3493
    %3771 = vmatpush1.bf16.msra.mxu0 %v3492
    %3772 = vmatprep.subr.bf16.mxu0 %v3495
    %3773 = vmatpush1.bf16.msra.mxu0 %v3494
    %3774 = vmatprep.mubr.bf16.mxu0 %v2873
    %3775 = vmatmul.mubr.bf16.gmra.mrb[0].mxu0 %v2872
    %v3776 = vpop.f32.mrb[0].mxu0
    %v3777 = vadd.f32 %v3734, %v3776
    %v3778 = vpop.f32.mrb[0].mxu0
    %v3779 = vadd.f32 %v3736, %v3778
    %v3780 = vpop.f32.mrb[0].mxu0
    %v3781 = vadd.f32 %v3738, %v3780
    %v3782 = vpop.f32.mrb[0].mxu0
    %v3783 = vadd.f32 %v3740, %v3782
    %3784 = vdwg.mxu0
    %3785 = vmatprep.subr.bf16.mxu0 %v3497
    %3786 = vmatpush1.bf16.msra.mxu0 %v3496
    %3787 = vmatprep.subr.bf16.mxu0 %v3499
    %3788 = vmatpush1.bf16.msra.mxu0 %v3498
    %3789 = vmatprep.subr.bf16.mxu0 %v3501
    %3790 = vmatpush1.bf16.msra.mxu0 %v3500
    %3791 = vmatprep.subr.bf16.mxu0 %v3503
    %3792 = vmatpush1.bf16.msra.mxu0 %v3502
    %3793 = vmatprep.subr.bf16.mxu0 %v3505
    %3794 = vmatpush1.bf16.msra.mxu0 %v3504
    %3795 = vmatprep.subr.bf16.mxu0 %v3507
    %3796 = vmatpush1.bf16.msra.mxu0 %v3506
    %3797 = vmatprep.subr.bf16.mxu0 %v3509
    %3798 = vmatpush1.bf16.msra.mxu0 %v3508
    %3799 = vmatprep.subr.bf16.mxu0 %v3511
    %3800 = vmatpush1.bf16.msra.mxu0 %v3510
    %3801 = vmatprep.subr.bf16.mxu0 %v3513
    %3802 = vmatpush1.bf16.msra.mxu0 %v3512
    %3803 = vmatprep.subr.bf16.mxu0 %v3515
    %3804 = vmatpush1.bf16.msra.mxu0 %v3514
    %3805 = vmatprep.subr.bf16.mxu0 %v3517
    %3806 = vmatpush1.bf16.msra.mxu0 %v3516
    %3807 = vmatprep.subr.bf16.mxu0 %v3519
    %3808 = vmatpush1.bf16.msra.mxu0 %v3518
    %3809 = vmatprep.subr.bf16.mxu0 %v3521
    %3810 = vmatpush1.bf16.msra.mxu0 %v3520
    %3811 = vmatprep.subr.bf16.mxu0 %v3523
    %3812 = vmatpush1.bf16.msra.mxu0 %v3522
    %3813 = vmatprep.subr.bf16.mxu0 %v3525
    %3814 = vmatpush1.bf16.msra.mxu0 %v3524
    %3815 = vmatprep.subr.bf16.mxu0 %v3527
    %3816 = vmatpush1.bf16.msra.mxu0 %v3526
    %3817 = vmatprep.mubr.bf16.mxu0 %v2875
    %3818 = vmatmul.mubr.bf16.gmra.mrb[0].mxu0 %v2874
    %v3819 = vpop.f32.mrb[0].mxu0
    %v3820 = vadd.f32 %v3777, %v3819
    %v3821 = vpop.f32.mrb[0].mxu0
    %v3822 = vadd.f32 %v3779, %v3821
    %v3823 = vpop.f32.mrb[0].mxu0
    %v3824 = vadd.f32 %v3781, %v3823
    %v3825 = vpop.f32.mrb[0].mxu0
    %v3826 = vadd.f32 %v3783, %v3825
    %3827 = vdwg.mxu0
    %vm3828 = vcmp.gt.f32.partialorder %v3820, 0.0
    %vm3829 = vcmp.gt.f32.partialorder %v3822, 0.0
    %vm3830 = vcmp.gt.f32.partialorder %v3824, 0.0
    %vm3831 = vcmp.gt.f32.partialorder %v3826, 0.0
    %v3832 = vmul.f32 %v3820, 1.442695
    %v3833 = vpow.pop %v3832
    %v3834 = vmul.f32 %v3822, 1.442695
    %v3835 = vpow.pop %v3834
    %v3836 = vmul.f32 %v3824, 1.442695
    %v3837 = vpow.pop %v3836
    %v3838 = vmul.f32 %v3826, 1.442695
    %v3839 = vpow.pop %v3838
    %v3840 = vsub.f32 %v3833, 1.0
    %v3841 = vsub.f32 %v3835, 1.0
    %v3842 = vsub.f32 %v3837, 1.0
    %v3843 = vsub.f32 %v3839, 1.0
    %v3844 = vmul.f32 %v3840, 1.6732632
    %v3845 = vmul.f32 %v3841, 1.6732632
    %v3846 = vmul.f32 %v3842, 1.6732632
    %v3847 = vmul.f32 %v3843, 1.6732632
    %v3848 = vsel %vm3828, %v3820, %v3844
    %v3849 = vsel %vm3829, %v3822, %v3845
    %v3850 = vsel %vm3830, %v3824, %v3846
    %v3851 = vsel %vm3831, %v3826, %v3847
    %v3852 = vmul.f32 %v3848, 1.050701
    %v3853 = vmul.f32 %v3849, 1.050701
    %v3854 = vmul.f32 %v3850, 1.050701
    %v3855 = vmul.f32 %v3851, 1.050701
    %v3856 = vpack.c.bf16 %v3854, %v3852
    %v3857 = vpack.c.bf16 %v3855, %v3853
    %s3858 = scalar_lea.vmem [#allocation2], 384
    %v3859 = vld [vmem:[%s3858] sm:$0xf]
    %v3860 = vld [vmem:[%s3858 + $0x4] sm:$0xf]
    %v3861 = vld [vmem:[%s3858 + $0x8] sm:$0xf]
    %v3862 = vld [vmem:[%s3858 + $0xc] sm:$0xf]
    %v3863 = vld [vmem:[%s3858 + $0x10] sm:$0xf]
    %v3864 = vld [vmem:[%s3858 + $0x14] sm:$0xf]
    %v3865 = vld [vmem:[%s3858 + $0x18] sm:$0xf]
    %v3866 = vld [vmem:[%s3858 + $0x1c] sm:$0xf]
    %v3867 = vld [vmem:[%s3858 + $0x20] sm:$0xf]
    %v3868 = vld [vmem:[%s3858 + $0x24] sm:$0xf]
    %v3869 = vld [vmem:[%s3858 + $0x28] sm:$0xf]
    %v3870 = vld [vmem:[%s3858 + $0x2c] sm:$0xf]
    %v3871 = vld [vmem:[%s3858 + $0x30] sm:$0xf]
    %v3872 = vld [vmem:[%s3858 + $0x34] sm:$0xf]
    %v3873 = vld [vmem:[%s3858 + $0x38] sm:$0xf]
    %v3874 = vld [vmem:[%s3858 + $0x3c] sm:$0xf]
    %v3875 = vld [vmem:[%s3858 + $0x40] sm:$0xf]
    %v3876 = vld [vmem:[%s3858 + $0x44] sm:$0xf]
    %v3877 = vld [vmem:[%s3858 + $0x48] sm:$0xf]
    %v3878 = vld [vmem:[%s3858 + $0x4c] sm:$0xf]
    %v3879 = vld [vmem:[%s3858 + $0x50] sm:$0xf]
    %v3880 = vld [vmem:[%s3858 + $0x54] sm:$0xf]
    %v3881 = vld [vmem:[%s3858 + $0x58] sm:$0xf]
    %v3882 = vld [vmem:[%s3858 + $0x5c] sm:$0xf]
    %v3883 = vld [vmem:[%s3858 + $0x60] sm:$0xf]
    %v3884 = vld [vmem:[%s3858 + $0x64] sm:$0xf]
    %v3885 = vld [vmem:[%s3858 + $0x68] sm:$0xf]
    %v3886 = vld [vmem:[%s3858 + $0x6c] sm:$0xf]
    %v3887 = vld [vmem:[%s3858 + $0x70] sm:$0xf]
    %v3888 = vld [vmem:[%s3858 + $0x74] sm:$0xf]
    %v3889 = vld [vmem:[%s3858 + $0x78] sm:$0xf]
    %v3890 = vld [vmem:[%s3858 + $0x7c] sm:$0xf]
    %v3891 = vld [vmem:[%s6 + $0x14] sm:$0x1]
    %v3893 = vlaneseq
    %v3894 = vshrl.u32 %v3893, 7
    %v3895 = vsub.s32 0, %v3894
    %v3896 = vrot.slane %v3891, %v3895
    %v3930 = vunpack.c.l.b16 %v3859
    %v3931 = vunpack.c.l.b16 %v3860
    %v3932 = vunpack.c.l.b16 %v3861
    %v3933 = vunpack.c.l.b16 %v3862
    %v3934 = vunpack.c.l.b16 %v3863
    %v3935 = vunpack.c.l.b16 %v3864
    %v3936 = vunpack.c.l.b16 %v3865
    %v3937 = vunpack.c.l.b16 %v3866
    %v3938 = vunpack.c.l.b16 %v3867
    %v3939 = vunpack.c.l.b16 %v3868
    %v3940 = vunpack.c.l.b16 %v3869
    %v3941 = vunpack.c.l.b16 %v3870
    %v3942 = vunpack.c.l.b16 %v3871
    %v3943 = vunpack.c.l.b16 %v3872
    %v3944 = vunpack.c.l.b16 %v3873
    %v3945 = vunpack.c.l.b16 %v3874
    %v3946 = vunpack.c.l.b16 %v3875
    %v3947 = vunpack.c.l.b16 %v3876
    %v3948 = vunpack.c.l.b16 %v3877
    %v3949 = vunpack.c.l.b16 %v3878
    %v3950 = vunpack.c.l.b16 %v3879
    %v3951 = vunpack.c.l.b16 %v3880
    %v3952 = vunpack.c.l.b16 %v3881
    %v3953 = vunpack.c.l.b16 %v3882
    %v3954 = vunpack.c.l.b16 %v3883
    %v3955 = vunpack.c.l.b16 %v3884
    %v3956 = vunpack.c.l.b16 %v3885
    %v3957 = vunpack.c.l.b16 %v3886
    %v3958 = vunpack.c.l.b16 %v3887
    %v3959 = vunpack.c.l.b16 %v3888
    %v3960 = vunpack.c.l.b16 %v3889
    %v3961 = vunpack.c.l.b16 %v3890
    %v3962 = vpack.c.b16 %v3931, %v3930
    %v3963 = vpack.c.b16 %v3933, %v3932
    %v3964 = vpack.c.b16 %v3935, %v3934
    %v3965 = vpack.c.b16 %v3937, %v3936
    %v3966 = vpack.c.b16 %v3939, %v3938
    %v3967 = vpack.c.b16 %v3941, %v3940
    %v3968 = vpack.c.b16 %v3943, %v3942
    %v3969 = vpack.c.b16 %v3945, %v3944
    %v3970 = vpack.c.b16 %v3947, %v3946
    %v3971 = vpack.c.b16 %v3949, %v3948
    %v3972 = vpack.c.b16 %v3951, %v3950
    %v3973 = vpack.c.b16 %v3953, %v3952
    %v3974 = vpack.c.b16 %v3955, %v3954
    %v3975 = vpack.c.b16 %v3957, %v3956
    %v3976 = vpack.c.b16 %v3959, %v3958
    %v3977 = vpack.c.b16 %v3961, %v3960
    %3994 = vmatprep.subr.bf16.mxu0 0
    %3995 = vmatpush1.bf16.msra.mxu0 %v3962
    %3996 = vmatprep.subr.bf16.mxu0 0
    %3997 = vmatpush1.bf16.msra.mxu0 %v3963
    %3998 = vmatprep.subr.bf16.mxu0 0
    %3999 = vmatpush1.bf16.msra.mxu0 %v3964
    %4000 = vmatprep.subr.bf16.mxu0 0
    %4001 = vmatpush1.bf16.msra.mxu0 %v3965
    %4002 = vmatprep.subr.bf16.mxu0 0
    %4003 = vmatpush1.bf16.msra.mxu0 %v3966
    %4004 = vmatprep.subr.bf16.mxu0 0
    %4005 = vmatpush1.bf16.msra.mxu0 %v3967
    %4006 = vmatprep.subr.bf16.mxu0 0
    %4007 = vmatpush1.bf16.msra.mxu0 %v3968
    %4008 = vmatprep.subr.bf16.mxu0 0
    %4009 = vmatpush1.bf16.msra.mxu0 %v3969
    %4010 = vmatprep.subr.bf16.mxu0 0
    %4011 = vmatpush1.bf16.msra.mxu0 %v3970
    %4012 = vmatprep.subr.bf16.mxu0 0
    %4013 = vmatpush1.bf16.msra.mxu0 %v3971
    %4014 = vmatprep.subr.bf16.mxu0 0
    %4015 = vmatpush1.bf16.msra.mxu0 %v3972
    %4016 = vmatprep.subr.bf16.mxu0 0
    %4017 = vmatpush1.bf16.msra.mxu0 %v3973
    %4018 = vmatprep.subr.bf16.mxu0 0
    %4019 = vmatpush1.bf16.msra.mxu0 %v3974
    %4020 = vmatprep.subr.bf16.mxu0 0
    %4021 = vmatpush1.bf16.msra.mxu0 %v3975
    %4022 = vmatprep.subr.bf16.mxu0 0
    %4023 = vmatpush1.bf16.msra.mxu0 %v3976
    %4024 = vmatprep.subr.bf16.mxu0 0
    %4025 = vmatpush1.bf16.msra.mxu0 %v3977
    %4026 = vmatprep.mubr.bf16.mxu0 %v3857
    %4027 = vmatmul.mubr.bf16.gmra.mrb[0].mxu0 %v3856
    %v4028 = vpop.f32.mrb[0].mxu0
    %v4029 = vadd.f32 %v3896, %v4028
    %v4030 = vpop.f32.mrb[0].mxu0
    %v4031 = vpop.f32.mrb[0].mxu0
    %v4032 = vadd.f32 %v3896, %v4031
    %v4033 = vpop.f32.mrb[0].mxu0
    %4034 = vdwg.mxu0
    %4035 = vmax.xlane.f32.xlu0 %v4029
    %v4036 = vpop.xlane.xlu0 %4035
    %4037 = vmax.xlane.f32.xlu0 %v4032
    %v4038 = vpop.xlane.xlu0 %4037
    %v4039 = vsub.f32 %v4029, %v4036
    %v4040 = vsub.f32 %v4032, %v4038
    %v4041 = vmul.f32 %v4039, 1.442695
    %v4042 = vpow.pop %v4041
    %v4043 = vmul.f32 %v4040, 1.442695
    %v4044 = vpow.pop %v4043
    %4045 = vadd.xlane.f32.xlu0 %v4042
    %v4046 = vpop.xlane.xlu0 %4045
    %4047 = vadd.xlane.f32.xlu0 %v4044
    %v4048 = vpop.xlane.xlu0 %4047
    %v4049 = vrcp.pop %v4046
    %v4050 = vmul.f32 %v4042, %v4049
    %v4051 = vrcp.pop %v4048
    %v4052 = vmul.f32 %v4044, %v4051
    %4053 = vst [vmem:[%s7] sm:$0xff] %v267
    %4054 = vst [vmem:[%s7 + $0x38] sm:$0xff] %v270
    %4055 = vst [vmem:[%s7 + $0x8] sm:$0xff] %v747
    %4056 = vst [vmem:[%s7 + $0x40] sm:$0xff] %v751
    %4057 = vst [vmem:[%s7 + $0x10] sm:$0xff] %v444
    %4058 = vst [vmem:[%s7 + $0x48] sm:$0xff] %v447
    %4059 = vst [vmem:[%s7 + $0x18] sm:$0xff] %v594
    %4060 = vst [vmem:[%s7 + $0x50] sm:$0xff] %v598
    %4061 = vst.msk [vmem:[%s7 + $0x20] sm:$0xff] %vm1802, %v1361
    %4062 = vst.msk [vmem:[%s7 + $0x58] sm:$0xff] %vm1802, %v1362
    %4065 = vrot.lane.b32.xlu0 %v1467, 64
    %v4066 = vpop.permute.xlu0 %4065
    %4067 = vrot.lane.b32.xlu0 %v1468, 64
    %v4068 = vpop.permute.xlu0 %4067
    %vm4071 = vcmask 1048064
    %4072 = vst.msk [vmem:[%s7 + $0x20] sm:$0xff] %vm4071, %v4066
    %4073 = vst.msk [vmem:[%s7 + $0x58] sm:$0xff] %vm4071, %v4068
    %4074 = vst.msk [vmem:[%s7 + $0x28] sm:$0xff] %vm1802, %v1573
    %4075 = vst.msk [vmem:[%s7 + $0x60] sm:$0xff] %vm1802, %v1574
    %4076 = vst.msk [vmem:[%s7 + $0x28] sm:$0xff] %vm4071, 0.0
    %4077 = vst.msk [vmem:[%s7 + $0x60] sm:$0xff] %vm4071, 0.0
    %4078 = vst [vmem:[%s7 + $0x30] sm:$0xff] %v4050
    %4079 = vst [vmem:[%s7 + $0x68] sm:$0xff] %v4052
    // Predicated region
    $region46: #{build_model_forward.1} parent=1 // pred_check
      _
    $region47: #{build_model_forward.1} parent=1 // pred_check_branch
      %4081 = sbr.rel (0) target = $region49
    $region48: #{build_model_forward.1} parent=1 // pred_region
      _
    $region49: #{build_model_forward.1} parent=1 // pred_fallthru
      _
    // Predicated region
    $region50: #{build_model_forward.1} parent=1 // pred_check
      _
    $region51: #{build_model_forward.1} parent=1 // pred_check_branch
      %4083 = sbr.rel (0) target = $region53
    $region52: #{build_model_forward.1} parent=1 // pred_region
      _
    $region53: #{build_model_forward.1} parent=1 // pred_fallthru
      _
    %4084 = vsyncpa [#allocation3], 1
    %4085 = vsyncpa [#allocation5], 1
    %4086 = vsyncpa [#allocation8], 1

</llo_original>
